<compile_context>
chip_gen: v5e
topology: v5e:2x2
jax: 0.10.0
libtpu: 0.0.40
codegen_flags: <defaults>
</compile_context>

<pallas_src>
import jax
import jax.numpy as jnp
from jax.experimental import pallas as pl
from jax.experimental.pallas import tpu as pltpu

_MAX_TB = 8  # images per grid step


# ------------------------------------------------------------------ kernels --

def _fused_conv_kernel(x_ref, band1_ref, b1_ref, band2_ref, b2_ref, o_ref,
                       act1p):
    """conv1+ReLU+pool and conv2+ReLU+pool for one batch tile, fully in VMEM.

    x_ref  : (TB, 4, 8, 32)  zero-padded 32x32 input, rows split mod-4
             (padded row r lives at plane r%4, index r//4) so every row slice
             below is a static contiguous slice.
    band1  : (160, 448)  bf16 banded conv1 weights, rows (kh, s), cols
             (w-phase b, w', c)          [s = padded input column 0..31]
    b1     : (1, 224)    f32 conv1 bias tiled over w'
    band2  : (1440, 448) bf16 banded conv2 weights, rows (kh, wq, ci), cols
             (w-phase b, w'', co)        [wq = padded act1 column 0..17]
    b2     : (1, 224)    f32 conv2 bias tiled over w''
    o_ref  : (TB, 7, 224) pooled conv2 output, layout [h'', w''*32 + co]
    act1p  : (TB, 2, 9, 288) scratch: zero-padded pooled conv1 output, rows in
             parity-split layout (plane p, index q) == padded row 2q+p,
             lanes = wq*16 + ci.
    """
    tb = x_ref.shape[0]

    # Borders of the scratch are never written below; clear every step (the
    # scratch starts uninitialized and is per-core under "parallel" semantics).
    act1p[...] = jnp.zeros(act1p.shape, act1p.dtype)

    # ---- conv1: ONE matmul for all images and all 4 pooling phases ---------
    def conv1_rows(t, pe, a):
        # 7 LHS rows for pooled rows h'=2m+pe, h-pool phase a:
        # conv row = 2h'+a needs padded input rows 4m + 2*pe + a + kh.
        taps = []
        for kh in range(5):
            c = 2 * pe + a + kh                                  # 0..7
            taps.append(x_ref[t, c % 4, c // 4:c // 4 + 7, :])   # (7, 32)
        return jnp.concatenate(taps, axis=-1)                    # (7, 160)

    x1 = jnp.concatenate(
        [conv1_rows(t, pe, a)
         for t in range(tb) for pe in (0, 1) for a in (0, 1)],
        axis=0).astype(jnp.bfloat16)                             # (tb*28, 160)
    z1 = jnp.dot(x1, band1_ref[...],
                 preferred_element_type=jnp.float32)             # (tb*28, 448)

    b1 = b1_ref[...]
    for t in range(tb):
        for pe in (0, 1):
            rows = z1[t * 28 + pe * 14: t * 28 + pe * 14 + 14]   # (14, 448)
            pooled = jnp.maximum(
                jnp.maximum(rows[0:7, 0:224], rows[0:7, 224:448]),
                jnp.maximum(rows[7:14, 0:224], rows[7:14, 224:448]))
            act1p[t, pe, 1:8, 32:256] = jnp.maximum(pooled + b1, 0.0)

    # ---- conv2: ONE matmul for all images and all 4 pooling phases ---------
    def conv2_rows(t, a):
        # conv row = 2h''+a needs act1p rows 2h'' + a + kh.
        taps = []
        for kh in range(5):
            c = a + kh                                            # 0..5
            taps.append(act1p[t, c % 2, c // 2:c // 2 + 7, :])    # (7, 288)
        return jnp.concatenate(taps, axis=-1)                     # (7, 1440)

    x2 = jnp.concatenate(
        [conv2_rows(t, a) for t in range(tb) for a in (0, 1)],
        axis=0).astype(jnp.bfloat16)                              # (tb*14, 1440)
    z2 = jnp.dot(x2, band2_ref[...],
                 preferred_element_type=jnp.float32)              # (tb*14, 448)

    b2 = b2_ref[...]
    for t in range(tb):
        rows = z2[t * 14: t * 14 + 14]                            # (14, 448)
        pooled = jnp.maximum(
            jnp.maximum(rows[0:7, 0:224], rows[0:7, 224:448]),
            jnp.maximum(rows[7:14, 0:224], rows[7:14, 224:448]))
        o_ref[t] = jnp.maximum(pooled + b2, 0.0)                  # (7, 224)


def _linear_kernel(x_ref, w_ref, b_ref, o_ref):
    o_ref[...] = jnp.dot(x_ref[...].astype(jnp.bfloat16), w_ref[...],
                         preferred_element_type=jnp.float32) + b_ref[...]


# ------------------------------------------------------ banded weight build --

def _band_conv1(w1):
    """(5,5,1,16) HWIO -> (160, 448): rows (kh, s), cols (b, w', c).

    Entry = w1[kh, s-(2w'+b), 0, c] inside the band, 0 elsewhere, so that
    X[h', kh*32+s] = xpad[2h'+a+kh, s] contracted with it gives the conv output
    at (2h'+a, 2w'+b, c)."""
    w = w1[:, :, 0, :]                                   # (5, 5, 16)
    band = jnp.zeros((5, 32, 2, 14, 16), jnp.float32)    # (kh, s, b, w', c)
    wp = jnp.arange(14)
    for b in range(2):
        for kw in range(5):
            s = 2 * wp + b + kw
            band = band.at[:, s, b, wp, :].set(
                jnp.broadcast_to(w[:, kw, None, :], (5, 14, 16)))
    return band.reshape(160, 448)


def _band_conv2(w2):
    """(5,5,16,32) HWIO -> (1440, 448): rows (kh, wq, ci), cols (b, w'', co)."""
    band = jnp.zeros((5, 18, 2, 7, 16, 32), jnp.float32)  # (kh, wq, b, w'', ci, co)
    wp = jnp.arange(7)
    for b in range(2):
        for kw in range(5):
            s = 2 * wp + b + kw
            band = band.at[:, s, b, wp, :, :].set(
                jnp.broadcast_to(w2[:, kw, None, :, :], (5, 7, 16, 32)))
    return band.transpose(0, 1, 4, 2, 3, 5).reshape(1440, 448)


# ------------------------------------------------------------------ forward --

@jax.jit
def cnn_forward(x_nchw, params):
    w1, b1, w2, b2, wfc, bfc = params
    B = x_nchw.shape[0]
    tb = min(_MAX_TB, B)
    bp = ((B + tb - 1) // tb) * tb
    grid = (bp // tb,)

    # Glue: pad the raw input and split rows mod 4 (raw-sized data, no im2col).
    xpad = jnp.pad(x_nchw[:, 0].astype(jnp.float32),
                   ((0, bp - B), (2, 2), (2, 2)))                  # (bp, 32, 32)
    xps4 = xpad.reshape(bp, 8, 4, 32).transpose(0, 2, 1, 3)        # (bp, 4, 8, 32)

    band1 = _band_conv1(w1).astype(jnp.bfloat16)                   # (160, 448)
    band2 = _band_conv2(w2).astype(jnp.bfloat16)                   # (1440, 448)
    b1t = jnp.tile(b1.reshape(1, 16), (1, 14)).astype(jnp.float32)  # (1, 224)
    b2t = jnp.tile(b2.reshape(1, 32), (1, 7)).astype(jnp.float32)   # (1, 224)

    cparams = pltpu.CompilerParams(
        dimension_semantics=("parallel",),
        vmem_limit_bytes=32 * 1024 * 1024)

    conv_cost = pl.CostEstimate(
        flops=int(bp * 2 * (28 * 160 * 448 + 14 * 1440 * 448)),
        transcendentals=0,
        bytes_accessed=int(bp * (4096 + 4 * 7 * 224) + 2 * (160 + 1440) * 448))

    act2 = pl.pallas_call(
        _fused_conv_kernel,
        out_shape=jax.ShapeDtypeStruct((bp, 7, 224), jnp.float32),
        grid=grid,
        in_specs=[
            pl.BlockSpec((tb, 4, 8, 32), lambda i: (i, 0, 0, 0)),
            pl.BlockSpec((160, 448), lambda i: (0, 0)),      # resident weights
            pl.BlockSpec((1, 224), lambda i: (0, 0)),
            pl.BlockSpec((1440, 448), lambda i: (0, 0)),
            pl.BlockSpec((1, 224), lambda i: (0, 0)),
        ],
        out_specs=pl.BlockSpec((tb, 7, 224), lambda i: (i, 0, 0)),
        scratch_shapes=[pltpu.VMEM((tb, 2, 9, 288), jnp.float32)],
        compiler_params=cparams,
        cost_estimate=conv_cost,
    )(xps4, band1, b1t, band2, b2t)

    # FC: reorder weight rows to the (h, w, c) activation layout (torch's
    # x.view(B, -1) on NCHW is c*49 + h*7 + w), and pad N to 128 lanes.
    wfc_perm = wfc.reshape(32, 7, 7, 10).transpose(1, 2, 0, 3).reshape(1568, 10)
    wfc_pad = jnp.pad(wfc_perm, ((0, 0), (0, 118))).astype(jnp.bfloat16)
    bfc_pad = jnp.pad(bfc.reshape(1, 10), ((0, 0), (0, 118))).astype(jnp.float32)
    xflat = act2.reshape(bp, 7 * 224)                               # (bp, 1568)

    fc_cost = pl.CostEstimate(
        flops=int(bp * 2 * 1568 * 128), transcendentals=0,
        bytes_accessed=int(bp * (1568 * 4 + 128 * 4) + 1568 * 128 * 2))

    logits = pl.pallas_call(
        _linear_kernel,
        out_shape=jax.ShapeDtypeStruct((bp, 128), jnp.float32),
        grid=grid,
        in_specs=[
            pl.BlockSpec((tb, 1568), lambda i: (i, 0)),
            pl.BlockSpec((1568, 128), lambda i: (0, 0)),
            pl.BlockSpec((1, 128), lambda i: (0, 0)),
        ],
        out_specs=pl.BlockSpec((tb, 128), lambda i: (i, 0)),
        compiler_params=cparams,
        cost_estimate=fc_cost,
    )(xflat, wfc_pad, bfc_pad)

    return logits[:B, :10]


# -------------------------------------------------------- params / reference --

def init_params(key):
    k1, k2, k3 = jax.random.split(key, 3)
    w1 = jax.random.normal(k1, (5, 5, 1, 16), jnp.float32) * 0.1    # conv1 HWIO
    b1 = jnp.linspace(-0.1, 0.1, 16, dtype=jnp.float32).reshape(1, 16)
    w2 = jax.random.normal(k2, (5, 5, 16, 32), jnp.float32) * 0.05  # conv2 HWIO
    b2 = jnp.linspace(-0.1, 0.1, 32, dtype=jnp.float32).reshape(1, 32)
    wfc = jax.random.normal(k3, (32 * 7 * 7, 10), jnp.float32) * 0.02
    bfc = jnp.linspace(-0.05, 0.05, 10, dtype=jnp.float32).reshape(1, 10)
    return (w1, b1, w2, b2, wfc, bfc)


def reference_forward(x_nchw, params):
    """Pure-JAX reference of the PyTorch forward pass (for validation)."""
    w1, b1, w2, b2, wfc, bfc = params
    hi = jax.lax.Precision.HIGHEST
    dn = ("NCHW", "HWIO", "NCHW")
    y = jax.lax.conv_general_dilated(x_nchw, w1, (1, 1), ((2, 2), (2, 2)),
                                     dimension_numbers=dn, precision=hi)
    y = jax.nn.relu(y + b1.reshape(1, -1, 1, 1))
    y = jax.lax.reduce_window(y, -jnp.inf, jax.lax.max,
                              (1, 1, 2, 2), (1, 1, 2, 2), "VALID")
    y = jax.lax.conv_general_dilated(y, w2, (1, 1), ((2, 2), (2, 2)),
                                     dimension_numbers=dn, precision=hi)
    y = jax.nn.relu(y + b2.reshape(1, -1, 1, 1))
    y = jax.lax.reduce_window(y, -jnp.inf, jax.lax.max,
                              (1, 1, 2, 2), (1, 1, 2, 2), "VALID")
    y = y.reshape(y.shape[0], -1)
    return jnp.dot(y, wfc, precision=hi) + bfc


if __name__ == "__main__":
    key = jax.random.PRNGKey(0)
    kx, kp = jax.random.split(key)
    # MNIST-shaped input implied by the module (Linear expects 32*7*7): NCHW.
    x = jax.random.normal(kx, (2, 1, 28, 28), jnp.float32)
    params = init_params(kp)

    out = jax.block_until_ready(cnn_forward(x, params))
    assert out.shape == (2, 10), out.shape

    ref = reference_forward(x, params)
    # Kernel matmuls run in bf16 with f32 accumulation; reference is HIGHEST.
    assert jnp.allclose(out, ref, atol=2e-2, rtol=2e-2), \
        float(jnp.max(jnp.abs(out - ref)))
    print("KERNEL_OK")
</pallas_src>

<mosaic_0001>
module attributes {stable_mosaic.version = 11 : i64} {
  func.func @_fused_conv_kernel(%arg0: i32, %arg1: memref<2x4x8x32xf32, #tpu.memory_space<vmem>>, %arg2: memref<160x448xbf16, #tpu.memory_space<vmem>>, %arg3: memref<1x224xf32, #tpu.memory_space<vmem>>, %arg4: memref<1440x448xbf16, #tpu.memory_space<vmem>>, %arg5: memref<1x224xf32, #tpu.memory_space<vmem>>, %arg6: memref<2x7x224xf32, #tpu.memory_space<vmem>>, %arg7: memref<2x2x9x288xf32, #tpu.memory_space<vmem>>) attributes {dimension_semantics = [#tpu.dimension_semantics<parallel>], iteration_bounds = array<i64: 1>, scalar_prefetch = 0 : i64, scratch_operands = 1 : i64, tpu.core_type = #tpu.core_type<tc>, window_params = [{transform_indices = @transform_0, window_bounds = array<i64: 2, 4, 8, 32>}, {pipeline_mode = #tpu.pipeline_mode<synchronous>, transform_indices = @transform_1, window_bounds = array<i64: 160, 448>}, {pipeline_mode = #tpu.pipeline_mode<synchronous>, transform_indices = @transform_2, window_bounds = array<i64: 1, 224>}, {pipeline_mode = #tpu.pipeline_mode<synchronous>, transform_indices = @transform_3, window_bounds = array<i64: 1440, 448>}, {pipeline_mode = #tpu.pipeline_mode<synchronous>, transform_indices = @transform_4, window_bounds = array<i64: 1, 224>}, {transform_indices = @transform_5, window_bounds = array<i64: 2, 7, 224>}]} {
    %cst = arith.constant 0.000000e+00 : f32
    %0 = vector.broadcast %cst : f32 to vector<2x2x9x288xf32>
    %c0 = arith.constant 0 : index
    %c0_0 = arith.constant 0 : index
    %c0_1 = arith.constant 0 : index
    %c0_2 = arith.constant 0 : index
    %1 = vector.load %arg7[%c0, %c0_0, %c0_1, %c0_2] : memref<2x2x9x288xf32, #tpu.memory_space<vmem>>, vector<2x2x9x288xf32>
    tpu.vector_store %arg7[%c0, %c0_0, %c0_1, %c0_2], %0 {strides = array<i32>} : memref<2x2x9x288xf32, #tpu.memory_space<vmem>>, vector<2x2x9x288xf32>,
    %c0_3 = arith.constant 0 : index
    %c0_4 = arith.constant 0 : index
    %c0_5 = arith.constant 0 : index
    %c0_6 = arith.constant 0 : index
    %2 = vector.load %arg1[%c0_3, %c0_4, %c0_5, %c0_6] : memref<2x4x8x32xf32, #tpu.memory_space<vmem>>, vector<1x1x7x32xf32>
    %3 = vector.shape_cast %2 : vector<1x1x7x32xf32> to vector<7x32xf32>
    %c0_7 = arith.constant 0 : index
    %c1 = arith.constant 1 : index
    %c0_8 = arith.constant 0 : index
    %c0_9 = arith.constant 0 : index
    %4 = vector.load %arg1[%c0_7, %c1, %c0_8, %c0_9] : memref<2x4x8x32xf32, #tpu.memory_space<vmem>>, vector<1x1x7x32xf32>
    %5 = vector.shape_cast %4 : vector<1x1x7x32xf32> to vector<7x32xf32>
    %c0_10 = arith.constant 0 : index
    %c2 = arith.constant 2 : index
    %c0_11 = arith.constant 0 : index
    %c0_12 = arith.constant 0 : index
    %6 = vector.load %arg1[%c0_10, %c2, %c0_11, %c0_12] : memref<2x4x8x32xf32, #tpu.memory_space<vmem>>, vector<1x1x7x32xf32>
    %7 = vector.shape_cast %6 : vector<1x1x7x32xf32> to vector<7x32xf32>
    %c0_13 = arith.constant 0 : index
    %c3 = arith.constant 3 : index
    %c0_14 = arith.constant 0 : index
    %c0_15 = arith.constant 0 : index
    %8 = vector.load %arg1[%c0_13, %c3, %c0_14, %c0_15] : memref<2x4x8x32xf32, #tpu.memory_space<vmem>>, vector<1x1x7x32xf32>
    %9 = vector.shape_cast %8 : vector<1x1x7x32xf32> to vector<7x32xf32>
    %c0_16 = arith.constant 0 : index
    %c0_17 = arith.constant 0 : index
    %c1_18 = arith.constant 1 : index
    %c0_19 = arith.constant 0 : index
    %10 = vector.load %arg1[%c0_16, %c0_17, %c1_18, %c0_19] : memref<2x4x8x32xf32, #tpu.memory_space<vmem>>, vector<1x1x7x32xf32>
    %11 = vector.shape_cast %10 : vector<1x1x7x32xf32> to vector<7x32xf32>
    %12 = tpu.concatenate %3, %5, %7, %9, %11 in 1 : vector<7x32xf32>, vector<7x32xf32>, vector<7x32xf32>, vector<7x32xf32>, vector<7x32xf32> -> vector<7x160xf32>
    %c0_20 = arith.constant 0 : index
    %c1_21 = arith.constant 1 : index
    %c0_22 = arith.constant 0 : index
    %c0_23 = arith.constant 0 : index
    %13 = vector.load %arg1[%c0_20, %c1_21, %c0_22, %c0_23] : memref<2x4x8x32xf32, #tpu.memory_space<vmem>>, vector<1x1x7x32xf32>
    %14 = vector.shape_cast %13 : vector<1x1x7x32xf32> to vector<7x32xf32>
    %c0_24 = arith.constant 0 : index
    %c2_25 = arith.constant 2 : index
    %c0_26 = arith.constant 0 : index
    %c0_27 = arith.constant 0 : index
    %15 = vector.load %arg1[%c0_24, %c2_25, %c0_26, %c0_27] : memref<2x4x8x32xf32, #tpu.memory_space<vmem>>, vector<1x1x7x32xf32>
    %16 = vector.shape_cast %15 : vector<1x1x7x32xf32> to vector<7x32xf32>
    %c0_28 = arith.constant 0 : index
    %c3_29 = arith.constant 3 : index
    %c0_30 = arith.constant 0 : index
    %c0_31 = arith.constant 0 : index
    %17 = vector.load %arg1[%c0_28, %c3_29, %c0_30, %c0_31] : memref<2x4x8x32xf32, #tpu.memory_space<vmem>>, vector<1x1x7x32xf32>
    %18 = vector.shape_cast %17 : vector<1x1x7x32xf32> to vector<7x32xf32>
    %c0_32 = arith.constant 0 : index
    %c0_33 = arith.constant 0 : index
    %c1_34 = arith.constant 1 : index
    %c0_35 = arith.constant 0 : index
    %19 = vector.load %arg1[%c0_32, %c0_33, %c1_34, %c0_35] : memref<2x4x8x32xf32, #tpu.memory_space<vmem>>, vector<1x1x7x32xf32>
    %20 = vector.shape_cast %19 : vector<1x1x7x32xf32> to vector<7x32xf32>
    %c0_36 = arith.constant 0 : index
    %c1_37 = arith.constant 1 : index
    %c1_38 = arith.constant 1 : index
    %c0_39 = arith.constant 0 : index
    %21 = vector.load %arg1[%c0_36, %c1_37, %c1_38, %c0_39] : memref<2x4x8x32xf32, #tpu.memory_space<vmem>>, vector<1x1x7x32xf32>
    %22 = vector.shape_cast %21 : vector<1x1x7x32xf32> to vector<7x32xf32>
    %23 = tpu.concatenate %14, %16, %18, %20, %22 in 1 : vector<7x32xf32>, vector<7x32xf32>, vector<7x32xf32>, vector<7x32xf32>, vector<7x32xf32> -> vector<7x160xf32>
    %c0_40 = arith.constant 0 : index
    %c2_41 = arith.constant 2 : index
    %c0_42 = arith.constant 0 : index
    %c0_43 = arith.constant 0 : index
    %24 = vector.load %arg1[%c0_40, %c2_41, %c0_42, %c0_43] : memref<2x4x8x32xf32, #tpu.memory_space<vmem>>, vector<1x1x7x32xf32>
    %25 = vector.shape_cast %24 : vector<1x1x7x32xf32> to vector<7x32xf32>
    %c0_44 = arith.constant 0 : index
    %c3_45 = arith.constant 3 : index
    %c0_46 = arith.constant 0 : index
    %c0_47 = arith.constant 0 : index
    %26 = vector.load %arg1[%c0_44, %c3_45, %c0_46, %c0_47] : memref<2x4x8x32xf32, #tpu.memory_space<vmem>>, vector<1x1x7x32xf32>
    %27 = vector.shape_cast %26 : vector<1x1x7x32xf32> to vector<7x32xf32>
    %c0_48 = arith.constant 0 : index
    %c0_49 = arith.constant 0 : index
    %c1_50 = arith.constant 1 : index
    %c0_51 = arith.constant 0 : index
    %28 = vector.load %arg1[%c0_48, %c0_49, %c1_50, %c0_51] : memref<2x4x8x32xf32, #tpu.memory_space<vmem>>, vector<1x1x7x32xf32>
    %29 = vector.shape_cast %28 : vector<1x1x7x32xf32> to vector<7x32xf32>
    %c0_52 = arith.constant 0 : index
    %c1_53 = arith.constant 1 : index
    %c1_54 = arith.constant 1 : index
    %c0_55 = arith.constant 0 : index
    %30 = vector.load %arg1[%c0_52, %c1_53, %c1_54, %c0_55] : memref<2x4x8x32xf32, #tpu.memory_space<vmem>>, vector<1x1x7x32xf32>
    %31 = vector.shape_cast %30 : vector<1x1x7x32xf32> to vector<7x32xf32>
    %c0_56 = arith.constant 0 : index
    %c2_57 = arith.constant 2 : index
    %c1_58 = arith.constant 1 : index
    %c0_59 = arith.constant 0 : index
    %32 = vector.load %arg1[%c0_56, %c2_57, %c1_58, %c0_59] : memref<2x4x8x32xf32, #tpu.memory_space<vmem>>, vector<1x1x7x32xf32>
    %33 = vector.shape_cast %32 : vector<1x1x7x32xf32> to vector<7x32xf32>
    %34 = tpu.concatenate %25, %27, %29, %31, %33 in 1 : vector<7x32xf32>, vector<7x32xf32>, vector<7x32xf32>, vector<7x32xf32>, vector<7x32xf32> -> vector<7x160xf32>
    %c0_60 = arith.constant 0 : index
    %c3_61 = arith.constant 3 : index
    %c0_62 = arith.constant 0 : index
    %c0_63 = arith.constant 0 : index
    %35 = vector.load %arg1[%c0_60, %c3_61, %c0_62, %c0_63] : memref<2x4x8x32xf32, #tpu.memory_space<vmem>>, vector<1x1x7x32xf32>
    %36 = vector.shape_cast %35 : vector<1x1x7x32xf32> to vector<7x32xf32>
    %c0_64 = arith.constant 0 : index
    %c0_65 = arith.constant 0 : index
    %c1_66 = arith.constant 1 : index
    %c0_67 = arith.constant 0 : index
    %37 = vector.load %arg1[%c0_64, %c0_65, %c1_66, %c0_67] : memref<2x4x8x32xf32, #tpu.memory_space<vmem>>, vector<1x1x7x32xf32>
    %38 = vector.shape_cast %37 : vector<1x1x7x32xf32> to vector<7x32xf32>
    %c0_68 = arith.constant 0 : index
    %c1_69 = arith.constant 1 : index
    %c1_70 = arith.constant 1 : index
    %c0_71 = arith.constant 0 : index
    %39 = vector.load %arg1[%c0_68, %c1_69, %c1_70, %c0_71] : memref<2x4x8x32xf32, #tpu.memory_space<vmem>>, vector<1x1x7x32xf32>
    %40 = vector.shape_cast %39 : vector<1x1x7x32xf32> to vector<7x32xf32>
    %c0_72 = arith.constant 0 : index
    %c2_73 = arith.constant 2 : index
    %c1_74 = arith.constant 1 : index
    %c0_75 = arith.constant 0 : index
    %41 = vector.load %arg1[%c0_72, %c2_73, %c1_74, %c0_75] : memref<2x4x8x32xf32, #tpu.memory_space<vmem>>, vector<1x1x7x32xf32>
    %42 = vector.shape_cast %41 : vector<1x1x7x32xf32> to vector<7x32xf32>
    %c0_76 = arith.constant 0 : index
    %c3_77 = arith.constant 3 : index
    %c1_78 = arith.constant 1 : index
    %c0_79 = arith.constant 0 : index
    %43 = vector.load %arg1[%c0_76, %c3_77, %c1_78, %c0_79] : memref<2x4x8x32xf32, #tpu.memory_space<vmem>>, vector<1x1x7x32xf32>
    %44 = vector.shape_cast %43 : vector<1x1x7x32xf32> to vector<7x32xf32>
    %45 = tpu.concatenate %36, %38, %40, %42, %44 in 1 : vector<7x32xf32>, vector<7x32xf32>, vector<7x32xf32>, vector<7x32xf32>, vector<7x32xf32> -> vector<7x160xf32>
    %c1_80 = arith.constant 1 : index
    %c0_81 = arith.constant 0 : index
    %c0_82 = arith.constant 0 : index
    %c0_83 = arith.constant 0 : index
    %46 = vector.load %arg1[%c1_80, %c0_81, %c0_82, %c0_83] : memref<2x4x8x32xf32, #tpu.memory_space<vmem>>, vector<1x1x7x32xf32>
    %47 = vector.shape_cast %46 : vector<1x1x7x32xf32> to vector<7x32xf32>
    %c1_84 = arith.constant 1 : index
    %c1_85 = arith.constant 1 : index
    %c0_86 = arith.constant 0 : index
    %c0_87 = arith.constant 0 : index
    %48 = vector.load %arg1[%c1_84, %c1_85, %c0_86, %c0_87] : memref<2x4x8x32xf32, #tpu.memory_space<vmem>>, vector<1x1x7x32xf32>
    %49 = vector.shape_cast %48 : vector<1x1x7x32xf32> to vector<7x32xf32>
    %c1_88 = arith.constant 1 : index
    %c2_89 = arith.constant 2 : index
    %c0_90 = arith.constant 0 : index
    %c0_91 = arith.constant 0 : index
    %50 = vector.load %arg1[%c1_88, %c2_89, %c0_90, %c0_91] : memref<2x4x8x32xf32, #tpu.memory_space<vmem>>, vector<1x1x7x32xf32>
    %51 = vector.shape_cast %50 : vector<1x1x7x32xf32> to vector<7x32xf32>
    %c1_92 = arith.constant 1 : index
    %c3_93 = arith.constant 3 : index
    %c0_94 = arith.constant 0 : index
    %c0_95 = arith.constant 0 : index
    %52 = vector.load %arg1[%c1_92, %c3_93, %c0_94, %c0_95] : memref<2x4x8x32xf32, #tpu.memory_space<vmem>>, vector<1x1x7x32xf32>
    %53 = vector.shape_cast %52 : vector<1x1x7x32xf32> to vector<7x32xf32>
    %c1_96 = arith.constant 1 : index
    %c0_97 = arith.constant 0 : index
    %c1_98 = arith.constant 1 : index
    %c0_99 = arith.constant 0 : index
    %54 = vector.load %arg1[%c1_96, %c0_97, %c1_98, %c0_99] : memref<2x4x8x32xf32, #tpu.memory_space<vmem>>, vector<1x1x7x32xf32>
    %55 = vector.shape_cast %54 : vector<1x1x7x32xf32> to vector<7x32xf32>
    %56 = tpu.concatenate %47, %49, %51, %53, %55 in 1 : vector<7x32xf32>, vector<7x32xf32>, vector<7x32xf32>, vector<7x32xf32>, vector<7x32xf32> -> vector<7x160xf32>
    %c1_100 = arith.constant 1 : index
    %c1_101 = arith.constant 1 : index
    %c0_102 = arith.constant 0 : index
    %c0_103 = arith.constant 0 : index
    %57 = vector.load %arg1[%c1_100, %c1_101, %c0_102, %c0_103] : memref<2x4x8x32xf32, #tpu.memory_space<vmem>>, vector<1x1x7x32xf32>
    %58 = vector.shape_cast %57 : vector<1x1x7x32xf32> to vector<7x32xf32>
    %c1_104 = arith.constant 1 : index
    %c2_105 = arith.constant 2 : index
    %c0_106 = arith.constant 0 : index
    %c0_107 = arith.constant 0 : index
    %59 = vector.load %arg1[%c1_104, %c2_105, %c0_106, %c0_107] : memref<2x4x8x32xf32, #tpu.memory_space<vmem>>, vector<1x1x7x32xf32>
    %60 = vector.shape_cast %59 : vector<1x1x7x32xf32> to vector<7x32xf32>
    %c1_108 = arith.constant 1 : index
    %c3_109 = arith.constant 3 : index
    %c0_110 = arith.constant 0 : index
    %c0_111 = arith.constant 0 : index
    %61 = vector.load %arg1[%c1_108, %c3_109, %c0_110, %c0_111] : memref<2x4x8x32xf32, #tpu.memory_space<vmem>>, vector<1x1x7x32xf32>
    %62 = vector.shape_cast %61 : vector<1x1x7x32xf32> to vector<7x32xf32>
    %c1_112 = arith.constant 1 : index
    %c0_113 = arith.constant 0 : index
    %c1_114 = arith.constant 1 : index
    %c0_115 = arith.constant 0 : index
    %63 = vector.load %arg1[%c1_112, %c0_113, %c1_114, %c0_115] : memref<2x4x8x32xf32, #tpu.memory_space<vmem>>, vector<1x1x7x32xf32>
    %64 = vector.shape_cast %63 : vector<1x1x7x32xf32> to vector<7x32xf32>
    %c1_116 = arith.constant 1 : index
    %c1_117 = arith.constant 1 : index
    %c1_118 = arith.constant 1 : index
    %c0_119 = arith.constant 0 : index
    %65 = vector.load %arg1[%c1_116, %c1_117, %c1_118, %c0_119] : memref<2x4x8x32xf32, #tpu.memory_space<vmem>>, vector<1x1x7x32xf32>
    %66 = vector.shape_cast %65 : vector<1x1x7x32xf32> to vector<7x32xf32>
    %67 = tpu.concatenate %58, %60, %62, %64, %66 in 1 : vector<7x32xf32>, vector<7x32xf32>, vector<7x32xf32>, vector<7x32xf32>, vector<7x32xf32> -> vector<7x160xf32>
    %c1_120 = arith.constant 1 : index
    %c2_121 = arith.constant 2 : index
    %c0_122 = arith.constant 0 : index
    %c0_123 = arith.constant 0 : index
    %68 = vector.load %arg1[%c1_120, %c2_121, %c0_122, %c0_123] : memref<2x4x8x32xf32, #tpu.memory_space<vmem>>, vector<1x1x7x32xf32>
    %69 = vector.shape_cast %68 : vector<1x1x7x32xf32> to vector<7x32xf32>
    %c1_124 = arith.constant 1 : index
    %c3_125 = arith.constant 3 : index
    %c0_126 = arith.constant 0 : index
    %c0_127 = arith.constant 0 : index
    %70 = vector.load %arg1[%c1_124, %c3_125, %c0_126, %c0_127] : memref<2x4x8x32xf32, #tpu.memory_space<vmem>>, vector<1x1x7x32xf32>
    %71 = vector.shape_cast %70 : vector<1x1x7x32xf32> to vector<7x32xf32>
    %c1_128 = arith.constant 1 : index
    %c0_129 = arith.constant 0 : index
    %c1_130 = arith.constant 1 : index
    %c0_131 = arith.constant 0 : index
    %72 = vector.load %arg1[%c1_128, %c0_129, %c1_130, %c0_131] : memref<2x4x8x32xf32, #tpu.memory_space<vmem>>, vector<1x1x7x32xf32>
    %73 = vector.shape_cast %72 : vector<1x1x7x32xf32> to vector<7x32xf32>
    %c1_132 = arith.constant 1 : index
    %c1_133 = arith.constant 1 : index
    %c1_134 = arith.constant 1 : index
    %c0_135 = arith.constant 0 : index
    %74 = vector.load %arg1[%c1_132, %c1_133, %c1_134, %c0_135] : memref<2x4x8x32xf32, #tpu.memory_space<vmem>>, vector<1x1x7x32xf32>
    %75 = vector.shape_cast %74 : vector<1x1x7x32xf32> to vector<7x32xf32>
    %c1_136 = arith.constant 1 : index
    %c2_137 = arith.constant 2 : index
    %c1_138 = arith.constant 1 : index
    %c0_139 = arith.constant 0 : index
    %76 = vector.load %arg1[%c1_136, %c2_137, %c1_138, %c0_139] : memref<2x4x8x32xf32, #tpu.memory_space<vmem>>, vector<1x1x7x32xf32>
    %77 = vector.shape_cast %76 : vector<1x1x7x32xf32> to vector<7x32xf32>
    %78 = tpu.concatenate %69, %71, %73, %75, %77 in 1 : vector<7x32xf32>, vector<7x32xf32>, vector<7x32xf32>, vector<7x32xf32>, vector<7x32xf32> -> vector<7x160xf32>
    %c1_140 = arith.constant 1 : index
    %c3_141 = arith.constant 3 : index
    %c0_142 = arith.constant 0 : index
    %c0_143 = arith.constant 0 : index
    %79 = vector.load %arg1[%c1_140, %c3_141, %c0_142, %c0_143] : memref<2x4x8x32xf32, #tpu.memory_space<vmem>>, vector<1x1x7x32xf32>
    %80 = vector.shape_cast %79 : vector<1x1x7x32xf32> to vector<7x32xf32>
    %c1_144 = arith.constant 1 : index
    %c0_145 = arith.constant 0 : index
    %c1_146 = arith.constant 1 : index
    %c0_147 = arith.constant 0 : index
    %81 = vector.load %arg1[%c1_144, %c0_145, %c1_146, %c0_147] : memref<2x4x8x32xf32, #tpu.memory_space<vmem>>, vector<1x1x7x32xf32>
    %82 = vector.shape_cast %81 : vector<1x1x7x32xf32> to vector<7x32xf32>
    %c1_148 = arith.constant 1 : index
    %c1_149 = arith.constant 1 : index
    %c1_150 = arith.constant 1 : index
    %c0_151 = arith.constant 0 : index
    %83 = vector.load %arg1[%c1_148, %c1_149, %c1_150, %c0_151] : memref<2x4x8x32xf32, #tpu.memory_space<vmem>>, vector<1x1x7x32xf32>
    %84 = vector.shape_cast %83 : vector<1x1x7x32xf32> to vector<7x32xf32>
    %c1_152 = arith.constant 1 : index
    %c2_153 = arith.constant 2 : index
    %c1_154 = arith.constant 1 : index
    %c0_155 = arith.constant 0 : index
    %85 = vector.load %arg1[%c1_152, %c2_153, %c1_154, %c0_155] : memref<2x4x8x32xf32, #tpu.memory_space<vmem>>, vector<1x1x7x32xf32>
    %86 = vector.shape_cast %85 : vector<1x1x7x32xf32> to vector<7x32xf32>
    %c1_156 = arith.constant 1 : index
    %c3_157 = arith.constant 3 : index
    %c1_158 = arith.constant 1 : index
    %c0_159 = arith.constant 0 : index
    %87 = vector.load %arg1[%c1_156, %c3_157, %c1_158, %c0_159] : memref<2x4x8x32xf32, #tpu.memory_space<vmem>>, vector<1x1x7x32xf32>
    %88 = vector.shape_cast %87 : vector<1x1x7x32xf32> to vector<7x32xf32>
    %89 = tpu.concatenate %80, %82, %84, %86, %88 in 1 : vector<7x32xf32>, vector<7x32xf32>, vector<7x32xf32>, vector<7x32xf32>, vector<7x32xf32> -> vector<7x160xf32>
    %90 = tpu.concatenate %12, %23, %34, %45, %56, %67, %78, %89 in 0 : vector<7x160xf32>, vector<7x160xf32>, vector<7x160xf32>, vector<7x160xf32>, vector<7x160xf32>, vector<7x160xf32>, vector<7x160xf32>, vector<7x160xf32> -> vector<56x160xf32>
    %91 = arith.truncf %90 : vector<56x160xf32> to vector<56x160xbf16>
    %c0_160 = arith.constant 0 : index
    %c0_161 = arith.constant 0 : index
    %92 = vector.load %arg2[%c0_160, %c0_161] : memref<160x448xbf16, #tpu.memory_space<vmem>>, vector<160x448xbf16>
    %cst_162 = arith.constant dense<0.000000e+00> : vector<56x448xf32>
    %93 = tpu.matmul %91, %92, %cst_162 {dimension_numbers = #tpu.dot_dimension_numbers<[1], [0], [0], [1], [0, 0, 1, 1], [], []>} : vector<56x160xbf16>, vector<160x448xbf16>, vector<56x448xf32> -> vector<56x448xf32>
    %c0_163 = arith.constant 0 : index
    %c0_164 = arith.constant 0 : index
    %94 = vector.load %arg3[%c0_163, %c0_164] : memref<1x224xf32, #tpu.memory_space<vmem>>, vector<1x224xf32>
    %95 = vector.extract_strided_slice %93 {offsets = [0, 0], sizes = [14, 448], strides = [1, 1]} : vector<56x448xf32> to vector<14x448xf32>
    %96 = vector.extract_strided_slice %95 {offsets = [0, 0], sizes = [7, 224], strides = [1, 1]} : vector<14x448xf32> to vector<7x224xf32>
    %97 = vector.extract_strided_slice %95 {offsets = [0, 224], sizes = [7, 224], strides = [1, 1]} : vector<14x448xf32> to vector<7x224xf32>
    %98 = arith.maximumf %96, %97 : vector<7x224xf32>
    %99 = vector.extract_strided_slice %95 {offsets = [7, 0], sizes = [7, 224], strides = [1, 1]} : vector<14x448xf32> to vector<7x224xf32>
    %100 = vector.extract_strided_slice %95 {offsets = [7, 224], sizes = [7, 224], strides = [1, 1]} : vector<14x448xf32> to vector<7x224xf32>
    %101 = arith.maximumf %99, %100 : vector<7x224xf32>
    %102 = arith.maximumf %98, %101 : vector<7x224xf32>
    %103 = vector.broadcast %94 : vector<1x224xf32> to vector<7x224xf32>
    %104 = arith.addf %102, %103 : vector<7x224xf32>
    %cst_165 = arith.constant 0.000000e+00 : f32
    %105 = vector.broadcast %cst_165 : f32 to vector<7x224xf32>
    %106 = arith.maximumf %104, %105 : vector<7x224xf32>
    %c0_166 = arith.constant 0 : index
    %c0_167 = arith.constant 0 : index
    %c1_168 = arith.constant 1 : index
    %c32 = arith.constant 32 : index
    %107 = vector.load %arg7[%c0_166, %c0_167, %c1_168, %c32] : memref<2x2x9x288xf32, #tpu.memory_space<vmem>>, vector<1x1x7x224xf32>
    %108 = vector.shape_cast %107 : vector<1x1x7x224xf32> to vector<7x224xf32>
    %109 = vector.shape_cast %106 : vector<7x224xf32> to vector<1x1x7x224xf32>
    tpu.vector_store %arg7[%c0_166, %c0_167, %c1_168, %c32], %109 {strides = array<i32>} : memref<2x2x9x288xf32, #tpu.memory_space<vmem>>, vector<1x1x7x224xf32>,
    %110 = vector.extract_strided_slice %93 {offsets = [14, 0], sizes = [14, 448], strides = [1, 1]} : vector<56x448xf32> to vector<14x448xf32>
    %111 = vector.extract_strided_slice %110 {offsets = [0, 0], sizes = [7, 224], strides = [1, 1]} : vector<14x448xf32> to vector<7x224xf32>
    %112 = vector.extract_strided_slice %110 {offsets = [0, 224], sizes = [7, 224], strides = [1, 1]} : vector<14x448xf32> to vector<7x224xf32>
    %113 = arith.maximumf %111, %112 : vector<7x224xf32>
    %114 = vector.extract_strided_slice %110 {offsets = [7, 0], sizes = [7, 224], strides = [1, 1]} : vector<14x448xf32> to vector<7x224xf32>
    %115 = vector.extract_strided_slice %110 {offsets = [7, 224], sizes = [7, 224], strides = [1, 1]} : vector<14x448xf32> to vector<7x224xf32>
    %116 = arith.maximumf %114, %115 : vector<7x224xf32>
    %117 = arith.maximumf %113, %116 : vector<7x224xf32>
    %118 = vector.broadcast %94 : vector<1x224xf32> to vector<7x224xf32>
    %119 = arith.addf %117, %118 : vector<7x224xf32>
    %cst_169 = arith.constant 0.000000e+00 : f32
    %120 = vector.broadcast %cst_169 : f32 to vector<7x224xf32>
    %121 = arith.maximumf %119, %120 : vector<7x224xf32>
    %c0_170 = arith.constant 0 : index
    %c1_171 = arith.constant 1 : index
    %c1_172 = arith.constant 1 : index
    %c32_173 = arith.constant 32 : index
    %122 = vector.load %arg7[%c0_170, %c1_171, %c1_172, %c32_173] : memref<2x2x9x288xf32, #tpu.memory_space<vmem>>, vector<1x1x7x224xf32>
    %123 = vector.shape_cast %122 : vector<1x1x7x224xf32> to vector<7x224xf32>
    %124 = vector.shape_cast %121 : vector<7x224xf32> to vector<1x1x7x224xf32>
    tpu.vector_store %arg7[%c0_170, %c1_171, %c1_172, %c32_173], %124 {strides = array<i32>} : memref<2x2x9x288xf32, #tpu.memory_space<vmem>>, vector<1x1x7x224xf32>,
    %125 = vector.extract_strided_slice %93 {offsets = [28, 0], sizes = [14, 448], strides = [1, 1]} : vector<56x448xf32> to vector<14x448xf32>
    %126 = vector.extract_strided_slice %125 {offsets = [0, 0], sizes = [7, 224], strides = [1, 1]} : vector<14x448xf32> to vector<7x224xf32>
    %127 = vector.extract_strided_slice %125 {offsets = [0, 224], sizes = [7, 224], strides = [1, 1]} : vector<14x448xf32> to vector<7x224xf32>
    %128 = arith.maximumf %126, %127 : vector<7x224xf32>
    %129 = vector.extract_strided_slice %125 {offsets = [7, 0], sizes = [7, 224], strides = [1, 1]} : vector<14x448xf32> to vector<7x224xf32>
    %130 = vector.extract_strided_slice %125 {offsets = [7, 224], sizes = [7, 224], strides = [1, 1]} : vector<14x448xf32> to vector<7x224xf32>
    %131 = arith.maximumf %129, %130 : vector<7x224xf32>
    %132 = arith.maximumf %128, %131 : vector<7x224xf32>
    %133 = vector.broadcast %94 : vector<1x224xf32> to vector<7x224xf32>
    %134 = arith.addf %132, %133 : vector<7x224xf32>
    %cst_174 = arith.constant 0.000000e+00 : f32
    %135 = vector.broadcast %cst_174 : f32 to vector<7x224xf32>
    %136 = arith.maximumf %134, %135 : vector<7x224xf32>
    %c1_175 = arith.constant 1 : index
    %c0_176 = arith.constant 0 : index
    %c1_177 = arith.constant 1 : index
    %c32_178 = arith.constant 32 : index
    %137 = vector.load %arg7[%c1_175, %c0_176, %c1_177, %c32_178] : memref<2x2x9x288xf32, #tpu.memory_space<vmem>>, vector<1x1x7x224xf32>
    %138 = vector.shape_cast %137 : vector<1x1x7x224xf32> to vector<7x224xf32>
    %139 = vector.shape_cast %136 : vector<7x224xf32> to vector<1x1x7x224xf32>
    tpu.vector_store %arg7[%c1_175, %c0_176, %c1_177, %c32_178], %139 {strides = array<i32>} : memref<2x2x9x288xf32, #tpu.memory_space<vmem>>, vector<1x1x7x224xf32>,
    %140 = vector.extract_strided_slice %93 {offsets = [42, 0], sizes = [14, 448], strides = [1, 1]} : vector<56x448xf32> to vector<14x448xf32>
    %141 = vector.extract_strided_slice %140 {offsets = [0, 0], sizes = [7, 224], strides = [1, 1]} : vector<14x448xf32> to vector<7x224xf32>
    %142 = vector.extract_strided_slice %140 {offsets = [0, 224], sizes = [7, 224], strides = [1, 1]} : vector<14x448xf32> to vector<7x224xf32>
    %143 = arith.maximumf %141, %142 : vector<7x224xf32>
    %144 = vector.extract_strided_slice %140 {offsets = [7, 0], sizes = [7, 224], strides = [1, 1]} : vector<14x448xf32> to vector<7x224xf32>
    %145 = vector.extract_strided_slice %140 {offsets = [7, 224], sizes = [7, 224], strides = [1, 1]} : vector<14x448xf32> to vector<7x224xf32>
    %146 = arith.maximumf %144, %145 : vector<7x224xf32>
    %147 = arith.maximumf %143, %146 : vector<7x224xf32>
    %148 = vector.broadcast %94 : vector<1x224xf32> to vector<7x224xf32>
    %149 = arith.addf %147, %148 : vector<7x224xf32>
    %cst_179 = arith.constant 0.000000e+00 : f32
    %150 = vector.broadcast %cst_179 : f32 to vector<7x224xf32>
    %151 = arith.maximumf %149, %150 : vector<7x224xf32>
    %c1_180 = arith.constant 1 : index
    %c1_181 = arith.constant 1 : index
    %c1_182 = arith.constant 1 : index
    %c32_183 = arith.constant 32 : index
    %152 = vector.load %arg7[%c1_180, %c1_181, %c1_182, %c32_183] : memref<2x2x9x288xf32, #tpu.memory_space<vmem>>, vector<1x1x7x224xf32>
    %153 = vector.shape_cast %152 : vector<1x1x7x224xf32> to vector<7x224xf32>
    %154 = vector.shape_cast %151 : vector<7x224xf32> to vector<1x1x7x224xf32>
    tpu.vector_store %arg7[%c1_180, %c1_181, %c1_182, %c32_183], %154 {strides = array<i32>} : memref<2x2x9x288xf32, #tpu.memory_space<vmem>>, vector<1x1x7x224xf32>,
    %c0_184 = arith.constant 0 : index
    %c0_185 = arith.constant 0 : index
    %c0_186 = arith.constant 0 : index
    %c0_187 = arith.constant 0 : index
    %155 = vector.load %arg7[%c0_184, %c0_185, %c0_186, %c0_187] : memref<2x2x9x288xf32, #tpu.memory_space<vmem>>, vector<1x1x7x288xf32>
    %156 = vector.shape_cast %155 : vector<1x1x7x288xf32> to vector<7x288xf32>
    %c0_188 = arith.constant 0 : index
    %c1_189 = arith.constant 1 : index
    %c0_190 = arith.constant 0 : index
    %c0_191 = arith.constant 0 : index
    %157 = vector.load %arg7[%c0_188, %c1_189, %c0_190, %c0_191] : memref<2x2x9x288xf32, #tpu.memory_space<vmem>>, vector<1x1x7x288xf32>
    %158 = vector.shape_cast %157 : vector<1x1x7x288xf32> to vector<7x288xf32>
    %c0_192 = arith.constant 0 : index
    %c0_193 = arith.constant 0 : index
    %c1_194 = arith.constant 1 : index
    %c0_195 = arith.constant 0 : index
    %159 = vector.load %arg7[%c0_192, %c0_193, %c1_194, %c0_195] : memref<2x2x9x288xf32, #tpu.memory_space<vmem>>, vector<1x1x7x288xf32>
    %160 = vector.shape_cast %159 : vector<1x1x7x288xf32> to vector<7x288xf32>
    %c0_196 = arith.constant 0 : index
    %c1_197 = arith.constant 1 : index
    %c1_198 = arith.constant 1 : index
    %c0_199 = arith.constant 0 : index
    %161 = vector.load %arg7[%c0_196, %c1_197, %c1_198, %c0_199] : memref<2x2x9x288xf32, #tpu.memory_space<vmem>>, vector<1x1x7x288xf32>
    %162 = vector.shape_cast %161 : vector<1x1x7x288xf32> to vector<7x288xf32>
    %c0_200 = arith.constant 0 : index
    %c0_201 = arith.constant 0 : index
    %c2_202 = arith.constant 2 : index
    %c0_203 = arith.constant 0 : index
    %163 = vector.load %arg7[%c0_200, %c0_201, %c2_202, %c0_203] : memref<2x2x9x288xf32, #tpu.memory_space<vmem>>, vector<1x1x7x288xf32>
    %164 = vector.shape_cast %163 : vector<1x1x7x288xf32> to vector<7x288xf32>
    %165 = tpu.concatenate %156, %158, %160, %162, %164 in 1 : vector<7x288xf32>, vector<7x288xf32>, vector<7x288xf32>, vector<7x288xf32>, vector<7x288xf32> -> vector<7x1440xf32>
    %c0_204 = arith.constant 0 : index
    %c1_205 = arith.constant 1 : index
    %c0_206 = arith.constant 0 : index
    %c0_207 = arith.constant 0 : index
    %166 = vector.load %arg7[%c0_204, %c1_205, %c0_206, %c0_207] : memref<2x2x9x288xf32, #tpu.memory_space<vmem>>, vector<1x1x7x288xf32>
    %167 = vector.shape_cast %166 : vector<1x1x7x288xf32> to vector<7x288xf32>
    %c0_208 = arith.constant 0 : index
    %c0_209 = arith.constant 0 : index
    %c1_210 = arith.constant 1 : index
    %c0_211 = arith.constant 0 : index
    %168 = vector.load %arg7[%c0_208, %c0_209, %c1_210, %c0_211] : memref<2x2x9x288xf32, #tpu.memory_space<vmem>>, vector<1x1x7x288xf32>
    %169 = vector.shape_cast %168 : vector<1x1x7x288xf32> to vector<7x288xf32>
    %c0_212 = arith.constant 0 : index
    %c1_213 = arith.constant 1 : index
    %c1_214 = arith.constant 1 : index
    %c0_215 = arith.constant 0 : index
    %170 = vector.load %arg7[%c0_212, %c1_213, %c1_214, %c0_215] : memref<2x2x9x288xf32, #tpu.memory_space<vmem>>, vector<1x1x7x288xf32>
    %171 = vector.shape_cast %170 : vector<1x1x7x288xf32> to vector<7x288xf32>
    %c0_216 = arith.constant 0 : index
    %c0_217 = arith.constant 0 : index
    %c2_218 = arith.constant 2 : index
    %c0_219 = arith.constant 0 : index
    %172 = vector.load %arg7[%c0_216, %c0_217, %c2_218, %c0_219] : memref<2x2x9x288xf32, #tpu.memory_space<vmem>>, vector<1x1x7x288xf32>
    %173 = vector.shape_cast %172 : vector<1x1x7x288xf32> to vector<7x288xf32>
    %c0_220 = arith.constant 0 : index
    %c1_221 = arith.constant 1 : index
    %c2_222 = arith.constant 2 : index
    %c0_223 = arith.constant 0 : index
    %174 = vector.load %arg7[%c0_220, %c1_221, %c2_222, %c0_223] : memref<2x2x9x288xf32, #tpu.memory_space<vmem>>, vector<1x1x7x288xf32>
    %175 = vector.shape_cast %174 : vector<1x1x7x288xf32> to vector<7x288xf32>
    %176 = tpu.concatenate %167, %169, %171, %173, %175 in 1 : vector<7x288xf32>, vector<7x288xf32>, vector<7x288xf32>, vector<7x288xf32>, vector<7x288xf32> -> vector<7x1440xf32>
    %c1_224 = arith.constant 1 : index
    %c0_225 = arith.constant 0 : index
    %c0_226 = arith.constant 0 : index
    %c0_227 = arith.constant 0 : index
    %177 = vector.load %arg7[%c1_224, %c0_225, %c0_226, %c0_227] : memref<2x2x9x288xf32, #tpu.memory_space<vmem>>, vector<1x1x7x288xf32>
    %178 = vector.shape_cast %177 : vector<1x1x7x288xf32> to vector<7x288xf32>
    %c1_228 = arith.constant 1 : index
    %c1_229 = arith.constant 1 : index
    %c0_230 = arith.constant 0 : index
    %c0_231 = arith.constant 0 : index
    %179 = vector.load %arg7[%c1_228, %c1_229, %c0_230, %c0_231] : memref<2x2x9x288xf32, #tpu.memory_space<vmem>>, vector<1x1x7x288xf32>
    %180 = vector.shape_cast %179 : vector<1x1x7x288xf32> to vector<7x288xf32>
    %c1_232 = arith.constant 1 : index
    %c0_233 = arith.constant 0 : index
    %c1_234 = arith.constant 1 : index
    %c0_235 = arith.constant 0 : index
    %181 = vector.load %arg7[%c1_232, %c0_233, %c1_234, %c0_235] : memref<2x2x9x288xf32, #tpu.memory_space<vmem>>, vector<1x1x7x288xf32>
    %182 = vector.shape_cast %181 : vector<1x1x7x288xf32> to vector<7x288xf32>
    %c1_236 = arith.constant 1 : index
    %c1_237 = arith.constant 1 : index
    %c1_238 = arith.constant 1 : index
    %c0_239 = arith.constant 0 : index
    %183 = vector.load %arg7[%c1_236, %c1_237, %c1_238, %c0_239] : memref<2x2x9x288xf32, #tpu.memory_space<vmem>>, vector<1x1x7x288xf32>
    %184 = vector.shape_cast %183 : vector<1x1x7x288xf32> to vector<7x288xf32>
    %c1_240 = arith.constant 1 : index
    %c0_241 = arith.constant 0 : index
    %c2_242 = arith.constant 2 : index
    %c0_243 = arith.constant 0 : index
    %185 = vector.load %arg7[%c1_240, %c0_241, %c2_242, %c0_243] : memref<2x2x9x288xf32, #tpu.memory_space<vmem>>, vector<1x1x7x288xf32>
    %186 = vector.shape_cast %185 : vector<1x1x7x288xf32> to vector<7x288xf32>
    %187 = tpu.concatenate %178, %180, %182, %184, %186 in 1 : vector<7x288xf32>, vector<7x288xf32>, vector<7x288xf32>, vector<7x288xf32>, vector<7x288xf32> -> vector<7x1440xf32>
    %c1_244 = arith.constant 1 : index
    %c1_245 = arith.constant 1 : index
    %c0_246 = arith.constant 0 : index
    %c0_247 = arith.constant 0 : index
    %188 = vector.load %arg7[%c1_244, %c1_245, %c0_246, %c0_247] : memref<2x2x9x288xf32, #tpu.memory_space<vmem>>, vector<1x1x7x288xf32>
    %189 = vector.shape_cast %188 : vector<1x1x7x288xf32> to vector<7x288xf32>
    %c1_248 = arith.constant 1 : index
    %c0_249 = arith.constant 0 : index
    %c1_250 = arith.constant 1 : index
    %c0_251 = arith.constant 0 : index
    %190 = vector.load %arg7[%c1_248, %c0_249, %c1_250, %c0_251] : memref<2x2x9x288xf32, #tpu.memory_space<vmem>>, vector<1x1x7x288xf32>
    %191 = vector.shape_cast %190 : vector<1x1x7x288xf32> to vector<7x288xf32>
    %c1_252 = arith.constant 1 : index
    %c1_253 = arith.constant 1 : index
    %c1_254 = arith.constant 1 : index
    %c0_255 = arith.constant 0 : index
    %192 = vector.load %arg7[%c1_252, %c1_253, %c1_254, %c0_255] : memref<2x2x9x288xf32, #tpu.memory_space<vmem>>, vector<1x1x7x288xf32>
    %193 = vector.shape_cast %192 : vector<1x1x7x288xf32> to vector<7x288xf32>
    %c1_256 = arith.constant 1 : index
    %c0_257 = arith.constant 0 : index
    %c2_258 = arith.constant 2 : index
    %c0_259 = arith.constant 0 : index
    %194 = vector.load %arg7[%c1_256, %c0_257, %c2_258, %c0_259] : memref<2x2x9x288xf32, #tpu.memory_space<vmem>>, vector<1x1x7x288xf32>
    %195 = vector.shape_cast %194 : vector<1x1x7x288xf32> to vector<7x288xf32>
    %c1_260 = arith.constant 1 : index
    %c1_261 = arith.constant 1 : index
    %c2_262 = arith.constant 2 : index
    %c0_263 = arith.constant 0 : index
    %196 = vector.load %arg7[%c1_260, %c1_261, %c2_262, %c0_263] : memref<2x2x9x288xf32, #tpu.memory_space<vmem>>, vector<1x1x7x288xf32>
    %197 = vector.shape_cast %196 : vector<1x1x7x288xf32> to vector<7x288xf32>
    %198 = tpu.concatenate %189, %191, %193, %195, %197 in 1 : vector<7x288xf32>, vector<7x288xf32>, vector<7x288xf32>, vector<7x288xf32>, vector<7x288xf32> -> vector<7x1440xf32>
    %199 = tpu.concatenate %165, %176, %187, %198 in 0 : vector<7x1440xf32>, vector<7x1440xf32>, vector<7x1440xf32>, vector<7x1440xf32> -> vector<28x1440xf32>
    %200 = arith.truncf %199 : vector<28x1440xf32> to vector<28x1440xbf16>
    %c0_264 = arith.constant 0 : index
    %c0_265 = arith.constant 0 : index
    %201 = vector.load %arg4[%c0_264, %c0_265] : memref<1440x448xbf16, #tpu.memory_space<vmem>>, vector<1440x448xbf16>
    %cst_266 = arith.constant dense<0.000000e+00> : vector<28x448xf32>
    %202 = tpu.matmul %200, %201, %cst_266 {dimension_numbers = #tpu.dot_dimension_numbers<[1], [0], [0], [1], [0, 0, 1, 1], [], []>} : vector<28x1440xbf16>, vector<1440x448xbf16>, vector<28x448xf32> -> vector<28x448xf32>
    %c0_267 = arith.constant 0 : index
    %c0_268 = arith.constant 0 : index
    %203 = vector.load %arg5[%c0_267, %c0_268] : memref<1x224xf32, #tpu.memory_space<vmem>>, vector<1x224xf32>
    %204 = vector.extract_strided_slice %202 {offsets = [0, 0], sizes = [14, 448], strides = [1, 1]} : vector<28x448xf32> to vector<14x448xf32>
    %205 = vector.extract_strided_slice %204 {offsets = [0, 0], sizes = [7, 224], strides = [1, 1]} : vector<14x448xf32> to vector<7x224xf32>
    %206 = vector.extract_strided_slice %204 {offsets = [0, 224], sizes = [7, 224], strides = [1, 1]} : vector<14x448xf32> to vector<7x224xf32>
    %207 = arith.maximumf %205, %206 : vector<7x224xf32>
    %208 = vector.extract_strided_slice %204 {offsets = [7, 0], sizes = [7, 224], strides = [1, 1]} : vector<14x448xf32> to vector<7x224xf32>
    %209 = vector.extract_strided_slice %204 {offsets = [7, 224], sizes = [7, 224], strides = [1, 1]} : vector<14x448xf32> to vector<7x224xf32>
    %210 = arith.maximumf %208, %209 : vector<7x224xf32>
    %211 = arith.maximumf %207, %210 : vector<7x224xf32>
    %212 = vector.broadcast %203 : vector<1x224xf32> to vector<7x224xf32>
    %213 = arith.addf %211, %212 : vector<7x224xf32>
    %cst_269 = arith.constant 0.000000e+00 : f32
    %214 = vector.broadcast %cst_269 : f32 to vector<7x224xf32>
    %215 = arith.maximumf %213, %214 : vector<7x224xf32>
    %c0_270 = arith.constant 0 : index
    %c0_271 = arith.constant 0 : index
    %c0_272 = arith.constant 0 : index
    %216 = vector.load %arg6[%c0_270, %c0_271, %c0_272] : memref<2x7x224xf32, #tpu.memory_space<vmem>>, vector<1x7x224xf32>
    %217 = vector.shape_cast %216 : vector<1x7x224xf32> to vector<7x224xf32>
    %218 = vector.shape_cast %215 : vector<7x224xf32> to vector<1x7x224xf32>
    tpu.vector_store %arg6[%c0_270, %c0_271, %c0_272], %218 {strides = array<i32>} : memref<2x7x224xf32, #tpu.memory_space<vmem>>, vector<1x7x224xf32>,
    %219 = vector.extract_strided_slice %202 {offsets = [14, 0], sizes = [14, 448], strides = [1, 1]} : vector<28x448xf32> to vector<14x448xf32>
    %220 = vector.extract_strided_slice %219 {offsets = [0, 0], sizes = [7, 224], strides = [1, 1]} : vector<14x448xf32> to vector<7x224xf32>
    %221 = vector.extract_strided_slice %219 {offsets = [0, 224], sizes = [7, 224], strides = [1, 1]} : vector<14x448xf32> to vector<7x224xf32>
    %222 = arith.maximumf %220, %221 : vector<7x224xf32>
    %223 = vector.extract_strided_slice %219 {offsets = [7, 0], sizes = [7, 224], strides = [1, 1]} : vector<14x448xf32> to vector<7x224xf32>
    %224 = vector.extract_strided_slice %219 {offsets = [7, 224], sizes = [7, 224], strides = [1, 1]} : vector<14x448xf32> to vector<7x224xf32>
    %225 = arith.maximumf %223, %224 : vector<7x224xf32>
    %226 = arith.maximumf %222, %225 : vector<7x224xf32>
    %227 = vector.broadcast %203 : vector<1x224xf32> to vector<7x224xf32>
    %228 = arith.addf %226, %227 : vector<7x224xf32>
    %cst_273 = arith.constant 0.000000e+00 : f32
    %229 = vector.broadcast %cst_273 : f32 to vector<7x224xf32>
    %230 = arith.maximumf %228, %229 : vector<7x224xf32>
    %c1_274 = arith.constant 1 : index
    %c0_275 = arith.constant 0 : index
    %c0_276 = arith.constant 0 : index
    %231 = vector.load %arg6[%c1_274, %c0_275, %c0_276] : memref<2x7x224xf32, #tpu.memory_space<vmem>>, vector<1x7x224xf32>
    %232 = vector.shape_cast %231 : vector<1x7x224xf32> to vector<7x224xf32>
    %233 = vector.shape_cast %230 : vector<7x224xf32> to vector<1x7x224xf32>
    tpu.vector_store %arg6[%c1_274, %c0_275, %c0_276], %233 {strides = array<i32>} : memref<2x7x224xf32, #tpu.memory_space<vmem>>, vector<1x7x224xf32>,
    return
  }
  func.func @transform_0(%arg0: i32) -> (i32, i32, i32, i32) {
    %c0_i32 = arith.constant 0 : i32
    %c0_i32_0 = arith.constant 0 : i32
    %c0_i32_1 = arith.constant 0 : i32
    %c0_i32_2 = arith.constant 0 : i32
    return %arg0, %c0_i32, %c0_i32_0, %c0_i32_1 : i32, i32, i32, i32
  }
  func.func @transform_1(%arg0: i32) -> (i32, i32) {
    %c0_i32 = arith.constant 0 : i32
    %c0_i32_0 = arith.constant 0 : i32
    %c0_i32_1 = arith.constant 0 : i32
    return %c0_i32, %c0_i32_0 : i32, i32
  }
  func.func @transform_2(%arg0: i32) -> (i32, i32) {
    %c0_i32 = arith.constant 0 : i32
    %c0_i32_0 = arith.constant 0 : i32
    %c0_i32_1 = arith.constant 0 : i32
    return %c0_i32, %c0_i32_0 : i32, i32
  }
  func.func @transform_3(%arg0: i32) -> (i32, i32) {
    %c0_i32 = arith.constant 0 : i32
    %c0_i32_0 = arith.constant 0 : i32
    %c0_i32_1 = arith.constant 0 : i32
    return %c0_i32, %c0_i32_0 : i32, i32
  }
  func.func @transform_4(%arg0: i32) -> (i32, i32) {
    %c0_i32 = arith.constant 0 : i32
    %c0_i32_0 = arith.constant 0 : i32
    %c0_i32_1 = arith.constant 0 : i32
    return %c0_i32, %c0_i32_0 : i32, i32
  }
  func.func @transform_5(%arg0: i32) -> (i32, i32, i32) {
    %c0_i32 = arith.constant 0 : i32
    %c0_i32_0 = arith.constant 0 : i32
    %c0_i32_1 = arith.constant 0 : i32
    return %arg0, %c0_i32, %c0_i32_0 : i32, i32, i32
  }
}

module attributes {stable_mosaic.version = 11 : i64} {
  func.func @_linear_kernel(%arg0: i32, %arg1: memref<2x1568xf32, #tpu.memory_space<vmem>>, %arg2: memref<1568x128xbf16, #tpu.memory_space<vmem>>, %arg3: memref<1x128xf32, #tpu.memory_space<vmem>>, %arg4: memref<2x128xf32, #tpu.memory_space<vmem>>) attributes {dimension_semantics = [#tpu.dimension_semantics<parallel>], iteration_bounds = array<i64: 1>, scalar_prefetch = 0 : i64, scratch_operands = 0 : i64, tpu.core_type = #tpu.core_type<tc>, window_params = [{transform_indices = @transform_0, window_bounds = array<i64: 2, 1568>}, {pipeline_mode = #tpu.pipeline_mode<synchronous>, transform_indices = @transform_1, window_bounds = array<i64: 1568, 128>}, {pipeline_mode = #tpu.pipeline_mode<synchronous>, transform_indices = @transform_2, window_bounds = array<i64: 1, 128>}, {transform_indices = @transform_3, window_bounds = array<i64: 2, 128>}]} {
    %c0 = arith.constant 0 : index
    %c0_0 = arith.constant 0 : index
    %0 = vector.load %arg1[%c0, %c0_0] : memref<2x1568xf32, #tpu.memory_space<vmem>>, vector<2x1568xf32>
    %1 = arith.truncf %0 : vector<2x1568xf32> to vector<2x1568xbf16>
    %c0_1 = arith.constant 0 : index
    %c0_2 = arith.constant 0 : index
    %2 = vector.load %arg2[%c0_1, %c0_2] : memref<1568x128xbf16, #tpu.memory_space<vmem>>, vector<1568x128xbf16>
    %cst = arith.constant dense<0.000000e+00> : vector<2x128xf32>
    %3 = tpu.matmul %1, %2, %cst {dimension_numbers = #tpu.dot_dimension_numbers<[1], [0], [0], [1], [0, 0, 1, 1], [], []>} : vector<2x1568xbf16>, vector<1568x128xbf16>, vector<2x128xf32> -> vector<2x128xf32>
    %c0_3 = arith.constant 0 : index
    %c0_4 = arith.constant 0 : index
    %4 = vector.load %arg3[%c0_3, %c0_4] : memref<1x128xf32, #tpu.memory_space<vmem>>, vector<1x128xf32>
    %5 = vector.broadcast %4 : vector<1x128xf32> to vector<2x128xf32>
    %6 = arith.addf %3, %5 : vector<2x128xf32>
    %c0_5 = arith.constant 0 : index
    %c0_6 = arith.constant 0 : index
    %7 = vector.load %arg4[%c0_5, %c0_6] : memref<2x128xf32, #tpu.memory_space<vmem>>, vector<2x128xf32>
    tpu.vector_store %arg4[%c0_5, %c0_6], %6 {strides = array<i32>} : memref<2x128xf32, #tpu.memory_space<vmem>>, vector<2x128xf32>,
    return
  }
  func.func @transform_0(%arg0: i32) -> (i32, i32) {
    %c0_i32 = arith.constant 0 : i32
    %c0_i32_0 = arith.constant 0 : i32
    return %arg0, %c0_i32 : i32, i32
  }
  func.func @transform_1(%arg0: i32) -> (i32, i32) {
    %c0_i32 = arith.constant 0 : i32
    %c0_i32_0 = arith.constant 0 : i32
    %c0_i32_1 = arith.constant 0 : i32
    return %c0_i32, %c0_i32_0 : i32, i32
  }
  func.func @transform_2(%arg0: i32) -> (i32, i32) {
    %c0_i32 = arith.constant 0 : i32
    %c0_i32_0 = arith.constant 0 : i32
    %c0_i32_1 = arith.constant 0 : i32
    return %c0_i32, %c0_i32_0 : i32, i32
  }
  func.func @transform_3(%arg0: i32) -> (i32, i32) {
    %c0_i32 = arith.constant 0 : i32
    %c0_i32_0 = arith.constant 0 : i32
    return %arg0, %c0_i32 : i32, i32
  }
}

</mosaic_0001>

<llo_original>
// kernel: cnn_forward.3
$region0: #{cnn_forward.3}
  #allocation0 [shape = 'u32[]', space=smem, size = 0x4, offset = 0x4, fixed_abs, tag = 'smem constant byte address 0x4 - core index']
  #allocation1 [shape = 'u32[72,128]{1,0:T(1,128)}', space=vmem, size = 0x9000, scoped, tag = 'internal scratch']
  %s0 = inlined_call_operand.vmem [shape: f32[2,1568], index: 0, kind: input, shape index: {}]
  %s1 = inlined_call_operand.vmem [shape: bf16[1568,128], index: 1, kind: input, shape index: {}]
  %s2 = inlined_call_operand.vmem [shape: f32[1,128], index: 2, kind: input, shape index: {}]
  %s3 = inlined_call_operand.hbm [shape: f32[2,128], index: 3, kind: output, shape index: {}]
  %s4 = sld [smem:[#allocation0]]
  $region22: #{cnn_forward.3} parent=0
    _
  %s6 = ssub.s32 1, %s4
  %s7 = scalar_select 0, %s6, %s4
  $region1: #{cnn_forward.3} parent=0
    #allocation2 [shape = 'u8[1024]{0}', space=vmem, size = 0x400, scoped, tag = 'output window, operand 0, single buffered']
    #allocation3 [shape = 's32[1]{0}', space=sflag, size = 0x4, scoped, tag = 'scoped memory for cnn_forward.3']
    %8 = vsyncpa [#allocation3], 0
    // Predicated region
    $region2: #{cnn_forward.3} parent=1 // pred_check
      _
    $region3: #{cnn_forward.3} parent=1 // pred_check_branch
      %10 = sbr.rel (0) target = $region5
    $region4: #{cnn_forward.3} parent=1 // pred_region
      _
    $region5: #{cnn_forward.3} parent=1 // pred_fallthru
      _
    // Predicated region
    $region6: #{cnn_forward.3} parent=1 // pred_check
      _
    $region7: #{cnn_forward.3} parent=1 // pred_check_branch
      %12 = sbr.rel (0) target = $region9
    $region8: #{cnn_forward.3} parent=1 // pred_region
      _
    $region9: #{cnn_forward.3} parent=1 // pred_fallthru
      _
    // Predicated region
    $region10: #{cnn_forward.3} parent=1 // pred_check
      _
    $region11: #{cnn_forward.3} parent=1 // pred_check_branch
      %14 = sbr.rel (0) target = $region13
    $region12: #{cnn_forward.3} parent=1 // pred_region
      _
    $region13: #{cnn_forward.3} parent=1 // pred_fallthru
      _
    %v16 = vld [vmem:[%s0] sm:$0xff]
    %v17 = vld [vmem:[%s0 + $0x8] sm:$0xff]
    %v18 = vld [vmem:[%s0 + $0x10] sm:$0xff]
    %v19 = vld [vmem:[%s0 + $0x18] sm:$0x3]
    %24 = vst [vmem:[#allocation1] ss:$4 sm:$0xff] %v16
    %s25 = scalar_lea.vmem [#allocation1], 32
    %26 = vst [vmem:[%s25] ss:$4 sm:$0xff] %v17
    %v27 = vld.sshfl [vmem:[#allocation1] sm:$0xff pattern:$0x73625140]
    %v28 = vld.sshfl [vmem:[#allocation1 + $0x8] sm:$0xff pattern:$0x73625140]
    %v29 = vld.sshfl [vmem:[#allocation1 + $0x10] sm:$0xff pattern:$0x73625140]
    %v30 = vld.sshfl [vmem:[#allocation1 + $0x18] sm:$0xff pattern:$0x73625140]
    %v31 = vld.sshfl [vmem:[#allocation1 + $0x20] sm:$0xff pattern:$0x73625140]
    %v32 = vld.sshfl [vmem:[#allocation1 + $0x28] sm:$0xff pattern:$0x73625140]
    %v33 = vld.sshfl [vmem:[#allocation1 + $0x30] sm:$0xff pattern:$0x73625140]
    %v34 = vld.sshfl [vmem:[#allocation1 + $0x38] sm:$0xff pattern:$0x73625140]
    %35 = vst [vmem:[#allocation1] ss:$4 sm:$0xff] %v18
    %36 = vst [vmem:[%s25] ss:$4 sm:$0xff] %v19
    %v37 = vld.sshfl [vmem:[#allocation1] sm:$0xff pattern:$0x73625140]
    %v38 = vld.sshfl [vmem:[#allocation1 + $0x8] sm:$0xff pattern:$0x73625140]
    %v39 = vld.sshfl [vmem:[#allocation1 + $0x10] sm:$0xff pattern:$0x73625140]
    %v40 = vld.sshfl [vmem:[#allocation1 + $0x18] sm:$0xff pattern:$0x73625140]
    %v41 = vld.sshfl [vmem:[#allocation1 + $0x20] sm:$0xff pattern:$0x73625140]
    %v55 = vpack.c.bf16 %v27, %v27
    %v56 = vpack.c.bf16 %v28, %v28
    %v57 = vpack.c.bf16 %v29, %v29
    %v58 = vpack.c.bf16 %v30, %v30
    %v59 = vpack.c.bf16 %v31, %v31
    %v60 = vpack.c.bf16 %v32, %v32
    %v61 = vpack.c.bf16 %v33, %v33
    %v62 = vpack.c.bf16 %v34, %v34
    %v63 = vpack.c.bf16 %v37, %v37
    %v64 = vpack.c.bf16 %v38, %v38
    %v65 = vpack.c.bf16 %v39, %v39
    %v66 = vpack.c.bf16 %v40, %v40
    %v67 = vpack.c.bf16 %v41, %v41
    %v68 = vld [vmem:[%s1] sm:$0xf]
    %v69 = vld [vmem:[%s1 + $0x4] sm:$0xf]
    %v70 = vld [vmem:[%s1 + $0x8] sm:$0xf]
    %v71 = vld [vmem:[%s1 + $0xc] sm:$0xf]
    %v72 = vld [vmem:[%s1 + $0x10] sm:$0xf]
    %v73 = vld [vmem:[%s1 + $0x14] sm:$0xf]
    %v74 = vld [vmem:[%s1 + $0x18] sm:$0xf]
    %v75 = vld [vmem:[%s1 + $0x1c] sm:$0xf]
    %v76 = vld [vmem:[%s1 + $0x20] sm:$0xf]
    %v77 = vld [vmem:[%s1 + $0x24] sm:$0xf]
    %v78 = vld [vmem:[%s1 + $0x28] sm:$0xf]
    %v79 = vld [vmem:[%s1 + $0x2c] sm:$0xf]
    %v80 = vld [vmem:[%s1 + $0x30] sm:$0xf]
    %v81 = vld [vmem:[%s1 + $0x34] sm:$0xf]
    %v82 = vld [vmem:[%s1 + $0x38] sm:$0xf]
    %v83 = vld [vmem:[%s1 + $0x3c] sm:$0xf]
    %v84 = vld [vmem:[%s1 + $0x40] sm:$0xf]
    %v85 = vld [vmem:[%s1 + $0x44] sm:$0xf]
    %v86 = vld [vmem:[%s1 + $0x48] sm:$0xf]
    %v87 = vld [vmem:[%s1 + $0x4c] sm:$0xf]
    %v88 = vld [vmem:[%s1 + $0x50] sm:$0xf]
    %v89 = vld [vmem:[%s1 + $0x54] sm:$0xf]
    %v90 = vld [vmem:[%s1 + $0x58] sm:$0xf]
    %v91 = vld [vmem:[%s1 + $0x5c] sm:$0xf]
    %v92 = vld [vmem:[%s1 + $0x60] sm:$0xf]
    %v93 = vld [vmem:[%s1 + $0x64] sm:$0xf]
    %v94 = vld [vmem:[%s1 + $0x68] sm:$0xf]
    %v95 = vld [vmem:[%s1 + $0x6c] sm:$0xf]
    %v96 = vld [vmem:[%s1 + $0x70] sm:$0xf]
    %v97 = vld [vmem:[%s1 + $0x74] sm:$0xf]
    %v98 = vld [vmem:[%s1 + $0x78] sm:$0xf]
    %v99 = vld [vmem:[%s1 + $0x7c] sm:$0xf]
    %v100 = vld [vmem:[%s1 + $0x80] sm:$0xf]
    %v101 = vld [vmem:[%s1 + $0x84] sm:$0xf]
    %v102 = vld [vmem:[%s1 + $0x88] sm:$0xf]
    %v103 = vld [vmem:[%s1 + $0x8c] sm:$0xf]
    %v104 = vld [vmem:[%s1 + $0x90] sm:$0xf]
    %v105 = vld [vmem:[%s1 + $0x94] sm:$0xf]
    %v106 = vld [vmem:[%s1 + $0x98] sm:$0xf]
    %v107 = vld [vmem:[%s1 + $0x9c] sm:$0xf]
    %v108 = vld [vmem:[%s1 + $0xa0] sm:$0xf]
    %v109 = vld [vmem:[%s1 + $0xa4] sm:$0xf]
    %v110 = vld [vmem:[%s1 + $0xa8] sm:$0xf]
    %v111 = vld [vmem:[%s1 + $0xac] sm:$0xf]
    %v112 = vld [vmem:[%s1 + $0xb0] sm:$0xf]
    %v113 = vld [vmem:[%s1 + $0xb4] sm:$0xf]
    %v114 = vld [vmem:[%s1 + $0xb8] sm:$0xf]
    %v115 = vld [vmem:[%s1 + $0xbc] sm:$0xf]
    %v116 = vld [vmem:[%s1 + $0xc0] sm:$0xf]
    %v117 = vld [vmem:[%s1 + $0xc4] sm:$0xf]
    %v118 = vld [vmem:[%s1 + $0xc8] sm:$0xf]
    %v119 = vld [vmem:[%s1 + $0xcc] sm:$0xf]
    %v120 = vld [vmem:[%s1 + $0xd0] sm:$0xf]
    %v121 = vld [vmem:[%s1 + $0xd4] sm:$0xf]
    %v122 = vld [vmem:[%s1 + $0xd8] sm:$0xf]
    %v123 = vld [vmem:[%s1 + $0xdc] sm:$0xf]
    %v124 = vld [vmem:[%s1 + $0xe0] sm:$0xf]
    %v125 = vld [vmem:[%s1 + $0xe4] sm:$0xf]
    %v126 = vld [vmem:[%s1 + $0xe8] sm:$0xf]
    %v127 = vld [vmem:[%s1 + $0xec] sm:$0xf]
    %v128 = vld [vmem:[%s1 + $0xf0] sm:$0xf]
    %v129 = vld [vmem:[%s1 + $0xf4] sm:$0xf]
    %v130 = vld [vmem:[%s1 + $0xf8] sm:$0xf]
    %v131 = vld [vmem:[%s1 + $0xfc] sm:$0xf]
    %v132 = vld [vmem:[%s1 + $0x100] sm:$0xf]
    %v133 = vld [vmem:[%s1 + $0x104] sm:$0xf]
    %v134 = vld [vmem:[%s1 + $0x108] sm:$0xf]
    %v135 = vld [vmem:[%s1 + $0x10c] sm:$0xf]
    %v136 = vld [vmem:[%s1 + $0x110] sm:$0xf]
    %v137 = vld [vmem:[%s1 + $0x114] sm:$0xf]
    %v138 = vld [vmem:[%s1 + $0x118] sm:$0xf]
    %v139 = vld [vmem:[%s1 + $0x11c] sm:$0xf]
    %v140 = vld [vmem:[%s1 + $0x120] sm:$0xf]
    %v141 = vld [vmem:[%s1 + $0x124] sm:$0xf]
    %v142 = vld [vmem:[%s1 + $0x128] sm:$0xf]
    %v143 = vld [vmem:[%s1 + $0x12c] sm:$0xf]
    %v144 = vld [vmem:[%s1 + $0x130] sm:$0xf]
    %v145 = vld [vmem:[%s1 + $0x134] sm:$0xf]
    %v146 = vld [vmem:[%s1 + $0x138] sm:$0xf]
    %v147 = vld [vmem:[%s1 + $0x13c] sm:$0xf]
    %v148 = vld [vmem:[%s1 + $0x140] sm:$0xf]
    %v149 = vld [vmem:[%s1 + $0x144] sm:$0xf]
    %v150 = vld [vmem:[%s1 + $0x148] sm:$0xf]
    %v151 = vld [vmem:[%s1 + $0x14c] sm:$0xf]
    %v152 = vld [vmem:[%s1 + $0x150] sm:$0xf]
    %v153 = vld [vmem:[%s1 + $0x154] sm:$0xf]
    %v154 = vld [vmem:[%s1 + $0x158] sm:$0xf]
    %v155 = vld [vmem:[%s1 + $0x15c] sm:$0xf]
    %v156 = vld [vmem:[%s1 + $0x160] sm:$0xf]
    %v157 = vld [vmem:[%s1 + $0x164] sm:$0xf]
    %v158 = vld [vmem:[%s1 + $0x168] sm:$0xf]
    %v159 = vld [vmem:[%s1 + $0x16c] sm:$0xf]
    %v160 = vld [vmem:[%s1 + $0x170] sm:$0xf]
    %v161 = vld [vmem:[%s1 + $0x174] sm:$0xf]
    %v162 = vld [vmem:[%s1 + $0x178] sm:$0xf]
    %v163 = vld [vmem:[%s1 + $0x17c] sm:$0xf]
    %v164 = vld [vmem:[%s1 + $0x180] sm:$0xf]
    %v165 = vld [vmem:[%s1 + $0x184] sm:$0xf]
    %v166 = vld [vmem:[%s1 + $0x188] sm:$0xf]
    %v167 = vld [vmem:[%s1 + $0x18c] sm:$0xf]
    %v168 = vld [vmem:[%s1 + $0x190] sm:$0xf]
    %v169 = vld [vmem:[%s1 + $0x194] sm:$0xf]
    %v170 = vld [vmem:[%s1 + $0x198] sm:$0xf]
    %v171 = vld [vmem:[%s1 + $0x19c] sm:$0xf]
    %v172 = vld [vmem:[%s1 + $0x1a0] sm:$0xf]
    %v173 = vld [vmem:[%s1 + $0x1a4] sm:$0xf]
    %v174 = vld [vmem:[%s1 + $0x1a8] sm:$0xf]
    %v175 = vld [vmem:[%s1 + $0x1ac] sm:$0xf]
    %v176 = vld [vmem:[%s1 + $0x1b0] sm:$0xf]
    %v177 = vld [vmem:[%s1 + $0x1b4] sm:$0xf]
    %v178 = vld [vmem:[%s1 + $0x1b8] sm:$0xf]
    %v179 = vld [vmem:[%s1 + $0x1bc] sm:$0xf]
    %v180 = vld [vmem:[%s1 + $0x1c0] sm:$0xf]
    %v181 = vld [vmem:[%s1 + $0x1c4] sm:$0xf]
    %v182 = vld [vmem:[%s1 + $0x1c8] sm:$0xf]
    %v183 = vld [vmem:[%s1 + $0x1cc] sm:$0xf]
    %v184 = vld [vmem:[%s1 + $0x1d0] sm:$0xf]
    %v185 = vld [vmem:[%s1 + $0x1d4] sm:$0xf]
    %v186 = vld [vmem:[%s1 + $0x1d8] sm:$0xf]
    %v187 = vld [vmem:[%s1 + $0x1dc] sm:$0xf]
    %v188 = vld [vmem:[%s1 + $0x1e0] sm:$0xf]
    %v189 = vld [vmem:[%s1 + $0x1e4] sm:$0xf]
    %v190 = vld [vmem:[%s1 + $0x1e8] sm:$0xf]
    %v191 = vld [vmem:[%s1 + $0x1ec] sm:$0xf]
    %v192 = vld [vmem:[%s1 + $0x1f0] sm:$0xf]
    %v193 = vld [vmem:[%s1 + $0x1f4] sm:$0xf]
    %v194 = vld [vmem:[%s1 + $0x1f8] sm:$0xf]
    %v195 = vld [vmem:[%s1 + $0x1fc] sm:$0xf]
    %v196 = vld [vmem:[%s1 + $0x200] sm:$0xf]
    %v197 = vld [vmem:[%s1 + $0x204] sm:$0xf]
    %v198 = vld [vmem:[%s1 + $0x208] sm:$0xf]
    %v199 = vld [vmem:[%s1 + $0x20c] sm:$0xf]
    %v200 = vld [vmem:[%s1 + $0x210] sm:$0xf]
    %v201 = vld [vmem:[%s1 + $0x214] sm:$0xf]
    %v202 = vld [vmem:[%s1 + $0x218] sm:$0xf]
    %v203 = vld [vmem:[%s1 + $0x21c] sm:$0xf]
    %v204 = vld [vmem:[%s1 + $0x220] sm:$0xf]
    %v205 = vld [vmem:[%s1 + $0x224] sm:$0xf]
    %v206 = vld [vmem:[%s1 + $0x228] sm:$0xf]
    %v207 = vld [vmem:[%s1 + $0x22c] sm:$0xf]
    %v208 = vld [vmem:[%s1 + $0x230] sm:$0xf]
    %v209 = vld [vmem:[%s1 + $0x234] sm:$0xf]
    %v210 = vld [vmem:[%s1 + $0x238] sm:$0xf]
    %v211 = vld [vmem:[%s1 + $0x23c] sm:$0xf]
    %v212 = vld [vmem:[%s1 + $0x240] sm:$0xf]
    %v213 = vld [vmem:[%s1 + $0x244] sm:$0xf]
    %v214 = vld [vmem:[%s1 + $0x248] sm:$0xf]
    %v215 = vld [vmem:[%s1 + $0x24c] sm:$0xf]
    %v216 = vld [vmem:[%s1 + $0x250] sm:$0xf]
    %v217 = vld [vmem:[%s1 + $0x254] sm:$0xf]
    %v218 = vld [vmem:[%s1 + $0x258] sm:$0xf]
    %v219 = vld [vmem:[%s1 + $0x25c] sm:$0xf]
    %v220 = vld [vmem:[%s1 + $0x260] sm:$0xf]
    %v221 = vld [vmem:[%s1 + $0x264] sm:$0xf]
    %v222 = vld [vmem:[%s1 + $0x268] sm:$0xf]
    %v223 = vld [vmem:[%s1 + $0x26c] sm:$0xf]
    %v224 = vld [vmem:[%s1 + $0x270] sm:$0xf]
    %v225 = vld [vmem:[%s1 + $0x274] sm:$0xf]
    %v226 = vld [vmem:[%s1 + $0x278] sm:$0xf]
    %v227 = vld [vmem:[%s1 + $0x27c] sm:$0xf]
    %v228 = vld [vmem:[%s1 + $0x280] sm:$0xf]
    %v229 = vld [vmem:[%s1 + $0x284] sm:$0xf]
    %v230 = vld [vmem:[%s1 + $0x288] sm:$0xf]
    %v231 = vld [vmem:[%s1 + $0x28c] sm:$0xf]
    %v232 = vld [vmem:[%s1 + $0x290] sm:$0xf]
    %v233 = vld [vmem:[%s1 + $0x294] sm:$0xf]
    %v234 = vld [vmem:[%s1 + $0x298] sm:$0xf]
    %v235 = vld [vmem:[%s1 + $0x29c] sm:$0xf]
    %v236 = vld [vmem:[%s1 + $0x2a0] sm:$0xf]
    %v237 = vld [vmem:[%s1 + $0x2a4] sm:$0xf]
    %v238 = vld [vmem:[%s1 + $0x2a8] sm:$0xf]
    %v239 = vld [vmem:[%s1 + $0x2ac] sm:$0xf]
    %v240 = vld [vmem:[%s1 + $0x2b0] sm:$0xf]
    %v241 = vld [vmem:[%s1 + $0x2b4] sm:$0xf]
    %v242 = vld [vmem:[%s1 + $0x2b8] sm:$0xf]
    %v243 = vld [vmem:[%s1 + $0x2bc] sm:$0xf]
    %v244 = vld [vmem:[%s1 + $0x2c0] sm:$0xf]
    %v245 = vld [vmem:[%s1 + $0x2c4] sm:$0xf]
    %v246 = vld [vmem:[%s1 + $0x2c8] sm:$0xf]
    %v247 = vld [vmem:[%s1 + $0x2cc] sm:$0xf]
    %v248 = vld [vmem:[%s1 + $0x2d0] sm:$0xf]
    %v249 = vld [vmem:[%s1 + $0x2d4] sm:$0xf]
    %v250 = vld [vmem:[%s1 + $0x2d8] sm:$0xf]
    %v251 = vld [vmem:[%s1 + $0x2dc] sm:$0xf]
    %v252 = vld [vmem:[%s1 + $0x2e0] sm:$0xf]
    %v253 = vld [vmem:[%s1 + $0x2e4] sm:$0xf]
    %v254 = vld [vmem:[%s1 + $0x2e8] sm:$0xf]
    %v255 = vld [vmem:[%s1 + $0x2ec] sm:$0xf]
    %v256 = vld [vmem:[%s1 + $0x2f0] sm:$0xf]
    %v257 = vld [vmem:[%s1 + $0x2f4] sm:$0xf]
    %v258 = vld [vmem:[%s1 + $0x2f8] sm:$0xf]
    %v259 = vld [vmem:[%s1 + $0x2fc] sm:$0xf]
    %v260 = vld [vmem:[%s1 + $0x300] sm:$0xf]
    %v261 = vld [vmem:[%s1 + $0x304] sm:$0xf]
    %v262 = vld [vmem:[%s1 + $0x308] sm:$0xf]
    %v263 = vld [vmem:[%s1 + $0x30c] sm:$0xf]
    %v264 = vld [vmem:[%s2] sm:$0x1]
    %v266 = vperm.slane %v264, 0
    %v464 = vunpack.c.l.b16 %v68
    %v465 = vunpack.c.l.b16 %v69
    %v466 = vunpack.c.l.b16 %v70
    %v467 = vunpack.c.l.b16 %v71
    %v468 = vunpack.c.l.b16 %v72
    %v469 = vunpack.c.l.b16 %v73
    %v470 = vunpack.c.l.b16 %v74
    %v471 = vunpack.c.l.b16 %v75
    %v472 = vunpack.c.l.b16 %v76
    %v473 = vunpack.c.l.b16 %v77
    %v474 = vunpack.c.l.b16 %v78
    %v475 = vunpack.c.l.b16 %v79
    %v476 = vunpack.c.l.b16 %v80
    %v477 = vunpack.c.l.b16 %v81
    %v478 = vunpack.c.l.b16 %v82
    %v479 = vunpack.c.l.b16 %v83
    %v480 = vunpack.c.l.b16 %v84
    %v481 = vunpack.c.l.b16 %v85
    %v482 = vunpack.c.l.b16 %v86
    %v483 = vunpack.c.l.b16 %v87
    %v484 = vunpack.c.l.b16 %v88
    %v485 = vunpack.c.l.b16 %v89
    %v486 = vunpack.c.l.b16 %v90
    %v487 = vunpack.c.l.b16 %v91
    %v488 = vunpack.c.l.b16 %v92
    %v489 = vunpack.c.l.b16 %v93
    %v490 = vunpack.c.l.b16 %v94
    %v491 = vunpack.c.l.b16 %v95
    %v492 = vunpack.c.l.b16 %v96
    %v493 = vunpack.c.l.b16 %v97
    %v494 = vunpack.c.l.b16 %v98
    %v495 = vunpack.c.l.b16 %v99
    %v496 = vunpack.c.l.b16 %v100
    %v497 = vunpack.c.l.b16 %v101
    %v498 = vunpack.c.l.b16 %v102
    %v499 = vunpack.c.l.b16 %v103
    %v500 = vunpack.c.l.b16 %v104
    %v501 = vunpack.c.l.b16 %v105
    %v502 = vunpack.c.l.b16 %v106
    %v503 = vunpack.c.l.b16 %v107
    %v504 = vunpack.c.l.b16 %v108
    %v505 = vunpack.c.l.b16 %v109
    %v506 = vunpack.c.l.b16 %v110
    %v507 = vunpack.c.l.b16 %v111
    %v508 = vunpack.c.l.b16 %v112
    %v509 = vunpack.c.l.b16 %v113
    %v510 = vunpack.c.l.b16 %v114
    %v511 = vunpack.c.l.b16 %v115
    %v512 = vunpack.c.l.b16 %v116
    %v513 = vunpack.c.l.b16 %v117
    %v514 = vunpack.c.l.b16 %v118
    %v515 = vunpack.c.l.b16 %v119
    %v516 = vunpack.c.l.b16 %v120
    %v517 = vunpack.c.l.b16 %v121
    %v518 = vunpack.c.l.b16 %v122
    %v519 = vunpack.c.l.b16 %v123
    %v520 = vunpack.c.l.b16 %v124
    %v521 = vunpack.c.l.b16 %v125
    %v522 = vunpack.c.l.b16 %v126
    %v523 = vunpack.c.l.b16 %v127
    %v524 = vunpack.c.l.b16 %v128
    %v525 = vunpack.c.l.b16 %v129
    %v526 = vunpack.c.l.b16 %v130
    %v527 = vunpack.c.l.b16 %v131
    %v528 = vunpack.c.l.b16 %v132
    %v529 = vunpack.c.l.b16 %v133
    %v530 = vunpack.c.l.b16 %v134
    %v531 = vunpack.c.l.b16 %v135
    %v532 = vunpack.c.l.b16 %v136
    %v533 = vunpack.c.l.b16 %v137
    %v534 = vunpack.c.l.b16 %v138
    %v535 = vunpack.c.l.b16 %v139
    %v536 = vunpack.c.l.b16 %v140
    %v537 = vunpack.c.l.b16 %v141
    %v538 = vunpack.c.l.b16 %v142
    %v539 = vunpack.c.l.b16 %v143
    %v540 = vunpack.c.l.b16 %v144
    %v541 = vunpack.c.l.b16 %v145
    %v542 = vunpack.c.l.b16 %v146
    %v543 = vunpack.c.l.b16 %v147
    %v544 = vunpack.c.l.b16 %v148
    %v545 = vunpack.c.l.b16 %v149
    %v546 = vunpack.c.l.b16 %v150
    %v547 = vunpack.c.l.b16 %v151
    %v548 = vunpack.c.l.b16 %v152
    %v549 = vunpack.c.l.b16 %v153
    %v550 = vunpack.c.l.b16 %v154
    %v551 = vunpack.c.l.b16 %v155
    %v552 = vunpack.c.l.b16 %v156
    %v553 = vunpack.c.l.b16 %v157
    %v554 = vunpack.c.l.b16 %v158
    %v555 = vunpack.c.l.b16 %v159
    %v556 = vunpack.c.l.b16 %v160
    %v557 = vunpack.c.l.b16 %v161
    %v558 = vunpack.c.l.b16 %v162
    %v559 = vunpack.c.l.b16 %v163
    %v560 = vunpack.c.l.b16 %v164
    %v561 = vunpack.c.l.b16 %v165
    %v562 = vunpack.c.l.b16 %v166
    %v563 = vunpack.c.l.b16 %v167
    %v564 = vunpack.c.l.b16 %v168
    %v565 = vunpack.c.l.b16 %v169
    %v566 = vunpack.c.l.b16 %v170
    %v567 = vunpack.c.l.b16 %v171
    %v568 = vunpack.c.l.b16 %v172
    %v569 = vunpack.c.l.b16 %v173
    %v570 = vunpack.c.l.b16 %v174
    %v571 = vunpack.c.l.b16 %v175
    %v572 = vunpack.c.l.b16 %v176
    %v573 = vunpack.c.l.b16 %v177
    %v574 = vunpack.c.l.b16 %v178
    %v575 = vunpack.c.l.b16 %v179
    %v576 = vunpack.c.l.b16 %v180
    %v577 = vunpack.c.l.b16 %v181
    %v578 = vunpack.c.l.b16 %v182
    %v579 = vunpack.c.l.b16 %v183
    %v580 = vunpack.c.l.b16 %v184
    %v581 = vunpack.c.l.b16 %v185
    %v582 = vunpack.c.l.b16 %v186
    %v583 = vunpack.c.l.b16 %v187
    %v584 = vunpack.c.l.b16 %v188
    %v585 = vunpack.c.l.b16 %v189
    %v586 = vunpack.c.l.b16 %v190
    %v587 = vunpack.c.l.b16 %v191
    %v588 = vunpack.c.l.b16 %v192
    %v589 = vunpack.c.l.b16 %v193
    %v590 = vunpack.c.l.b16 %v194
    %v591 = vunpack.c.l.b16 %v195
    %v592 = vunpack.c.l.b16 %v196
    %v593 = vunpack.c.l.b16 %v197
    %v594 = vunpack.c.l.b16 %v198
    %v595 = vunpack.c.l.b16 %v199
    %v596 = vunpack.c.l.b16 %v200
    %v597 = vunpack.c.l.b16 %v201
    %v598 = vunpack.c.l.b16 %v202
    %v599 = vunpack.c.l.b16 %v203
    %v600 = vunpack.c.l.b16 %v204
    %v601 = vunpack.c.l.b16 %v205
    %v602 = vunpack.c.l.b16 %v206
    %v603 = vunpack.c.l.b16 %v207
    %v604 = vunpack.c.l.b16 %v208
    %v605 = vunpack.c.l.b16 %v209
    %v606 = vunpack.c.l.b16 %v210
    %v607 = vunpack.c.l.b16 %v211
    %v608 = vunpack.c.l.b16 %v212
    %v609 = vunpack.c.l.b16 %v213
    %v610 = vunpack.c.l.b16 %v214
    %v611 = vunpack.c.l.b16 %v215
    %v612 = vunpack.c.l.b16 %v216
    %v613 = vunpack.c.l.b16 %v217
    %v614 = vunpack.c.l.b16 %v218
    %v615 = vunpack.c.l.b16 %v219
    %v616 = vunpack.c.l.b16 %v220
    %v617 = vunpack.c.l.b16 %v221
    %v618 = vunpack.c.l.b16 %v222
    %v619 = vunpack.c.l.b16 %v223
    %v620 = vunpack.c.l.b16 %v224
    %v621 = vunpack.c.l.b16 %v225
    %v622 = vunpack.c.l.b16 %v226
    %v623 = vunpack.c.l.b16 %v227
    %v624 = vunpack.c.l.b16 %v228
    %v625 = vunpack.c.l.b16 %v229
    %v626 = vunpack.c.l.b16 %v230
    %v627 = vunpack.c.l.b16 %v231
    %v628 = vunpack.c.l.b16 %v232
    %v629 = vunpack.c.l.b16 %v233
    %v630 = vunpack.c.l.b16 %v234
    %v631 = vunpack.c.l.b16 %v235
    %v632 = vunpack.c.l.b16 %v236
    %v633 = vunpack.c.l.b16 %v237
    %v634 = vunpack.c.l.b16 %v238
    %v635 = vunpack.c.l.b16 %v239
    %v636 = vunpack.c.l.b16 %v240
    %v637 = vunpack.c.l.b16 %v241
    %v638 = vunpack.c.l.b16 %v242
    %v639 = vunpack.c.l.b16 %v243
    %v640 = vunpack.c.l.b16 %v244
    %v641 = vunpack.c.l.b16 %v245
    %v642 = vunpack.c.l.b16 %v246
    %v643 = vunpack.c.l.b16 %v247
    %v644 = vunpack.c.l.b16 %v248
    %v645 = vunpack.c.l.b16 %v249
    %v646 = vunpack.c.l.b16 %v250
    %v647 = vunpack.c.l.b16 %v251
    %v648 = vunpack.c.l.b16 %v252
    %v649 = vunpack.c.l.b16 %v253
    %v650 = vunpack.c.l.b16 %v254
    %v651 = vunpack.c.l.b16 %v255
    %v652 = vunpack.c.l.b16 %v256
    %v653 = vunpack.c.l.b16 %v257
    %v654 = vunpack.c.l.b16 %v258
    %v655 = vunpack.c.l.b16 %v259
    %v656 = vunpack.c.l.b16 %v260
    %v657 = vunpack.c.l.b16 %v261
    %v658 = vunpack.c.l.b16 %v262
    %v659 = vunpack.c.l.b16 %v263
    %v660 = vpack.c.b16 %v465, %v464
    %v661 = vpack.c.b16 %v467, %v466
    %v662 = vpack.c.b16 %v469, %v468
    %v663 = vpack.c.b16 %v471, %v470
    %v664 = vpack.c.b16 %v473, %v472
    %v665 = vpack.c.b16 %v475, %v474
    %v666 = vpack.c.b16 %v477, %v476
    %v667 = vpack.c.b16 %v479, %v478
    %v668 = vpack.c.b16 %v481, %v480
    %v669 = vpack.c.b16 %v483, %v482
    %v670 = vpack.c.b16 %v485, %v484
    %v671 = vpack.c.b16 %v487, %v486
    %v672 = vpack.c.b16 %v489, %v488
    %v673 = vpack.c.b16 %v491, %v490
    %v674 = vpack.c.b16 %v493, %v492
    %v675 = vpack.c.b16 %v495, %v494
    %v676 = vpack.c.b16 %v497, %v496
    %v677 = vpack.c.b16 %v499, %v498
    %v678 = vpack.c.b16 %v501, %v500
    %v679 = vpack.c.b16 %v503, %v502
    %v680 = vpack.c.b16 %v505, %v504
    %v681 = vpack.c.b16 %v507, %v506
    %v682 = vpack.c.b16 %v509, %v508
    %v683 = vpack.c.b16 %v511, %v510
    %v684 = vpack.c.b16 %v513, %v512
    %v685 = vpack.c.b16 %v515, %v514
    %v686 = vpack.c.b16 %v517, %v516
    %v687 = vpack.c.b16 %v519, %v518
    %v688 = vpack.c.b16 %v521, %v520
    %v689 = vpack.c.b16 %v523, %v522
    %v690 = vpack.c.b16 %v525, %v524
    %v691 = vpack.c.b16 %v527, %v526
    %v692 = vpack.c.b16 %v529, %v528
    %v693 = vpack.c.b16 %v531, %v530
    %v694 = vpack.c.b16 %v533, %v532
    %v695 = vpack.c.b16 %v535, %v534
    %v696 = vpack.c.b16 %v537, %v536
    %v697 = vpack.c.b16 %v539, %v538
    %v698 = vpack.c.b16 %v541, %v540
    %v699 = vpack.c.b16 %v543, %v542
    %v700 = vpack.c.b16 %v545, %v544
    %v701 = vpack.c.b16 %v547, %v546
    %v702 = vpack.c.b16 %v549, %v548
    %v703 = vpack.c.b16 %v551, %v550
    %v704 = vpack.c.b16 %v553, %v552
    %v705 = vpack.c.b16 %v555, %v554
    %v706 = vpack.c.b16 %v557, %v556
    %v707 = vpack.c.b16 %v559, %v558
    %v708 = vpack.c.b16 %v561, %v560
    %v709 = vpack.c.b16 %v563, %v562
    %v710 = vpack.c.b16 %v565, %v564
    %v711 = vpack.c.b16 %v567, %v566
    %v712 = vpack.c.b16 %v569, %v568
    %v713 = vpack.c.b16 %v571, %v570
    %v714 = vpack.c.b16 %v573, %v572
    %v715 = vpack.c.b16 %v575, %v574
    %v716 = vpack.c.b16 %v577, %v576
    %v717 = vpack.c.b16 %v579, %v578
    %v718 = vpack.c.b16 %v581, %v580
    %v719 = vpack.c.b16 %v583, %v582
    %v720 = vpack.c.b16 %v585, %v584
    %v721 = vpack.c.b16 %v587, %v586
    %v722 = vpack.c.b16 %v589, %v588
    %v723 = vpack.c.b16 %v591, %v590
    %v724 = vpack.c.b16 %v593, %v592
    %v725 = vpack.c.b16 %v595, %v594
    %v726 = vpack.c.b16 %v597, %v596
    %v727 = vpack.c.b16 %v599, %v598
    %v728 = vpack.c.b16 %v601, %v600
    %v729 = vpack.c.b16 %v603, %v602
    %v730 = vpack.c.b16 %v605, %v604
    %v731 = vpack.c.b16 %v607, %v606
    %v732 = vpack.c.b16 %v609, %v608
    %v733 = vpack.c.b16 %v611, %v610
    %v734 = vpack.c.b16 %v613, %v612
    %v735 = vpack.c.b16 %v615, %v614
    %v736 = vpack.c.b16 %v617, %v616
    %v737 = vpack.c.b16 %v619, %v618
    %v738 = vpack.c.b16 %v621, %v620
    %v739 = vpack.c.b16 %v623, %v622
    %v740 = vpack.c.b16 %v625, %v624
    %v741 = vpack.c.b16 %v627, %v626
    %v742 = vpack.c.b16 %v629, %v628
    %v743 = vpack.c.b16 %v631, %v630
    %v744 = vpack.c.b16 %v633, %v632
    %v745 = vpack.c.b16 %v635, %v634
    %v746 = vpack.c.b16 %v637, %v636
    %v747 = vpack.c.b16 %v639, %v638
    %v748 = vpack.c.b16 %v641, %v640
    %v749 = vpack.c.b16 %v643, %v642
    %v750 = vpack.c.b16 %v645, %v644
    %v751 = vpack.c.b16 %v647, %v646
    %v752 = vpack.c.b16 %v649, %v648
    %v753 = vpack.c.b16 %v651, %v650
    %v754 = vpack.c.b16 %v653, %v652
    %v755 = vpack.c.b16 %v655, %v654
    %v756 = vpack.c.b16 %v657, %v656
    %v757 = vpack.c.b16 %v659, %v658
    %vm856 = vcmask 261120
    %v858 = vsel %vm856, %v67, 0
    %860 = vmatpush.bf16.msra.mxu0 %v667
    %861 = vmatpush.bf16.msra.mxu0 %v666
    %862 = vmatpush.bf16.msra.mxu0 %v665
    %863 = vmatpush.bf16.msra.mxu0 %v664
    %864 = vmatpush.bf16.msra.mxu0 %v663
    %865 = vmatpush.bf16.msra.mxu0 %v662
    %866 = vmatpush.bf16.msra.mxu0 %v661
    %867 = vmatpush.bf16.msra.mxu0 %v660
    %868 = vmatmul.bf16.gmra.mxu0 %v55
    %v869 = vpop.f32.mrf.mxu0
    %v870 = vadd.f32 %v266, %v869
    %v871 = vpop.f32.mrf.mxu0
    %872 = vdwg.mxu0
    %873 = vmatpush.bf16.msra.mxu0 %v675
    %874 = vmatpush.bf16.msra.mxu0 %v674
    %875 = vmatpush.bf16.msra.mxu0 %v673
    %876 = vmatpush.bf16.msra.mxu0 %v672
    %877 = vmatpush.bf16.msra.mxu0 %v671
    %878 = vmatpush.bf16.msra.mxu0 %v670
    %879 = vmatpush.bf16.msra.mxu0 %v669
    %880 = vmatpush.bf16.msra.mxu0 %v668
    %881 = vmatmul.bf16.gmra.mxu0 %v56
    %v882 = vpop.f32.mrf.mxu0
    %v883 = vadd.f32 %v870, %v882
    %v884 = vpop.f32.mrf.mxu0
    %885 = vdwg.mxu0
    %886 = vmatpush.bf16.msra.mxu0 %v683
    %887 = vmatpush.bf16.msra.mxu0 %v682
    %888 = vmatpush.bf16.msra.mxu0 %v681
    %889 = vmatpush.bf16.msra.mxu0 %v680
    %890 = vmatpush.bf16.msra.mxu0 %v679
    %891 = vmatpush.bf16.msra.mxu0 %v678
    %892 = vmatpush.bf16.msra.mxu0 %v677
    %893 = vmatpush.bf16.msra.mxu0 %v676
    %894 = vmatmul.bf16.gmra.mxu0 %v57
    %v895 = vpop.f32.mrf.mxu0
    %v896 = vadd.f32 %v883, %v895
    %v897 = vpop.f32.mrf.mxu0
    %898 = vdwg.mxu0
    %899 = vmatpush.bf16.msra.mxu0 %v691
    %900 = vmatpush.bf16.msra.mxu0 %v690
    %901 = vmatpush.bf16.msra.mxu0 %v689
    %902 = vmatpush.bf16.msra.mxu0 %v688
    %903 = vmatpush.bf16.msra.mxu0 %v687
    %904 = vmatpush.bf16.msra.mxu0 %v686
    %905 = vmatpush.bf16.msra.mxu0 %v685
    %906 = vmatpush.bf16.msra.mxu0 %v684
    %907 = vmatmul.bf16.gmra.mxu0 %v58
    %v908 = vpop.f32.mrf.mxu0
    %v909 = vadd.f32 %v896, %v908
    %v910 = vpop.f32.mrf.mxu0
    %911 = vdwg.mxu0
    %912 = vmatpush.bf16.msra.mxu0 %v699
    %913 = vmatpush.bf16.msra.mxu0 %v698
    %914 = vmatpush.bf16.msra.mxu0 %v697
    %915 = vmatpush.bf16.msra.mxu0 %v696
    %916 = vmatpush.bf16.msra.mxu0 %v695
    %917 = vmatpush.bf16.msra.mxu0 %v694
    %918 = vmatpush.bf16.msra.mxu0 %v693
    %919 = vmatpush.bf16.msra.mxu0 %v692
    %920 = vmatmul.bf16.gmra.mxu0 %v59
    %v921 = vpop.f32.mrf.mxu0
    %v922 = vadd.f32 %v909, %v921
    %v923 = vpop.f32.mrf.mxu0
    %924 = vdwg.mxu0
    %925 = vmatpush.bf16.msra.mxu0 %v707
    %926 = vmatpush.bf16.msra.mxu0 %v706
    %927 = vmatpush.bf16.msra.mxu0 %v705
    %928 = vmatpush.bf16.msra.mxu0 %v704
    %929 = vmatpush.bf16.msra.mxu0 %v703
    %930 = vmatpush.bf16.msra.mxu0 %v702
    %931 = vmatpush.bf16.msra.mxu0 %v701
    %932 = vmatpush.bf16.msra.mxu0 %v700
    %933 = vmatmul.bf16.gmra.mxu0 %v60
    %v934 = vpop.f32.mrf.mxu0
    %v935 = vadd.f32 %v922, %v934
    %v936 = vpop.f32.mrf.mxu0
    %937 = vdwg.mxu0
    %938 = vmatpush.bf16.msra.mxu0 %v715
    %939 = vmatpush.bf16.msra.mxu0 %v714
    %940 = vmatpush.bf16.msra.mxu0 %v713
    %941 = vmatpush.bf16.msra.mxu0 %v712
    %942 = vmatpush.bf16.msra.mxu0 %v711
    %943 = vmatpush.bf16.msra.mxu0 %v710
    %944 = vmatpush.bf16.msra.mxu0 %v709
    %945 = vmatpush.bf16.msra.mxu0 %v708
    %946 = vmatmul.bf16.gmra.mxu0 %v61
    %v947 = vpop.f32.mrf.mxu0
    %v948 = vadd.f32 %v935, %v947
    %v949 = vpop.f32.mrf.mxu0
    %950 = vdwg.mxu0
    %951 = vmatpush.bf16.msra.mxu0 %v723
    %952 = vmatpush.bf16.msra.mxu0 %v722
    %953 = vmatpush.bf16.msra.mxu0 %v721
    %954 = vmatpush.bf16.msra.mxu0 %v720
    %955 = vmatpush.bf16.msra.mxu0 %v719
    %956 = vmatpush.bf16.msra.mxu0 %v718
    %957 = vmatpush.bf16.msra.mxu0 %v717
    %958 = vmatpush.bf16.msra.mxu0 %v716
    %959 = vmatmul.bf16.gmra.mxu0 %v62
    %v960 = vpop.f32.mrf.mxu0
    %v961 = vadd.f32 %v948, %v960
    %v962 = vpop.f32.mrf.mxu0
    %963 = vdwg.mxu0
    %964 = vmatpush.bf16.msra.mxu0 %v731
    %965 = vmatpush.bf16.msra.mxu0 %v730
    %966 = vmatpush.bf16.msra.mxu0 %v729
    %967 = vmatpush.bf16.msra.mxu0 %v728
    %968 = vmatpush.bf16.msra.mxu0 %v727
    %969 = vmatpush.bf16.msra.mxu0 %v726
    %970 = vmatpush.bf16.msra.mxu0 %v725
    %971 = vmatpush.bf16.msra.mxu0 %v724
    %972 = vmatmul.bf16.gmra.mxu0 %v63
    %v973 = vpop.f32.mrf.mxu0
    %v974 = vadd.f32 %v961, %v973
    %v975 = vpop.f32.mrf.mxu0
    %976 = vdwg.mxu0
    %977 = vmatpush.bf16.msra.mxu0 %v739
    %978 = vmatpush.bf16.msra.mxu0 %v738
    %979 = vmatpush.bf16.msra.mxu0 %v737
    %980 = vmatpush.bf16.msra.mxu0 %v736
    %981 = vmatpush.bf16.msra.mxu0 %v735
    %982 = vmatpush.bf16.msra.mxu0 %v734
    %983 = vmatpush.bf16.msra.mxu0 %v733
    %984 = vmatpush.bf16.msra.mxu0 %v732
    %985 = vmatmul.bf16.gmra.mxu0 %v64
    %v986 = vpop.f32.mrf.mxu0
    %v987 = vadd.f32 %v974, %v986
    %v988 = vpop.f32.mrf.mxu0
    %989 = vdwg.mxu0
    %990 = vmatpush.bf16.msra.mxu0 %v747
    %991 = vmatpush.bf16.msra.mxu0 %v746
    %992 = vmatpush.bf16.msra.mxu0 %v745
    %993 = vmatpush.bf16.msra.mxu0 %v744
    %994 = vmatpush.bf16.msra.mxu0 %v743
    %995 = vmatpush.bf16.msra.mxu0 %v742
    %996 = vmatpush.bf16.msra.mxu0 %v741
    %997 = vmatpush.bf16.msra.mxu0 %v740
    %998 = vmatmul.bf16.gmra.mxu0 %v65
    %v999 = vpop.f32.mrf.mxu0
    %v1000 = vadd.f32 %v987, %v999
    %v1001 = vpop.f32.mrf.mxu0
    %1002 = vdwg.mxu0
    %1003 = vmatpush.bf16.msra.mxu0 %v755
    %1004 = vmatpush.bf16.msra.mxu0 %v754
    %1005 = vmatpush.bf16.msra.mxu0 %v753
    %1006 = vmatpush.bf16.msra.mxu0 %v752
    %1007 = vmatpush.bf16.msra.mxu0 %v751
    %1008 = vmatpush.bf16.msra.mxu0 %v750
    %1009 = vmatpush.bf16.msra.mxu0 %v749
    %1010 = vmatpush.bf16.msra.mxu0 %v748
    %1011 = vmatmul.bf16.gmra.mxu0 %v66
    %v1012 = vpop.f32.mrf.mxu0
    %v1013 = vadd.f32 %v1000, %v1012
    %v1014 = vpop.f32.mrf.mxu0
    %1015 = vdwg.mxu0
    %1016 = vmatpush.bf16.msra.mxu0 0
    %1017 = vmatpush.bf16.msra.mxu0 0
    %1018 = vmatpush.bf16.msra.mxu0 0
    %1019 = vmatpush.bf16.msra.mxu0 0
    %1020 = vmatpush.bf16.msra.mxu0 0
    %1021 = vmatpush.bf16.msra.mxu0 0
    %1022 = vmatpush.bf16.msra.mxu0 %v757
    %1023 = vmatpush.bf16.msra.mxu0 %v756
    %1024 = vmatmul.bf16.gmra.mxu0 %v858
    %v1025 = vpop.f32.mrf.mxu0
    %v1026 = vadd.f32 %v1013, %v1025
    %v1027 = vpop.f32.mrf.mxu0
    %1028 = vdwg.mxu0
    %1029 = vst [vmem:[#allocation2] sm:$0x3] %v1026
    // Predicated region
    $region14: #{cnn_forward.3} parent=1 // pred_check
      _
    $region15: #{cnn_forward.3} parent=1 // pred_check_branch
      %1031 = sbr.rel (0) target = $region17
    $region16: #{cnn_forward.3} parent=1 // pred_region
      %1033 = vsyncadd [#allocation3], 0
      %s1035 = sshll.u32 [#allocation2], 4
      %s1036 = int_to_ptr.vmem [resolvable:$true] %s1035
      %s1037 = sshll.u32 %s3, 4
      %s1038 = int_to_ptr.hbm [resolvable:$true] %s1037
      %1040 = dma.vmem_to_hbm [thread:$0]  %s1036, 32, %s1038, [#allocation3]
    $region17: #{cnn_forward.3} parent=1 // pred_fallthru
      _
    // Predicated region
    $region18: #{cnn_forward.3} parent=1 // pred_check
      _
    $region19: #{cnn_forward.3} parent=1 // pred_check_branch
      %1042 = sbr.rel (0) target = $region21
    $region20: #{cnn_forward.3} parent=1 // pred_region
      %1044 = dma.done [#allocation3], 32
    $region21: #{cnn_forward.3} parent=1 // pred_fallthru
      _
    %1045 = vsyncpa [#allocation3], 1

// kernel: cnn_forward.2
$region0: #{cnn_forward.2}
  #allocation0 [shape = 'u32[]', space=smem, size = 0x4, offset = 0x4, fixed_abs, tag = 'smem constant byte address 0x4 - core index']
  #allocation1 [shape = 'u32[72,128]{1,0:T(1,128)}', space=vmem, size = 0x9000, scoped, tag = 'internal scratch']
  #allocation2 [shape = 'f32[2,2,9,288]{3,2,1,0:T(8,128)}', space=vmem, size = 0x18000, scoped, tag = 'scratch operand']
  %s0 = inlined_call_operand.vmem [shape: f32[2,4,8,32], index: 0, kind: input, shape index: {}]
  %s1 = inlined_call_operand.vmem [shape: bf16[160,448], index: 1, kind: input, shape index: {}]
  %s2 = inlined_call_operand.vmem [shape: f32[1,224], index: 2, kind: input, shape index: {}]
  %s3 = inlined_call_operand.vmem [shape: bf16[1440,448], index: 3, kind: input, shape index: {}]
  %s4 = inlined_call_operand.vmem [shape: f32[1,224], index: 4, kind: input, shape index: {}]
  %s5 = inlined_call_operand.vmem [shape: f32[2,7,224], index: 5, kind: output, shape index: {}]
  %s6 = sld [smem:[#allocation0]]
  $region30: #{cnn_forward.2} parent=0
    _
  %s8 = ssub.s32 1, %s6
  %s9 = scalar_select 0, %s8, %s6
  // Predicated region
  $region2: #{cnn_forward.2} parent=0 // pred_check
    _
  $region3: #{cnn_forward.2} parent=0 // pred_check_branch
    %11 = sbr.rel (0) target = $region5
  $region4: #{cnn_forward.2} parent=0 // pred_region
    _
  $region5: #{cnn_forward.2} parent=0 // pred_fallthru
    _
  // Predicated region
  $region6: #{cnn_forward.2} parent=0 // pred_check
    _
  $region7: #{cnn_forward.2} parent=0 // pred_check_branch
    %13 = sbr.rel (0) target = $region9
  $region8: #{cnn_forward.2} parent=0 // pred_region
    _
  $region9: #{cnn_forward.2} parent=0 // pred_fallthru
    _
  // Predicated region
  $region10: #{cnn_forward.2} parent=0 // pred_check
    _
  $region11: #{cnn_forward.2} parent=0 // pred_check_branch
    %15 = sbr.rel (0) target = $region13
  $region12: #{cnn_forward.2} parent=0 // pred_region
    _
  $region13: #{cnn_forward.2} parent=0 // pred_fallthru
    _
  // Predicated region
  $region14: #{cnn_forward.2} parent=0 // pred_check
    _
  $region15: #{cnn_forward.2} parent=0 // pred_check_branch
    %17 = sbr.rel (0) target = $region17
  $region16: #{cnn_forward.2} parent=0 // pred_region
    _
  $region17: #{cnn_forward.2} parent=0 // pred_fallthru
    _
  // Predicated region
  $region18: #{cnn_forward.2} parent=0 // pred_check
    _
  $region19: #{cnn_forward.2} parent=0 // pred_check_branch
    %19 = sbr.rel (0) target = $region21
  $region20: #{cnn_forward.2} parent=0 // pred_region
    _
  $region21: #{cnn_forward.2} parent=0 // pred_fallthru
    _
  %21 = vst [vmem:[#allocation2] sm:$0xff] 0.0
  %22 = vst [vmem:[#allocation2 + $0x8] sm:$0xff] 0.0
  %vm23 = vcmask 261120
  %24 = vst.msk [vmem:[#allocation2 + $0x10] sm:$0xff] %vm23, 0.0
  %25 = vst [vmem:[#allocation2 + $0x18] sm:$0x1] 0.0
  %26 = vst [vmem:[#allocation2 + $0x20] sm:$0x1] 0.0
  %vm27 = vcmask 253952
  %28 = vst.msk [vmem:[#allocation2 + $0x28] sm:$0x1] %vm27, 0.0
  %29 = vst [vmem:[#allocation2 + $0x30] sm:$0xff] 0.0
  %30 = vst [vmem:[#allocation2 + $0x38] sm:$0xff] 0.0
  %31 = vst.msk [vmem:[#allocation2 + $0x40] sm:$0xff] %vm23, 0.0
  %32 = vst [vmem:[#allocation2 + $0x48] sm:$0x1] 0.0
  %33 = vst [vmem:[#allocation2 + $0x50] sm:$0x1] 0.0
  %34 = vst.msk [vmem:[#allocation2 + $0x58] sm:$0x1] %vm27, 0.0
  %35 = vst [vmem:[#allocation2 + $0x60] sm:$0xff] 0.0
  %36 = vst [vmem:[#allocation2 + $0x68] sm:$0xff] 0.0
  %37 = vst.msk [vmem:[#allocation2 + $0x70] sm:$0xff] %vm23, 0.0
  %38 = vst [vmem:[#allocation2 + $0x78] sm:$0x1] 0.0
  %39 = vst [vmem:[#allocation2 + $0x80] sm:$0x1] 0.0
  %40 = vst.msk [vmem:[#allocation2 + $0x88] sm:$0x1] %vm27, 0.0
  %41 = vst [vmem:[#allocation2 + $0x90] sm:$0xff] 0.0
  %42 = vst [vmem:[#allocation2 + $0x98] sm:$0xff] 0.0
  %43 = vst.msk [vmem:[#allocation2 + $0xa0] sm:$0xff] %vm23, 0.0
  %44 = vst [vmem:[#allocation2 + $0xa8] sm:$0x1] 0.0
  %45 = vst [vmem:[#allocation2 + $0xb0] sm:$0x1] 0.0
  %46 = vst.msk [vmem:[#allocation2 + $0xb8] sm:$0x1] %vm27, 0.0
  %v47 = vld [vmem:[%s0] sm:$0x7f]
  %s48 = scalar_lea.vmem %s0, 8
  %v49 = vld [vmem:[%s48] sm:$0x7f]
  %s50 = scalar_lea.vmem %s0, 16
  %v51 = vld [vmem:[%s50] sm:$0x7f]
  %s52 = scalar_lea.vmem %s0, 24
  %v53 = vld [vmem:[%s52] sm:$0x7f]
  %v54 = vld [vmem:[%s0 + $0x1] sm:$0x7f]
  %56 = vrot.lane.b32.xlu0 %v49, 32
  %v57 = vpop.permute.xlu0 %56
  %60 = vrot.lane.b32.xlu0 %v51, 64
  %v61 = vpop.permute.xlu0 %60
  %64 = vrot.lane.b32.xlu0 %v53, 96
  %v65 = vpop.permute.xlu0 %64
  %v67 = vsel %vm23, %v47, %v57
  %vm68 = vcmask 523264
  %v69 = vsel %vm68, %v67, %v61
  %vm70 = vcmask 785408
  %v71 = vsel %vm70, %v69, %v65
  %v72 = vld [vmem:[%s48 + $0x1] sm:$0x7f]
  %73 = vrot.lane.b32.xlu0 %v51, 32
  %v74 = vpop.permute.xlu0 %73
  %76 = vrot.lane.b32.xlu0 %v53, 64
  %v77 = vpop.permute.xlu0 %76
  %80 = vrot.lane.b32.xlu0 %v54, 96
  %v81 = vpop.permute.xlu0 %80
  %v83 = vsel %vm23, %v49, %v74
  %v84 = vsel %vm68, %v83, %v77
  %v85 = vsel %vm70, %v84, %v81
  %v86 = vld [vmem:[%s50 + $0x1] sm:$0x7f]
  %87 = vrot.lane.b32.xlu0 %v53, 32
  %v88 = vpop.permute.xlu0 %87
  %90 = vrot.lane.b32.xlu0 %v54, 64
  %v91 = vpop.permute.xlu0 %90
  %94 = vrot.lane.b32.xlu0 %v72, 96
  %v95 = vpop.permute.xlu0 %94
  %v97 = vsel %vm23, %v51, %v88
  %v98 = vsel %vm68, %v97, %v91
  %v99 = vsel %vm70, %v98, %v95
  %v100 = vld [vmem:[%s52 + $0x1] sm:$0x7f]
  %101 = vrot.lane.b32.xlu0 %v54, 32
  %v102 = vpop.permute.xlu0 %101
  %104 = vrot.lane.b32.xlu0 %v72, 64
  %v105 = vpop.permute.xlu0 %104
  %108 = vrot.lane.b32.xlu0 %v86, 96
  %v109 = vpop.permute.xlu0 %108
  %v111 = vsel %vm23, %v53, %v102
  %v112 = vsel %vm68, %v111, %v105
  %v113 = vsel %vm70, %v112, %v109
  %s114 = scalar_lea.vmem %s0, 32
  %v115 = vld [vmem:[%s114] sm:$0x7f]
  %s116 = scalar_lea.vmem %s0, 40
  %v117 = vld [vmem:[%s116] sm:$0x7f]
  %s118 = scalar_lea.vmem %s0, 48
  %v119 = vld [vmem:[%s118] sm:$0x7f]
  %s120 = scalar_lea.vmem %s0, 56
  %v121 = vld [vmem:[%s120] sm:$0x7f]
  %v122 = vld [vmem:[%s114 + $0x1] sm:$0x7f]
  %124 = vrot.lane.b32.xlu0 %v117, 32
  %v125 = vpop.permute.xlu0 %124
  %128 = vrot.lane.b32.xlu0 %v119, 64
  %v129 = vpop.permute.xlu0 %128
  %132 = vrot.lane.b32.xlu0 %v121, 96
  %v133 = vpop.permute.xlu0 %132
  %v135 = vsel %vm23, %v115, %v125
  %v136 = vsel %vm68, %v135, %v129
  %v137 = vsel %vm70, %v136, %v133
  %v138 = vld [vmem:[%s116 + $0x1] sm:$0x7f]
  %139 = vrot.lane.b32.xlu0 %v119, 32
  %v140 = vpop.permute.xlu0 %139
  %142 = vrot.lane.b32.xlu0 %v121, 64
  %v143 = vpop.permute.xlu0 %142
  %146 = vrot.lane.b32.xlu0 %v122, 96
  %v147 = vpop.permute.xlu0 %146
  %v149 = vsel %vm23, %v117, %v140
  %v150 = vsel %vm68, %v149, %v143
  %v151 = vsel %vm70, %v150, %v147
  %v152 = vld [vmem:[%s118 + $0x1] sm:$0x7f]
  %153 = vrot.lane.b32.xlu0 %v121, 32
  %v154 = vpop.permute.xlu0 %153
  %156 = vrot.lane.b32.xlu0 %v122, 64
  %v157 = vpop.permute.xlu0 %156
  %160 = vrot.lane.b32.xlu0 %v138, 96
  %v161 = vpop.permute.xlu0 %160
  %v163 = vsel %vm23, %v119, %v154
  %v164 = vsel %vm68, %v163, %v157
  %v165 = vsel %vm70, %v164, %v161
  %v166 = vld [vmem:[%s120 + $0x1] sm:$0x7f]
  %167 = vrot.lane.b32.xlu0 %v122, 32
  %v168 = vpop.permute.xlu0 %167
  %170 = vrot.lane.b32.xlu0 %v138, 64
  %v171 = vpop.permute.xlu0 %170
  %174 = vrot.lane.b32.xlu0 %v152, 96
  %v175 = vpop.permute.xlu0 %174
  %v177 = vsel %vm23, %v121, %v168
  %v178 = vsel %vm68, %v177, %v171
  %v179 = vsel %vm70, %v178, %v175
  %v181 = vrot.slane %v85, 1
  %v182 = vrot.slane %v72, 1
  %v186 = vrot.slane %v99, 2
  %v187 = vrot.slane %v86, 2
  %v192 = vrot.slane %v113, 3
  %v193 = vrot.slane %v100, 3
  %v197 = vrot.slane %v137, 4
  %v198 = vrot.slane %v122, 4
  %v202 = vrot.slane %v151, 5
  %v203 = vrot.slane %v138, 5
  %v207 = vrot.slane %v165, 6
  %v208 = vrot.slane %v152, 6
  %v213 = vrot.slane %v179, 7
  %v214 = vrot.slane %v166, 7
  %vm217 = vcmask 1046528
  %v218 = vsel %vm217, %v71, %v181
  %v219 = vsel %vm217, %v54, %v182
  %vm220 = vcmask 1045504
  %v221 = vsel %vm220, %v181, %v186
  %v222 = vsel %vm220, %v182, %v187
  %vm223 = vcmask 1044480
  %v224 = vsel %vm223, %v186, %v192
  %v225 = vsel %vm223, %v187, %v193
  %vm226 = vcmask 1043456
  %v227 = vsel %vm226, %v192, %v197
  %v228 = vsel %vm226, %v193, %v198
  %vm229 = vcmask 1042432
  %v230 = vsel %vm229, %v197, %v202
  %v231 = vsel %vm229, %v198, %v203
  %vm232 = vcmask 1041408
  %v233 = vsel %vm232, %v202, %v207
  %v234 = vsel %vm232, %v203, %v208
  %vm235 = vcmask 1040384
  %v236 = vsel %vm235, %v207, %v213
  %v237 = vsel %vm235, %v208, %v214
  %v238 = vpack.c.bf16 %v221, %v218
  %v239 = vpack.c.bf16 %v222, %v219
  %v240 = vpack.c.bf16 %v227, %v224
  %v241 = vpack.c.bf16 %v228, %v225
  %v242 = vpack.c.bf16 %v233, %v230
  %v243 = vpack.c.bf16 %v234, %v231
  %v244 = vpack.c.bf16 %v236, %v236
  %v245 = vpack.c.bf16 %v237, %v237
  %v246 = vld [vmem:[%s1] sm:$0xff]
  %v247 = vld [vmem:[%s1 + $0x8] sm:$0xff]
  %v248 = vld [vmem:[%s1 + $0x10] sm:$0xff]
  %v249 = vld [vmem:[%s1 + $0x18] sm:$0xff]
  %v250 = vld [vmem:[%s1 + $0x20] sm:$0xff]
  %v251 = vld [vmem:[%s1 + $0x28] sm:$0xff]
  %v252 = vld [vmem:[%s1 + $0x30] sm:$0xff]
  %v253 = vld [vmem:[%s1 + $0x38] sm:$0xff]
  %v254 = vld [vmem:[%s1 + $0x40] sm:$0xff]
  %v255 = vld [vmem:[%s1 + $0x48] sm:$0xff]
  %v256 = vld [vmem:[%s1 + $0x50] sm:$0xff]
  %v257 = vld [vmem:[%s1 + $0x58] sm:$0xff]
  %v258 = vld [vmem:[%s1 + $0x60] sm:$0xff]
  %v259 = vld [vmem:[%s1 + $0x68] sm:$0xff]
  %v260 = vld [vmem:[%s1 + $0x70] sm:$0xff]
  %v261 = vld [vmem:[%s1 + $0x78] sm:$0xff]
  %v262 = vld [vmem:[%s1 + $0x80] sm:$0xff]
  %v263 = vld [vmem:[%s1 + $0x88] sm:$0xff]
  %v264 = vld [vmem:[%s1 + $0x90] sm:$0xff]
  %v265 = vld [vmem:[%s1 + $0x98] sm:$0xff]
  %v266 = vld [vmem:[%s1 + $0xa0] sm:$0xff]
  %v267 = vld [vmem:[%s1 + $0xa8] sm:$0xff]
  %v268 = vld [vmem:[%s1 + $0xb0] sm:$0xff]
  %v269 = vld [vmem:[%s1 + $0xb8] sm:$0xff]
  %v270 = vld [vmem:[%s1 + $0xc0] sm:$0xff]
  %v271 = vld [vmem:[%s1 + $0xc8] sm:$0xff]
  %v272 = vld [vmem:[%s1 + $0xd0] sm:$0xff]
  %v273 = vld [vmem:[%s1 + $0xd8] sm:$0xff]
  %v274 = vld [vmem:[%s1 + $0xe0] sm:$0xff]
  %v275 = vld [vmem:[%s1 + $0xe8] sm:$0xff]
  %v276 = vld [vmem:[%s1 + $0xf0] sm:$0xff]
  %v277 = vld [vmem:[%s1 + $0xf8] sm:$0xff]
  %v278 = vld [vmem:[%s1 + $0x100] sm:$0xff]
  %v279 = vld [vmem:[%s1 + $0x108] sm:$0xff]
  %v280 = vld [vmem:[%s1 + $0x110] sm:$0xff]
  %v281 = vld [vmem:[%s1 + $0x118] sm:$0xff]
  %v282 = vld [vmem:[%s1 + $0x120] sm:$0xff]
  %v283 = vld [vmem:[%s1 + $0x128] sm:$0xff]
  %v284 = vld [vmem:[%s1 + $0x130] sm:$0xff]
  %v285 = vld [vmem:[%s1 + $0x138] sm:$0xff]
  %v326 = vunpack.c.l.b16 %v246
  %v327 = vunpack.c.h.b16 %v246
  %v328 = vunpack.c.l.b16 %v247
  %v329 = vunpack.c.h.b16 %v247
  %v330 = vunpack.c.l.b16 %v248
  %v331 = vunpack.c.h.b16 %v248
  %v332 = vunpack.c.l.b16 %v249
  %v333 = vunpack.c.h.b16 %v249
  %v334 = vunpack.c.l.b16 %v250
  %v335 = vunpack.c.h.b16 %v250
  %v336 = vunpack.c.l.b16 %v251
  %v337 = vunpack.c.h.b16 %v251
  %v338 = vunpack.c.l.b16 %v252
  %v339 = vunpack.c.h.b16 %v252
  %v340 = vunpack.c.l.b16 %v253
  %v341 = vunpack.c.h.b16 %v253
  %v342 = vunpack.c.l.b16 %v254
  %v343 = vunpack.c.h.b16 %v254
  %v344 = vunpack.c.l.b16 %v255
  %v345 = vunpack.c.h.b16 %v255
  %v346 = vunpack.c.l.b16 %v256
  %v347 = vunpack.c.h.b16 %v256
  %v348 = vunpack.c.l.b16 %v257
  %v349 = vunpack.c.h.b16 %v257
  %v350 = vunpack.c.l.b16 %v258
  %v351 = vunpack.c.h.b16 %v258
  %v352 = vunpack.c.l.b16 %v259
  %v353 = vunpack.c.h.b16 %v259
  %v354 = vunpack.c.l.b16 %v260
  %v355 = vunpack.c.h.b16 %v260
  %v356 = vunpack.c.l.b16 %v261
  %v357 = vunpack.c.h.b16 %v261
  %v358 = vunpack.c.l.b16 %v262
  %v359 = vunpack.c.h.b16 %v262
  %v360 = vunpack.c.l.b16 %v263
  %v361 = vunpack.c.h.b16 %v263
  %v362 = vunpack.c.l.b16 %v264
  %v363 = vunpack.c.h.b16 %v264
  %v364 = vunpack.c.l.b16 %v265
  %v365 = vunpack.c.h.b16 %v265
  %v366 = vunpack.c.l.b16 %v266
  %v367 = vunpack.c.h.b16 %v266
  %v368 = vunpack.c.l.b16 %v267
  %v369 = vunpack.c.h.b16 %v267
  %v370 = vunpack.c.l.b16 %v268
  %v371 = vunpack.c.h.b16 %v268
  %v372 = vunpack.c.l.b16 %v269
  %v373 = vunpack.c.h.b16 %v269
  %v374 = vunpack.c.l.b16 %v270
  %v375 = vunpack.c.h.b16 %v270
  %v376 = vunpack.c.l.b16 %v271
  %v377 = vunpack.c.h.b16 %v271
  %v378 = vunpack.c.l.b16 %v272
  %v379 = vunpack.c.h.b16 %v272
  %v380 = vunpack.c.l.b16 %v273
  %v381 = vunpack.c.h.b16 %v273
  %v382 = vunpack.c.l.b16 %v274
  %v383 = vunpack.c.h.b16 %v274
  %v384 = vunpack.c.l.b16 %v275
  %v385 = vunpack.c.h.b16 %v275
  %v386 = vunpack.c.l.b16 %v276
  %v387 = vunpack.c.h.b16 %v276
  %v388 = vunpack.c.l.b16 %v277
  %v389 = vunpack.c.h.b16 %v277
  %v390 = vunpack.c.l.b16 %v278
  %v391 = vunpack.c.h.b16 %v278
  %v392 = vunpack.c.l.b16 %v279
  %v393 = vunpack.c.h.b16 %v279
  %v394 = vunpack.c.l.b16 %v280
  %v395 = vunpack.c.h.b16 %v280
  %v396 = vunpack.c.l.b16 %v281
  %v397 = vunpack.c.h.b16 %v281
  %v398 = vunpack.c.l.b16 %v282
  %v399 = vunpack.c.h.b16 %v282
  %v400 = vunpack.c.l.b16 %v283
  %v401 = vunpack.c.h.b16 %v283
  %v402 = vunpack.c.l.b16 %v284
  %v403 = vunpack.c.h.b16 %v284
  %v404 = vunpack.c.l.b16 %v285
  %v405 = vunpack.c.h.b16 %v285
  %v406 = vpack.c.b16 %v330, %v326
  %v407 = vpack.c.b16 %v331, %v327
  %v408 = vpack.c.b16 %v332, %v328
  %v409 = vpack.c.b16 %v333, %v329
  %v410 = vpack.c.b16 %v338, %v334
  %v411 = vpack.c.b16 %v339, %v335
  %v412 = vpack.c.b16 %v340, %v336
  %v413 = vpack.c.b16 %v341, %v337
  %v414 = vpack.c.b16 %v346, %v342
  %v415 = vpack.c.b16 %v347, %v343
  %v416 = vpack.c.b16 %v348, %v344
  %v417 = vpack.c.b16 %v349, %v345
  %v418 = vpack.c.b16 %v354, %v350
  %v419 = vpack.c.b16 %v355, %v351
  %v420 = vpack.c.b16 %v356, %v352
  %v421 = vpack.c.b16 %v357, %v353
  %v422 = vpack.c.b16 %v362, %v358
  %v423 = vpack.c.b16 %v363, %v359
  %v424 = vpack.c.b16 %v364, %v360
  %v425 = vpack.c.b16 %v365, %v361
  %v426 = vpack.c.b16 %v370, %v366
  %v427 = vpack.c.b16 %v371, %v367
  %v428 = vpack.c.b16 %v372, %v368
  %v429 = vpack.c.b16 %v373, %v369
  %v430 = vpack.c.b16 %v378, %v374
  %v431 = vpack.c.b16 %v379, %v375
  %v432 = vpack.c.b16 %v380, %v376
  %v433 = vpack.c.b16 %v381, %v377
  %v434 = vpack.c.b16 %v386, %v382
  %v435 = vpack.c.b16 %v387, %v383
  %v436 = vpack.c.b16 %v388, %v384
  %v437 = vpack.c.b16 %v389, %v385
  %v438 = vpack.c.b16 %v394, %v390
  %v439 = vpack.c.b16 %v395, %v391
  %v440 = vpack.c.b16 %v396, %v392
  %v441 = vpack.c.b16 %v397, %v393
  %v442 = vpack.c.b16 %v402, %v398
  %v443 = vpack.c.b16 %v403, %v399
  %v444 = vpack.c.b16 %v404, %v400
  %v445 = vpack.c.b16 %v405, %v401
  %v487 = vsel %vm23, %v239, 0
  %v490 = vsel %vm23, %v241, 0
  %v493 = vsel %vm23, %v243, 0
  %v496 = vsel %vm23, %v245, 0
  %498 = vmatpush.bf16.msra.mxu0 %v434
  %499 = vmatpush.bf16.msra.mxu0 %v430
  %500 = vmatpush.bf16.msra.mxu0 %v426
  %501 = vmatpush.bf16.msra.mxu0 %v422
  %502 = vmatpush.bf16.msra.mxu0 %v418
  %503 = vmatpush.bf16.msra.mxu0 %v414
  %504 = vmatpush.bf16.msra.mxu0 %v410
  %505 = vmatpush.bf16.msra.mxu0 %v406
  %506 = vmatmul.bf16.gmra.mxu0 %v238
  %v507 = vpop.f32.mrf.mxu0
  %v508 = vadd.f32 0.0, %v507
  %v509 = vpop.f32.mrf.mxu0
  %v510 = vadd.f32 0.0, %v509
  %511 = vmatmul.bf16.gmra.mxu0 %v240
  %v512 = vpop.f32.mrf.mxu0
  %v513 = vadd.f32 0.0, %v512
  %v514 = vpop.f32.mrf.mxu0
  %v515 = vadd.f32 0.0, %v514
  %516 = vmatmul.bf16.gmra.mxu0 %v242
  %v517 = vpop.f32.mrf.mxu0
  %v518 = vadd.f32 0.0, %v517
  %v519 = vpop.f32.mrf.mxu0
  %v520 = vadd.f32 0.0, %v519
  %521 = vmatmul.bf16.gmra.mxu0 %v244
  %v522 = vpop.f32.mrf.mxu0
  %v523 = vadd.f32 0.0, %v522
  %v524 = vpop.f32.mrf.mxu0
  %525 = vdwg.mxu0
  %526 = vmatpush.bf16.msra.mxu0 0
  %527 = vmatpush.bf16.msra.mxu0 0
  %528 = vmatpush.bf16.msra.mxu0 0
  %529 = vmatpush.bf16.msra.mxu0 0
  %530 = vmatpush.bf16.msra.mxu0 0
  %531 = vmatpush.bf16.msra.mxu0 0
  %532 = vmatpush.bf16.msra.mxu0 %v442
  %533 = vmatpush.bf16.msra.mxu0 %v438
  %534 = vmatmul.bf16.gmra.mxu0 %v487
  %v535 = vpop.f32.mrf.mxu0
  %v536 = vadd.f32 %v508, %v535
  %v537 = vpop.f32.mrf.mxu0
  %v538 = vadd.f32 %v510, %v537
  %539 = vmatmul.bf16.gmra.mxu0 %v490
  %v540 = vpop.f32.mrf.mxu0
  %v541 = vadd.f32 %v513, %v540
  %v542 = vpop.f32.mrf.mxu0
  %v543 = vadd.f32 %v515, %v542
  %544 = vmatmul.bf16.gmra.mxu0 %v493
  %v545 = vpop.f32.mrf.mxu0
  %v546 = vadd.f32 %v518, %v545
  %v547 = vpop.f32.mrf.mxu0
  %v548 = vadd.f32 %v520, %v547
  %549 = vmatmul.bf16.gmra.mxu0 %v496
  %v550 = vpop.f32.mrf.mxu0
  %v551 = vadd.f32 %v523, %v550
  %v552 = vpop.f32.mrf.mxu0
  %553 = vdwg.mxu0
  %554 = vmatpush.bf16.msra.mxu0 %v435
  %555 = vmatpush.bf16.msra.mxu0 %v431
  %556 = vmatpush.bf16.msra.mxu0 %v427
  %557 = vmatpush.bf16.msra.mxu0 %v423
  %558 = vmatpush.bf16.msra.mxu0 %v419
  %559 = vmatpush.bf16.msra.mxu0 %v415
  %560 = vmatpush.bf16.msra.mxu0 %v411
  %561 = vmatpush.bf16.msra.mxu0 %v407
  %562 = vmatmul.bf16.gmra.mxu0 %v238
  %v563 = vpop.f32.mrf.mxu0
  %v564 = vadd.f32 0.0, %v563
  %v565 = vpop.f32.mrf.mxu0
  %v566 = vadd.f32 0.0, %v565
  %567 = vmatmul.bf16.gmra.mxu0 %v240
  %v568 = vpop.f32.mrf.mxu0
  %v569 = vadd.f32 0.0, %v568
  %v570 = vpop.f32.mrf.mxu0
  %v571 = vadd.f32 0.0, %v570
  %572 = vmatmul.bf16.gmra.mxu0 %v242
  %v573 = vpop.f32.mrf.mxu0
  %v574 = vadd.f32 0.0, %v573
  %v575 = vpop.f32.mrf.mxu0
  %v576 = vadd.f32 0.0, %v575
  %577 = vmatmul.bf16.gmra.mxu0 %v244
  %v578 = vpop.f32.mrf.mxu0
  %v579 = vadd.f32 0.0, %v578
  %v580 = vpop.f32.mrf.mxu0
  %581 = vdwg.mxu0
  %582 = vmatpush.bf16.msra.mxu0 0
  %583 = vmatpush.bf16.msra.mxu0 0
  %584 = vmatpush.bf16.msra.mxu0 0
  %585 = vmatpush.bf16.msra.mxu0 0
  %586 = vmatpush.bf16.msra.mxu0 0
  %587 = vmatpush.bf16.msra.mxu0 0
  %588 = vmatpush.bf16.msra.mxu0 %v443
  %589 = vmatpush.bf16.msra.mxu0 %v439
  %590 = vmatmul.bf16.gmra.mxu0 %v487
  %v591 = vpop.f32.mrf.mxu0
  %v592 = vadd.f32 %v564, %v591
  %v593 = vpop.f32.mrf.mxu0
  %v594 = vadd.f32 %v566, %v593
  %595 = vmatmul.bf16.gmra.mxu0 %v490
  %v596 = vpop.f32.mrf.mxu0
  %v597 = vadd.f32 %v569, %v596
  %v598 = vpop.f32.mrf.mxu0
  %v599 = vadd.f32 %v571, %v598
  %600 = vmatmul.bf16.gmra.mxu0 %v493
  %v601 = vpop.f32.mrf.mxu0
  %v602 = vadd.f32 %v574, %v601
  %v603 = vpop.f32.mrf.mxu0
  %v604 = vadd.f32 %v576, %v603
  %605 = vmatmul.bf16.gmra.mxu0 %v496
  %v606 = vpop.f32.mrf.mxu0
  %v607 = vadd.f32 %v579, %v606
  %v608 = vpop.f32.mrf.mxu0
  %609 = vdwg.mxu0
  %610 = vmatpush.bf16.msra.mxu0 %v436
  %611 = vmatpush.bf16.msra.mxu0 %v432
  %612 = vmatpush.bf16.msra.mxu0 %v428
  %613 = vmatpush.bf16.msra.mxu0 %v424
  %614 = vmatpush.bf16.msra.mxu0 %v420
  %615 = vmatpush.bf16.msra.mxu0 %v416
  %616 = vmatpush.bf16.msra.mxu0 %v412
  %617 = vmatpush.bf16.msra.mxu0 %v408
  %618 = vmatmul.bf16.gmra.mxu0 %v238
  %v619 = vpop.f32.mrf.mxu0
  %v620 = vadd.f32 0.0, %v619
  %v621 = vpop.f32.mrf.mxu0
  %v622 = vadd.f32 0.0, %v621
  %623 = vmatmul.bf16.gmra.mxu0 %v240
  %v624 = vpop.f32.mrf.mxu0
  %v625 = vadd.f32 0.0, %v624
  %v626 = vpop.f32.mrf.mxu0
  %v627 = vadd.f32 0.0, %v626
  %628 = vmatmul.bf16.gmra.mxu0 %v242
  %v629 = vpop.f32.mrf.mxu0
  %v630 = vadd.f32 0.0, %v629
  %v631 = vpop.f32.mrf.mxu0
  %v632 = vadd.f32 0.0, %v631
  %633 = vmatmul.bf16.gmra.mxu0 %v244
  %v634 = vpop.f32.mrf.mxu0
  %v635 = vadd.f32 0.0, %v634
  %v636 = vpop.f32.mrf.mxu0
  %637 = vdwg.mxu0
  %638 = vmatpush.bf16.msra.mxu0 0
  %639 = vmatpush.bf16.msra.mxu0 0
  %640 = vmatpush.bf16.msra.mxu0 0
  %641 = vmatpush.bf16.msra.mxu0 0
  %642 = vmatpush.bf16.msra.mxu0 0
  %643 = vmatpush.bf16.msra.mxu0 0
  %644 = vmatpush.bf16.msra.mxu0 %v444
  %645 = vmatpush.bf16.msra.mxu0 %v440
  %646 = vmatmul.bf16.gmra.mxu0 %v487
  %v647 = vpop.f32.mrf.mxu0
  %v648 = vadd.f32 %v620, %v647
  %v649 = vpop.f32.mrf.mxu0
  %v650 = vadd.f32 %v622, %v649
  %651 = vmatmul.bf16.gmra.mxu0 %v490
  %v652 = vpop.f32.mrf.mxu0
  %v653 = vadd.f32 %v625, %v652
  %v654 = vpop.f32.mrf.mxu0
  %v655 = vadd.f32 %v627, %v654
  %656 = vmatmul.bf16.gmra.mxu0 %v493
  %v657 = vpop.f32.mrf.mxu0
  %v658 = vadd.f32 %v630, %v657
  %v659 = vpop.f32.mrf.mxu0
  %v660 = vadd.f32 %v632, %v659
  %661 = vmatmul.bf16.gmra.mxu0 %v496
  %v662 = vpop.f32.mrf.mxu0
  %v663 = vadd.f32 %v635, %v662
  %v664 = vpop.f32.mrf.mxu0
  %665 = vdwg.mxu0
  %666 = vmatpush.bf16.msra.mxu0 %v437
  %667 = vmatpush.bf16.msra.mxu0 %v433
  %668 = vmatpush.bf16.msra.mxu0 %v429
  %669 = vmatpush.bf16.msra.mxu0 %v425
  %670 = vmatpush.bf16.msra.mxu0 %v421
  %671 = vmatpush.bf16.msra.mxu0 %v417
  %672 = vmatpush.bf16.msra.mxu0 %v413
  %673 = vmatpush.bf16.msra.mxu0 %v409
  %674 = vmatmul.bf16.gmra.mxu0 %v238
  %v675 = vpop.f32.mrf.mxu0
  %v676 = vadd.f32 0.0, %v675
  %v677 = vpop.f32.mrf.mxu0
  %v678 = vadd.f32 0.0, %v677
  %679 = vmatmul.bf16.gmra.mxu0 %v240
  %v680 = vpop.f32.mrf.mxu0
  %v681 = vadd.f32 0.0, %v680
  %v682 = vpop.f32.mrf.mxu0
  %v683 = vadd.f32 0.0, %v682
  %684 = vmatmul.bf16.gmra.mxu0 %v242
  %v685 = vpop.f32.mrf.mxu0
  %v686 = vadd.f32 0.0, %v685
  %v687 = vpop.f32.mrf.mxu0
  %v688 = vadd.f32 0.0, %v687
  %689 = vmatmul.bf16.gmra.mxu0 %v244
  %v690 = vpop.f32.mrf.mxu0
  %v691 = vadd.f32 0.0, %v690
  %v692 = vpop.f32.mrf.mxu0
  %693 = vdwg.mxu0
  %694 = vmatpush.bf16.msra.mxu0 0
  %695 = vmatpush.bf16.msra.mxu0 0
  %696 = vmatpush.bf16.msra.mxu0 0
  %697 = vmatpush.bf16.msra.mxu0 0
  %698 = vmatpush.bf16.msra.mxu0 0
  %699 = vmatpush.bf16.msra.mxu0 0
  %700 = vmatpush.bf16.msra.mxu0 %v445
  %701 = vmatpush.bf16.msra.mxu0 %v441
  %702 = vmatmul.bf16.gmra.mxu0 %v487
  %v703 = vpop.f32.mrf.mxu0
  %v704 = vadd.f32 %v676, %v703
  %v705 = vpop.f32.mrf.mxu0
  %v706 = vadd.f32 %v678, %v705
  %707 = vmatmul.bf16.gmra.mxu0 %v490
  %v708 = vpop.f32.mrf.mxu0
  %v709 = vadd.f32 %v681, %v708
  %v710 = vpop.f32.mrf.mxu0
  %v711 = vadd.f32 %v683, %v710
  %712 = vmatmul.bf16.gmra.mxu0 %v493
  %v713 = vpop.f32.mrf.mxu0
  %v714 = vadd.f32 %v686, %v713
  %v715 = vpop.f32.mrf.mxu0
  %v716 = vadd.f32 %v688, %v715
  %717 = vmatmul.bf16.gmra.mxu0 %v496
  %v718 = vpop.f32.mrf.mxu0
  %v719 = vadd.f32 %v691, %v718
  %v720 = vpop.f32.mrf.mxu0
  %721 = vdwg.mxu0
  %v722 = vld [vmem:[%s2] sm:$0x3]
  %726 = vrot.lane.b32.xlu0 %v592, 32
  %v727 = vpop.permute.xlu0 %726
  %728 = vrot.lane.b32.xlu0 %v648, 32
  %v729 = vpop.permute.xlu0 %728
  %730 = vrot.lane.b32.xlu0 %v704, 32
  %v731 = vpop.permute.xlu0 %730
  %v732 = vsel %vm23, %v727, %v729
  %v733 = vsel %vm23, %v729, %v731
  %v736 = vmax.f32 %v536, %v732
  %v737 = vmax.f32 %v592, %v733
  %741 = vrot.lane.b32.xlu0 %v594, 32
  %v742 = vpop.permute.xlu0 %741
  %743 = vrot.lane.b32.xlu0 %v650, 32
  %v744 = vpop.permute.xlu0 %743
  %745 = vrot.lane.b32.xlu0 %v706, 32
  %v746 = vpop.permute.xlu0 %745
  %v747 = vsel %vm23, %v742, %v744
  %v748 = vsel %vm23, %v744, %v746
  %v751 = vmax.f32 %v538, %v747
  %v752 = vmax.f32 %v594, %v748
  %v757 = vrot.slane %v736, 7
  %v758 = vrot.slane %v751, 7
  %v759 = vsel %vm235, %v757, %v758
  %v760 = vrot.slane %v737, 7
  %v761 = vrot.slane %v752, 7
  %v762 = vsel %vm235, %v760, %v761
  %v765 = vmax.f32 %v736, %v759
  %v766 = vmax.f32 %v737, %v762
  %v768 = vperm.slane %v722, 0
  %v769 = vperm.slane %v722, 1
  %v772 = vadd.f32 %v765, %v768
  %v773 = vadd.f32 %v766, %v769
  %v774 = vmax.f32 %v772, 0.0
  %v775 = vmax.f32 %v773, 0.0
  %v778 = vrot.slane %v774, 7
  %v779 = vrot.slane %v775, 7
  %780 = vrot.lane.b32.xlu0 %v778, 32
  %v781 = vpop.permute.xlu0 %780
  %782 = vrot.lane.b32.xlu0 %v779, 32
  %v783 = vpop.permute.xlu0 %782
  %v784 = vsel %vm23, %v781, %v783
  %vm787 = vcmask 1047809
  %788 = vst.msk [vmem:[#allocation2] sm:$0xfe] %vm787, %v781
  %789 = vst [vmem:[#allocation2 + $0x8] sm:$0xfe] %v784
  %793 = vrot.lane.b32.xlu0 %v597, 32
  %v794 = vpop.permute.xlu0 %793
  %795 = vrot.lane.b32.xlu0 %v653, 32
  %v796 = vpop.permute.xlu0 %795
  %797 = vrot.lane.b32.xlu0 %v709, 32
  %v798 = vpop.permute.xlu0 %797
  %v799 = vsel %vm23, %v794, %v796
  %v800 = vsel %vm23, %v796, %v798
  %v803 = vmax.f32 %v541, %v799
  %v804 = vmax.f32 %v597, %v800
  %808 = vrot.lane.b32.xlu0 %v599, 32
  %v809 = vpop.permute.xlu0 %808
  %810 = vrot.lane.b32.xlu0 %v655, 32
  %v811 = vpop.permute.xlu0 %810
  %812 = vrot.lane.b32.xlu0 %v711, 32
  %v813 = vpop.permute.xlu0 %812
  %v814 = vsel %vm23, %v809, %v811
  %v815 = vsel %vm23, %v811, %v813
  %v818 = vmax.f32 %v543, %v814
  %v819 = vmax.f32 %v599, %v815
  %v824 = vrot.slane %v803, 7
  %v825 = vrot.slane %v804, 7
  %v826 = vrot.slane %v818, 7
  %v827 = vsel %vm235, %v824, %v826
  %v828 = vrot.slane %v819, 7
  %v829 = vsel %vm235, %v825, %v828
  %v834 = vmax.f32 %v751, %v824
  %v835 = vmax.f32 %v752, %v825
  %v836 = vmax.f32 %v803, %v827
  %v837 = vmax.f32 %v804, %v829
  %v838 = vadd.f32 %v834, %v768
  %v839 = vadd.f32 %v835, %v769
  %v840 = vadd.f32 %v836, %v768
  %v841 = vadd.f32 %v837, %v769
  %v842 = vmax.f32 %v838, 0.0
  %v843 = vmax.f32 %v839, 0.0
  %v844 = vmax.f32 %v840, 0.0
  %v845 = vmax.f32 %v841, 0.0
  %v850 = vrot.slane %v842, 5
  %v851 = vrot.slane %v844, 5
  %v852 = vsel %vm229, %v850, %v851
  %v853 = vrot.slane %v843, 5
  %v854 = vrot.slane %v845, 5
  %v855 = vsel %vm229, %v853, %v854
  %856 = vrot.lane.b32.xlu0 %v852, 32
  %v857 = vpop.permute.xlu0 %856
  %858 = vrot.lane.b32.xlu0 %v855, 32
  %v859 = vpop.permute.xlu0 %858
  %v860 = vsel %vm23, %v857, %v859
  %s863 = scalar_lea.vmem [#allocation2], 48
  %864 = vst.msk [vmem:[%s863] sm:$0xfe] %vm787, %v857
  %865 = vst [vmem:[%s863 + $0x8] sm:$0xfe] %v860
  %869 = vrot.lane.b32.xlu0 %v602, 32
  %v870 = vpop.permute.xlu0 %869
  %871 = vrot.lane.b32.xlu0 %v658, 32
  %v872 = vpop.permute.xlu0 %871
  %873 = vrot.lane.b32.xlu0 %v714, 32
  %v874 = vpop.permute.xlu0 %873
  %v875 = vsel %vm23, %v870, %v872
  %v876 = vsel %vm23, %v872, %v874
  %v879 = vmax.f32 %v546, %v875
  %v880 = vmax.f32 %v602, %v876
  %884 = vrot.lane.b32.xlu0 %v604, 32
  %v885 = vpop.permute.xlu0 %884
  %886 = vrot.lane.b32.xlu0 %v660, 32
  %v887 = vpop.permute.xlu0 %886
  %888 = vrot.lane.b32.xlu0 %v716, 32
  %v889 = vpop.permute.xlu0 %888
  %v890 = vsel %vm23, %v885, %v887
  %v891 = vsel %vm23, %v887, %v889
  %v894 = vmax.f32 %v548, %v890
  %v895 = vmax.f32 %v604, %v891
  %v900 = vrot.slane %v879, 7
  %v901 = vrot.slane %v880, 7
  %v902 = vrot.slane %v894, 7
  %v903 = vsel %vm235, %v900, %v902
  %v904 = vrot.slane %v895, 7
  %v905 = vsel %vm235, %v901, %v904
  %v910 = vmax.f32 %v818, %v900
  %v911 = vmax.f32 %v819, %v901
  %v912 = vmax.f32 %v879, %v903
  %v913 = vmax.f32 %v880, %v905
  %v914 = vadd.f32 %v910, %v768
  %v915 = vadd.f32 %v911, %v769
  %v916 = vadd.f32 %v912, %v768
  %v917 = vadd.f32 %v913, %v769
  %v918 = vmax.f32 %v914, 0.0
  %v919 = vmax.f32 %v915, 0.0
  %v920 = vmax.f32 %v916, 0.0
  %v921 = vmax.f32 %v917, 0.0
  %v926 = vrot.slane %v918, 3
  %v927 = vrot.slane %v920, 3
  %v928 = vsel %vm223, %v926, %v927
  %v929 = vrot.slane %v919, 3
  %v930 = vrot.slane %v921, 3
  %v931 = vsel %vm223, %v929, %v930
  %932 = vrot.lane.b32.xlu0 %v928, 32
  %v933 = vpop.permute.xlu0 %932
  %934 = vrot.lane.b32.xlu0 %v931, 32
  %v935 = vpop.permute.xlu0 %934
  %v936 = vsel %vm23, %v933, %v935
  %s939 = scalar_lea.vmem [#allocation2], 96
  %940 = vst.msk [vmem:[%s939] sm:$0xfe] %vm787, %v933
  %941 = vst [vmem:[%s939 + $0x8] sm:$0xfe] %v936
  %945 = vrot.lane.b32.xlu0 %v607, 32
  %v946 = vpop.permute.xlu0 %945
  %947 = vrot.lane.b32.xlu0 %v663, 32
  %v948 = vpop.permute.xlu0 %947
  %949 = vrot.lane.b32.xlu0 %v719, 32
  %v950 = vpop.permute.xlu0 %949
  %v951 = vsel %vm23, %v946, %v948
  %v952 = vsel %vm23, %v948, %v950
  %v955 = vmax.f32 %v551, %v951
  %v956 = vmax.f32 %v607, %v952
  %v959 = vrot.slane %v955, 7
  %v960 = vrot.slane %v956, 7
  %v963 = vmax.f32 %v894, %v959
  %v964 = vmax.f32 %v895, %v960
  %v965 = vmax.f32 %v955, %v959
  %v966 = vmax.f32 %v956, %v960
  %v967 = vadd.f32 %v963, %v768
  %v968 = vadd.f32 %v964, %v769
  %v969 = vadd.f32 %v965, %v768
  %v970 = vadd.f32 %v966, %v769
  %v971 = vmax.f32 %v967, 0.0
  %v972 = vmax.f32 %v968, 0.0
  %v973 = vmax.f32 %v969, 0.0
  %v974 = vmax.f32 %v970, 0.0
  %v979 = vrot.slane %v971, 1
  %v980 = vrot.slane %v973, 1
  %v981 = vsel %vm217, %v979, %v980
  %v982 = vrot.slane %v972, 1
  %v983 = vrot.slane %v974, 1
  %v984 = vsel %vm217, %v982, %v983
  %985 = vrot.lane.b32.xlu0 %v981, 32
  %v986 = vpop.permute.xlu0 %985
  %987 = vrot.lane.b32.xlu0 %v984, 32
  %v988 = vpop.permute.xlu0 %987
  %v989 = vsel %vm23, %v986, %v988
  %s992 = scalar_lea.vmem [#allocation2], 144
  %993 = vst.msk [vmem:[%s992] sm:$0xfe] %vm787, %v986
  %994 = vst [vmem:[%s992 + $0x8] sm:$0xfe] %v989
  %v995 = vld [vmem:[#allocation2] sm:$0x7f]
  %v996 = vld [vmem:[#allocation2 + $0x8] sm:$0x7f]
  %v997 = vld [vmem:[#allocation2 + $0x10] sm:$0x7f]
  %v998 = vld [vmem:[%s863] sm:$0x7f]
  %v999 = vld [vmem:[%s863 + $0x8] sm:$0x7f]
  %v1000 = vld [vmem:[%s863 + $0x10] sm:$0x7f]
  %v1001 = vld [vmem:[#allocation2] sm:$0xfe]
  %v1002 = vld [vmem:[#allocation2 + $0x8] sm:$0xfe]
  %v1003 = vld [vmem:[#allocation2 + $0x10] sm:$0xfe]
  %v1004 = vld [vmem:[%s863] sm:$0xfe]
  %v1005 = vld [vmem:[%s863 + $0x8] sm:$0xfe]
  %v1006 = vld [vmem:[%s863 + $0x10] sm:$0xfe]
  %v1007 = vld [vmem:[#allocation2] sm:$0xfc]
  %v1008 = vld [vmem:[#allocation2 + $0x8] sm:$0xfc]
  %v1009 = vld [vmem:[#allocation2 + $0x10] sm:$0xfc]
  %v1010 = vld [vmem:[#allocation2 + $0x18] sm:$0x1]
  %v1011 = vld [vmem:[#allocation2 + $0x20] sm:$0x1]
  %v1012 = vld [vmem:[#allocation2 + $0x28] sm:$0x1]
  %1016 = vrot.lane.b32.xlu0 %v998, 32
  %v1017 = vpop.permute.xlu0 %1016
  %1018 = vrot.lane.b32.xlu0 %v999, 32
  %v1019 = vpop.permute.xlu0 %1018
  %1020 = vrot.lane.b32.xlu0 %v1000, 32
  %v1021 = vpop.permute.xlu0 %1020
  %v1022 = vsel %vm23, %v1017, %v1019
  %v1023 = vsel %vm23, %v1019, %v1021
  %v1030 = vrot.slane %v1001, 1
  %v1031 = vrot.slane %v1002, 1
  %v1032 = vrot.slane %v1003, 1
  %1033 = vrot.lane.b32.xlu0 %v1030, 64
  %v1034 = vpop.permute.xlu0 %1033
  %1035 = vrot.lane.b32.xlu0 %v1031, 64
  %v1036 = vpop.permute.xlu0 %1035
  %1037 = vrot.lane.b32.xlu0 %v1032, 64
  %v1038 = vpop.permute.xlu0 %1037
  %v1039 = vsel %vm68, %v1034, %v1036
  %v1040 = vsel %vm68, %v1036, %v1038
  %v1047 = vrot.slane %v1004, 1
  %v1048 = vrot.slane %v1005, 1
  %v1049 = vrot.slane %v1006, 1
  %1050 = vrot.lane.b32.xlu0 %v1047, 96
  %v1051 = vpop.permute.xlu0 %1050
  %1052 = vrot.lane.b32.xlu0 %v1048, 96
  %v1053 = vpop.permute.xlu0 %1052
  %1054 = vrot.lane.b32.xlu0 %v1049, 96
  %v1055 = vpop.permute.xlu0 %1054
  %v1056 = vsel %vm70, %v1051, %v1053
  %v1057 = vsel %vm70, %v1053, %v1055
  %v1067 = vrot.slane %v1007, 2
  %v1068 = vrot.slane %v1010, 2
  %v1069 = vsel %vm220, %v1067, %v1068
  %v1070 = vrot.slane %v1008, 2
  %v1071 = vrot.slane %v1011, 2
  %v1072 = vsel %vm220, %v1070, %v1071
  %v1073 = vrot.slane %v1009, 2
  %v1074 = vrot.slane %v1012, 2
  %v1075 = vsel %vm220, %v1073, %v1074
  %v1079 = vsel %vm23, %v997, %v1017
  %v1080 = vsel %vm68, %v1023, %v1034
  %v1081 = vsel %vm70, %v1040, %v1051
  %v1082 = vld [vmem:[%s863] sm:$0xfc]
  %v1083 = vld [vmem:[%s863 + $0x8] sm:$0xfc]
  %v1084 = vld [vmem:[%s863 + $0x10] sm:$0xfc]
  %v1085 = vld [vmem:[%s863 + $0x18] sm:$0x1]
  %v1086 = vld [vmem:[%s863 + $0x20] sm:$0x1]
  %v1087 = vld [vmem:[%s863 + $0x28] sm:$0x1]
  %1088 = vrot.lane.b32.xlu0 %v1030, 32
  %v1089 = vpop.permute.xlu0 %1088
  %1090 = vrot.lane.b32.xlu0 %v1031, 32
  %v1091 = vpop.permute.xlu0 %1090
  %1092 = vrot.lane.b32.xlu0 %v1032, 32
  %v1093 = vpop.permute.xlu0 %1092
  %v1094 = vsel %vm23, %v1089, %v1091
  %v1095 = vsel %vm23, %v1091, %v1093
  %1098 = vrot.lane.b32.xlu0 %v1047, 64
  %v1099 = vpop.permute.xlu0 %1098
  %1100 = vrot.lane.b32.xlu0 %v1048, 64
  %v1101 = vpop.permute.xlu0 %1100
  %1102 = vrot.lane.b32.xlu0 %v1049, 64
  %v1103 = vpop.permute.xlu0 %1102
  %v1104 = vsel %vm68, %v1099, %v1101
  %v1105 = vsel %vm68, %v1101, %v1103
  %1108 = vrot.lane.b32.xlu0 %v1069, 96
  %v1109 = vpop.permute.xlu0 %1108
  %1110 = vrot.lane.b32.xlu0 %v1072, 96
  %v1111 = vpop.permute.xlu0 %1110
  %1112 = vrot.lane.b32.xlu0 %v1075, 96
  %v1113 = vpop.permute.xlu0 %1112
  %v1114 = vsel %vm70, %v1109, %v1111
  %v1115 = vsel %vm70, %v1111, %v1113
  %v1123 = vrot.slane %v1082, 2
  %v1124 = vrot.slane %v1085, 2
  %v1125 = vsel %vm220, %v1123, %v1124
  %v1126 = vrot.slane %v1083, 2
  %v1127 = vrot.slane %v1086, 2
  %v1128 = vsel %vm220, %v1126, %v1127
  %v1129 = vrot.slane %v1084, 2
  %v1130 = vrot.slane %v1087, 2
  %v1131 = vsel %vm220, %v1129, %v1130
  %v1132 = vsel %vm23, %v1000, %v1089
  %v1133 = vsel %vm68, %v1095, %v1099
  %v1134 = vsel %vm70, %v1105, %v1109
  %v1135 = vld [vmem:[%s939] sm:$0x7f]
  %v1136 = vld [vmem:[%s939 + $0x8] sm:$0x7f]
  %v1137 = vld [vmem:[%s939 + $0x10] sm:$0x7f]
  %v1138 = vld [vmem:[%s992] sm:$0x7f]
  %v1139 = vld [vmem:[%s992 + $0x8] sm:$0x7f]
  %v1140 = vld [vmem:[%s992 + $0x10] sm:$0x7f]
  %v1141 = vld [vmem:[%s939] sm:$0xfe]
  %v1142 = vld [vmem:[%s939 + $0x8] sm:$0xfe]
  %v1143 = vld [vmem:[%s939 + $0x10] sm:$0xfe]
  %v1144 = vld [vmem:[%s992] sm:$0xfe]
  %v1145 = vld [vmem:[%s992 + $0x8] sm:$0xfe]
  %v1146 = vld [vmem:[%s992 + $0x10] sm:$0xfe]
  %v1147 = vld [vmem:[%s939] sm:$0xfc]
  %v1148 = vld [vmem:[%s939 + $0x8] sm:$0xfc]
  %v1149 = vld [vmem:[%s939 + $0x10] sm:$0xfc]
  %v1150 = vld [vmem:[%s939 + $0x18] sm:$0x1]
  %v1151 = vld [vmem:[%s939 + $0x20] sm:$0x1]
  %v1152 = vld [vmem:[%s939 + $0x28] sm:$0x1]
  %1156 = vrot.lane.b32.xlu0 %v1138, 32
  %v1157 = vpop.permute.xlu0 %1156
  %1158 = vrot.lane.b32.xlu0 %v1139, 32
  %v1159 = vpop.permute.xlu0 %1158
  %1160 = vrot.lane.b32.xlu0 %v1140, 32
  %v1161 = vpop.permute.xlu0 %1160
  %v1162 = vsel %vm23, %v1157, %v1159
  %v1163 = vsel %vm23, %v1159, %v1161
  %v1169 = vrot.slane %v1141, 1
  %v1170 = vrot.slane %v1142, 1
  %v1171 = vrot.slane %v1143, 1
  %1172 = vrot.lane.b32.xlu0 %v1169, 64
  %v1173 = vpop.permute.xlu0 %1172
  %1174 = vrot.lane.b32.xlu0 %v1170, 64
  %v1175 = vpop.permute.xlu0 %1174
  %1176 = vrot.lane.b32.xlu0 %v1171, 64
  %v1177 = vpop.permute.xlu0 %1176
  %v1178 = vsel %vm68, %v1173, %v1175
  %v1179 = vsel %vm68, %v1175, %v1177
  %v1185 = vrot.slane %v1144, 1
  %v1186 = vrot.slane %v1145, 1
  %v1187 = vrot.slane %v1146, 1
  %1188 = vrot.lane.b32.xlu0 %v1185, 96
  %v1189 = vpop.permute.xlu0 %1188
  %1190 = vrot.lane.b32.xlu0 %v1186, 96
  %v1191 = vpop.permute.xlu0 %1190
  %1192 = vrot.lane.b32.xlu0 %v1187, 96
  %v1193 = vpop.permute.xlu0 %1192
  %v1194 = vsel %vm70, %v1189, %v1191
  %v1195 = vsel %vm70, %v1191, %v1193
  %v1203 = vrot.slane %v1147, 2
  %v1204 = vrot.slane %v1150, 2
  %v1205 = vsel %vm220, %v1203, %v1204
  %v1206 = vrot.slane %v1148, 2
  %v1207 = vrot.slane %v1151, 2
  %v1208 = vsel %vm220, %v1206, %v1207
  %v1209 = vrot.slane %v1149, 2
  %v1210 = vrot.slane %v1152, 2
  %v1211 = vsel %vm220, %v1209, %v1210
  %v1212 = vsel %vm23, %v1137, %v1157
  %v1213 = vsel %vm68, %v1163, %v1173
  %v1214 = vsel %vm70, %v1179, %v1189
  %v1215 = vld [vmem:[%s992] sm:$0xfc]
  %v1216 = vld [vmem:[%s992 + $0x8] sm:$0xfc]
  %v1217 = vld [vmem:[%s992 + $0x10] sm:$0xfc]
  %v1218 = vld [vmem:[%s992 + $0x18] sm:$0x1]
  %v1219 = vld [vmem:[%s992 + $0x20] sm:$0x1]
  %v1220 = vld [vmem:[%s992 + $0x28] sm:$0x1]
  %1221 = vrot.lane.b32.xlu0 %v1169, 32
  %v1222 = vpop.permute.xlu0 %1221
  %1223 = vrot.lane.b32.xlu0 %v1170, 32
  %v1224 = vpop.permute.xlu0 %1223
  %1225 = vrot.lane.b32.xlu0 %v1171, 32
  %v1226 = vpop.permute.xlu0 %1225
  %v1227 = vsel %vm23, %v1222, %v1224
  %v1228 = vsel %vm23, %v1224, %v1226
  %1231 = vrot.lane.b32.xlu0 %v1185, 64
  %v1232 = vpop.permute.xlu0 %1231
  %1233 = vrot.lane.b32.xlu0 %v1186, 64
  %v1234 = vpop.permute.xlu0 %1233
  %1235 = vrot.lane.b32.xlu0 %v1187, 64
  %v1236 = vpop.permute.xlu0 %1235
  %v1237 = vsel %vm68, %v1232, %v1234
  %v1238 = vsel %vm68, %v1234, %v1236
  %1241 = vrot.lane.b32.xlu0 %v1205, 96
  %v1242 = vpop.permute.xlu0 %1241
  %1243 = vrot.lane.b32.xlu0 %v1208, 96
  %v1244 = vpop.permute.xlu0 %1243
  %1245 = vrot.lane.b32.xlu0 %v1211, 96
  %v1246 = vpop.permute.xlu0 %1245
  %v1247 = vsel %vm70, %v1242, %v1244
  %v1248 = vsel %vm70, %v1244, %v1246
  %v1256 = vrot.slane %v1215, 2
  %v1257 = vrot.slane %v1218, 2
  %v1258 = vsel %vm220, %v1256, %v1257
  %v1259 = vrot.slane %v1216, 2
  %v1260 = vrot.slane %v1219, 2
  %v1261 = vsel %vm220, %v1259, %v1260
  %v1262 = vrot.slane %v1217, 2
  %v1263 = vrot.slane %v1220, 2
  %v1264 = vsel %vm220, %v1262, %v1263
  %v1265 = vsel %vm23, %v1140, %v1222
  %v1266 = vsel %vm68, %v1228, %v1232
  %v1267 = vsel %vm70, %v1238, %v1242
  %v1271 = vrot.slane %v998, 1
  %v1272 = vrot.slane %v999, 1
  %v1273 = vrot.slane %v1132, 1
  %v1274 = vrot.slane %v1094, 1
  %v1275 = vrot.slane %v1133, 1
  %v1276 = vrot.slane %v1104, 1
  %v1277 = vrot.slane %v1134, 1
  %v1278 = vrot.slane %v1114, 1
  %v1279 = vrot.slane %v1115, 1
  %v1280 = vrot.slane %v1125, 1
  %v1281 = vrot.slane %v1128, 1
  %v1282 = vrot.slane %v1131, 1
  %v1300 = vrot.slane %v1135, 2
  %v1301 = vrot.slane %v1136, 2
  %v1302 = vrot.slane %v1212, 2
  %v1303 = vrot.slane %v1162, 2
  %v1304 = vrot.slane %v1213, 2
  %v1305 = vrot.slane %v1178, 2
  %v1306 = vrot.slane %v1214, 2
  %v1307 = vrot.slane %v1194, 2
  %v1308 = vrot.slane %v1195, 2
  %v1309 = vrot.slane %v1205, 2
  %v1310 = vrot.slane %v1208, 2
  %v1311 = vrot.slane %v1211, 2
  %v1327 = vrot.slane %v1138, 3
  %v1328 = vrot.slane %v1139, 3
  %v1329 = vrot.slane %v1265, 3
  %v1330 = vrot.slane %v1227, 3
  %v1331 = vrot.slane %v1266, 3
  %v1332 = vrot.slane %v1237, 3
  %v1333 = vrot.slane %v1267, 3
  %v1334 = vrot.slane %v1247, 3
  %v1335 = vrot.slane %v1248, 3
  %v1336 = vrot.slane %v1258, 3
  %v1337 = vrot.slane %v1261, 3
  %v1338 = vrot.slane %v1264, 3
  %v1351 = vsel %vm217, %v995, %v1271
  %v1352 = vsel %vm217, %v996, %v1272
  %v1353 = vsel %vm217, %v1079, %v1273
  %v1354 = vsel %vm217, %v1022, %v1274
  %v1355 = vsel %vm217, %v1080, %v1275
  %v1356 = vsel %vm217, %v1039, %v1276
  %v1357 = vsel %vm217, %v1081, %v1277
  %v1358 = vsel %vm217, %v1056, %v1278
  %v1359 = vsel %vm217, %v1057, %v1279
  %v1360 = vsel %vm217, %v1069, %v1280
  %v1361 = vsel %vm217, %v1072, %v1281
  %v1362 = vsel %vm217, %v1075, %v1282
  %v1363 = vsel %vm220, %v1271, %v1300
  %v1364 = vsel %vm220, %v1272, %v1301
  %v1365 = vsel %vm220, %v1273, %v1302
  %v1366 = vsel %vm220, %v1274, %v1303
  %v1367 = vsel %vm220, %v1275, %v1304
  %v1368 = vsel %vm220, %v1276, %v1305
  %v1369 = vsel %vm220, %v1277, %v1306
  %v1370 = vsel %vm220, %v1278, %v1307
  %v1371 = vsel %vm220, %v1279, %v1308
  %v1372 = vsel %vm220, %v1280, %v1309
  %v1373 = vsel %vm220, %v1281, %v1310
  %v1374 = vsel %vm220, %v1282, %v1311
  %v1375 = vsel %vm223, %v1300, %v1327
  %v1376 = vsel %vm223, %v1301, %v1328
  %v1377 = vsel %vm223, %v1302, %v1329
  %v1378 = vsel %vm223, %v1303, %v1330
  %v1379 = vsel %vm223, %v1304, %v1331
  %v1380 = vsel %vm223, %v1305, %v1332
  %v1381 = vsel %vm223, %v1306, %v1333
  %v1382 = vsel %vm223, %v1307, %v1334
  %v1383 = vsel %vm223, %v1308, %v1335
  %v1384 = vsel %vm223, %v1309, %v1336
  %v1385 = vsel %vm223, %v1310, %v1337
  %v1386 = vsel %vm223, %v1311, %v1338
  %v1387 = vpack.c.bf16 %v1363, %v1351
  %v1388 = vpack.c.bf16 %v1364, %v1352
  %v1389 = vpack.c.bf16 %v1365, %v1353
  %v1390 = vpack.c.bf16 %v1366, %v1354
  %v1391 = vpack.c.bf16 %v1367, %v1355
  %v1392 = vpack.c.bf16 %v1368, %v1356
  %v1393 = vpack.c.bf16 %v1369, %v1357
  %v1394 = vpack.c.bf16 %v1370, %v1358
  %v1395 = vpack.c.bf16 %v1371, %v1359
  %v1396 = vpack.c.bf16 %v1372, %v1360
  %v1397 = vpack.c.bf16 %v1373, %v1361
  %v1398 = vpack.c.bf16 %v1374, %v1362
  %v1399 = vpack.c.bf16 %v1327, %v1375
  %v1400 = vpack.c.bf16 %v1328, %v1376
  %v1401 = vpack.c.bf16 %v1329, %v1377
  %v1402 = vpack.c.bf16 %v1330, %v1378
  %v1403 = vpack.c.bf16 %v1331, %v1379
  %v1404 = vpack.c.bf16 %v1332, %v1380
  %v1405 = vpack.c.bf16 %v1333, %v1381
  %v1406 = vpack.c.bf16 %v1334, %v1382
  %v1407 = vpack.c.bf16 %v1335, %v1383
  %v1408 = vpack.c.bf16 %v1336, %v1384
  %v1409 = vpack.c.bf16 %v1337, %v1385
  %v1410 = vpack.c.bf16 %v1338, %v1386
  %v1411 = vld [vmem:[%s3] sm:$0xff]
  %v1412 = vld [vmem:[%s3 + $0x8] sm:$0xff]
  %v1413 = vld [vmem:[%s3 + $0x10] sm:$0xff]
  %v1414 = vld [vmem:[%s3 + $0x18] sm:$0xff]
  %v1415 = vld [vmem:[%s3 + $0x20] sm:$0xff]
  %v1416 = vld [vmem:[%s3 + $0x28] sm:$0xff]
  %v1417 = vld [vmem:[%s3 + $0x30] sm:$0xff]
  %v1418 = vld [vmem:[%s3 + $0x38] sm:$0xff]
  %v1419 = vld [vmem:[%s3 + $0x40] sm:$0xff]
  %v1420 = vld [vmem:[%s3 + $0x48] sm:$0xff]
  %v1421 = vld [vmem:[%s3 + $0x50] sm:$0xff]
  %v1422 = vld [vmem:[%s3 + $0x58] sm:$0xff]
  %v1423 = vld [vmem:[%s3 + $0x60] sm:$0xff]
  %v1424 = vld [vmem:[%s3 + $0x68] sm:$0xff]
  %v1425 = vld [vmem:[%s3 + $0x70] sm:$0xff]
  %v1426 = vld [vmem:[%s3 + $0x78] sm:$0xff]
  %v1427 = vld [vmem:[%s3 + $0x80] sm:$0xff]
  %v1428 = vld [vmem:[%s3 + $0x88] sm:$0xff]
  %v1429 = vld [vmem:[%s3 + $0x90] sm:$0xff]
  %v1430 = vld [vmem:[%s3 + $0x98] sm:$0xff]
  %v1431 = vld [vmem:[%s3 + $0xa0] sm:$0xff]
  %v1432 = vld [vmem:[%s3 + $0xa8] sm:$0xff]
  %v1433 = vld [vmem:[%s3 + $0xb0] sm:$0xff]
  %v1434 = vld [vmem:[%s3 + $0xb8] sm:$0xff]
  %v1435 = vld [vmem:[%s3 + $0xc0] sm:$0xff]
  %v1436 = vld [vmem:[%s3 + $0xc8] sm:$0xff]
  %v1437 = vld [vmem:[%s3 + $0xd0] sm:$0xff]
  %v1438 = vld [vmem:[%s3 + $0xd8] sm:$0xff]
  %v1439 = vld [vmem:[%s3 + $0xe0] sm:$0xff]
  %v1440 = vld [vmem:[%s3 + $0xe8] sm:$0xff]
  %v1441 = vld [vmem:[%s3 + $0xf0] sm:$0xff]
  %v1442 = vld [vmem:[%s3 + $0xf8] sm:$0xff]
  %v1443 = vld [vmem:[%s3 + $0x100] sm:$0xff]
  %v1444 = vld [vmem:[%s3 + $0x108] sm:$0xff]
  %v1445 = vld [vmem:[%s3 + $0x110] sm:$0xff]
  %v1446 = vld [vmem:[%s3 + $0x118] sm:$0xff]
  %v1447 = vld [vmem:[%s3 + $0x120] sm:$0xff]
  %v1448 = vld [vmem:[%s3 + $0x128] sm:$0xff]
  %v1449 = vld [vmem:[%s3 + $0x130] sm:$0xff]
  %v1450 = vld [vmem:[%s3 + $0x138] sm:$0xff]
  %v1451 = vld [vmem:[%s3 + $0x140] sm:$0xff]
  %v1452 = vld [vmem:[%s3 + $0x148] sm:$0xff]
  %v1453 = vld [vmem:[%s3 + $0x150] sm:$0xff]
  %v1454 = vld [vmem:[%s3 + $0x158] sm:$0xff]
  %v1455 = vld [vmem:[%s3 + $0x160] sm:$0xff]
  %v1456 = vld [vmem:[%s3 + $0x168] sm:$0xff]
  %v1457 = vld [vmem:[%s3 + $0x170] sm:$0xff]
  %v1458 = vld [vmem:[%s3 + $0x178] sm:$0xff]
  %v1459 = vld [vmem:[%s3 + $0x180] sm:$0xff]
  %v1460 = vld [vmem:[%s3 + $0x188] sm:$0xff]
  %v1461 = vld [vmem:[%s3 + $0x190] sm:$0xff]
  %v1462 = vld [vmem:[%s3 + $0x198] sm:$0xff]
  %v1463 = vld [vmem:[%s3 + $0x1a0] sm:$0xff]
  %v1464 = vld [vmem:[%s3 + $0x1a8] sm:$0xff]
  %v1465 = vld [vmem:[%s3 + $0x1b0] sm:$0xff]
  %v1466 = vld [vmem:[%s3 + $0x1b8] sm:$0xff]
  %v1467 = vld [vmem:[%s3 + $0x1c0] sm:$0xff]
  %v1468 = vld [vmem:[%s3 + $0x1c8] sm:$0xff]
  %v1469 = vld [vmem:[%s3 + $0x1d0] sm:$0xff]
  %v1470 = vld [vmem:[%s3 + $0x1d8] sm:$0xff]
  %v1471 = vld [vmem:[%s3 + $0x1e0] sm:$0xff]
  %v1472 = vld [vmem:[%s3 + $0x1e8] sm:$0xff]
  %v1473 = vld [vmem:[%s3 + $0x1f0] sm:$0xff]
  %v1474 = vld [vmem:[%s3 + $0x1f8] sm:$0xff]
  %v1475 = vld [vmem:[%s3 + $0x200] sm:$0xff]
  %v1476 = vld [vmem:[%s3 + $0x208] sm:$0xff]
  %v1477 = vld [vmem:[%s3 + $0x210] sm:$0xff]
  %v1478 = vld [vmem:[%s3 + $0x218] sm:$0xff]
  %v1479 = vld [vmem:[%s3 + $0x220] sm:$0xff]
  %v1480 = vld [vmem:[%s3 + $0x228] sm:$0xff]
  %v1481 = vld [vmem:[%s3 + $0x230] sm:$0xff]
  %v1482 = vld [vmem:[%s3 + $0x238] sm:$0xff]
  %v1483 = vld [vmem:[%s3 + $0x240] sm:$0xff]
  %v1484 = vld [vmem:[%s3 + $0x248] sm:$0xff]
  %v1485 = vld [vmem:[%s3 + $0x250] sm:$0xff]
  %v1486 = vld [vmem:[%s3 + $0x258] sm:$0xff]
  %v1487 = vld [vmem:[%s3 + $0x260] sm:$0xff]
  %v1488 = vld [vmem:[%s3 + $0x268] sm:$0xff]
  %v1489 = vld [vmem:[%s3 + $0x270] sm:$0xff]
  %v1490 = vld [vmem:[%s3 + $0x278] sm:$0xff]
  %v1491 = vld [vmem:[%s3 + $0x280] sm:$0xff]
  %v1492 = vld [vmem:[%s3 + $0x288] sm:$0xff]
  %v1493 = vld [vmem:[%s3 + $0x290] sm:$0xff]
  %v1494 = vld [vmem:[%s3 + $0x298] sm:$0xff]
  %v1495 = vld [vmem:[%s3 + $0x2a0] sm:$0xff]
  %v1496 = vld [vmem:[%s3 + $0x2a8] sm:$0xff]
  %v1497 = vld [vmem:[%s3 + $0x2b0] sm:$0xff]
  %v1498 = vld [vmem:[%s3 + $0x2b8] sm:$0xff]
  %v1499 = vld [vmem:[%s3 + $0x2c0] sm:$0xff]
  %v1500 = vld [vmem:[%s3 + $0x2c8] sm:$0xff]
  %v1501 = vld [vmem:[%s3 + $0x2d0] sm:$0xff]
  %v1502 = vld [vmem:[%s3 + $0x2d8] sm:$0xff]
  %v1503 = vld [vmem:[%s3 + $0x2e0] sm:$0xff]
  %v1504 = vld [vmem:[%s3 + $0x2e8] sm:$0xff]
  %v1505 = vld [vmem:[%s3 + $0x2f0] sm:$0xff]
  %v1506 = vld [vmem:[%s3 + $0x2f8] sm:$0xff]
  %v1507 = vld [vmem:[%s3 + $0x300] sm:$0xff]
  %v1508 = vld [vmem:[%s3 + $0x308] sm:$0xff]
  %v1509 = vld [vmem:[%s3 + $0x310] sm:$0xff]
  %v1510 = vld [vmem:[%s3 + $0x318] sm:$0xff]
  %v1511 = vld [vmem:[%s3 + $0x320] sm:$0xff]
  %v1512 = vld [vmem:[%s3 + $0x328] sm:$0xff]
  %v1513 = vld [vmem:[%s3 + $0x330] sm:$0xff]
  %v1514 = vld [vmem:[%s3 + $0x338] sm:$0xff]
  %v1515 = vld [vmem:[%s3 + $0x340] sm:$0xff]
  %v1516 = vld [vmem:[%s3 + $0x348] sm:$0xff]
  %v1517 = vld [vmem:[%s3 + $0x350] sm:$0xff]
  %v1518 = vld [vmem:[%s3 + $0x358] sm:$0xff]
  %v1519 = vld [vmem:[%s3 + $0x360] sm:$0xff]
  %v1520 = vld [vmem:[%s3 + $0x368] sm:$0xff]
  %v1521 = vld [vmem:[%s3 + $0x370] sm:$0xff]
  %v1522 = vld [vmem:[%s3 + $0x378] sm:$0xff]
  %v1523 = vld [vmem:[%s3 + $0x380] sm:$0xff]
  %v1524 = vld [vmem:[%s3 + $0x388] sm:$0xff]
  %v1525 = vld [vmem:[%s3 + $0x390] sm:$0xff]
  %v1526 = vld [vmem:[%s3 + $0x398] sm:$0xff]
  %v1527 = vld [vmem:[%s3 + $0x3a0] sm:$0xff]
  %v1528 = vld [vmem:[%s3 + $0x3a8] sm:$0xff]
  %v1529 = vld [vmem:[%s3 + $0x3b0] sm:$0xff]
  %v1530 = vld [vmem:[%s3 + $0x3b8] sm:$0xff]
  %v1531 = vld [vmem:[%s3 + $0x3c0] sm:$0xff]
  %v1532 = vld [vmem:[%s3 + $0x3c8] sm:$0xff]
  %v1533 = vld [vmem:[%s3 + $0x3d0] sm:$0xff]
  %v1534 = vld [vmem:[%s3 + $0x3d8] sm:$0xff]
  %v1535 = vld [vmem:[%s3 + $0x3e0] sm:$0xff]
  %v1536 = vld [vmem:[%s3 + $0x3e8] sm:$0xff]
  %v1537 = vld [vmem:[%s3 + $0x3f0] sm:$0xff]
  %v1538 = vld [vmem:[%s3 + $0x3f8] sm:$0xff]
  %v1539 = vld [vmem:[%s3 + $0x400] sm:$0xff]
  %v1540 = vld [vmem:[%s3 + $0x408] sm:$0xff]
  %v1541 = vld [vmem:[%s3 + $0x410] sm:$0xff]
  %v1542 = vld [vmem:[%s3 + $0x418] sm:$0xff]
  %v1543 = vld [vmem:[%s3 + $0x420] sm:$0xff]
  %v1544 = vld [vmem:[%s3 + $0x428] sm:$0xff]
  %v1545 = vld [vmem:[%s3 + $0x430] sm:$0xff]
  %v1546 = vld [vmem:[%s3 + $0x438] sm:$0xff]
  %v1547 = vld [vmem:[%s3 + $0x440] sm:$0xff]
  %v1548 = vld [vmem:[%s3 + $0x448] sm:$0xff]
  %v1549 = vld [vmem:[%s3 + $0x450] sm:$0xff]
  %v1550 = vld [vmem:[%s3 + $0x458] sm:$0xff]
  %v1551 = vld [vmem:[%s3 + $0x460] sm:$0xff]
  %v1552 = vld [vmem:[%s3 + $0x468] sm:$0xff]
  %v1553 = vld [vmem:[%s3 + $0x470] sm:$0xff]
  %v1554 = vld [vmem:[%s3 + $0x478] sm:$0xff]
  %v1555 = vld [vmem:[%s3 + $0x480] sm:$0xff]
  %v1556 = vld [vmem:[%s3 + $0x488] sm:$0xff]
  %v1557 = vld [vmem:[%s3 + $0x490] sm:$0xff]
  %v1558 = vld [vmem:[%s3 + $0x498] sm:$0xff]
  %v1559 = vld [vmem:[%s3 + $0x4a0] sm:$0xff]
  %v1560 = vld [vmem:[%s3 + $0x4a8] sm:$0xff]
  %v1561 = vld [vmem:[%s3 + $0x4b0] sm:$0xff]
  %v1562 = vld [vmem:[%s3 + $0x4b8] sm:$0xff]
  %v1563 = vld [vmem:[%s3 + $0x4c0] sm:$0xff]
  %v1564 = vld [vmem:[%s3 + $0x4c8] sm:$0xff]
  %v1565 = vld [vmem:[%s3 + $0x4d0] sm:$0xff]
  %v1566 = vld [vmem:[%s3 + $0x4d8] sm:$0xff]
  %v1567 = vld [vmem:[%s3 + $0x4e0] sm:$0xff]
  %v1568 = vld [vmem:[%s3 + $0x4e8] sm:$0xff]
  %v1569 = vld [vmem:[%s3 + $0x4f0] sm:$0xff]
  %v1570 = vld [vmem:[%s3 + $0x4f8] sm:$0xff]
  %v1571 = vld [vmem:[%s3 + $0x500] sm:$0xff]
  %v1572 = vld [vmem:[%s3 + $0x508] sm:$0xff]
  %v1573 = vld [vmem:[%s3 + $0x510] sm:$0xff]
  %v1574 = vld [vmem:[%s3 + $0x518] sm:$0xff]
  %v1575 = vld [vmem:[%s3 + $0x520] sm:$0xff]
  %v1576 = vld [vmem:[%s3 + $0x528] sm:$0xff]
  %v1577 = vld [vmem:[%s3 + $0x530] sm:$0xff]
  %v1578 = vld [vmem:[%s3 + $0x538] sm:$0xff]
  %v1579 = vld [vmem:[%s3 + $0x540] sm:$0xff]
  %v1580 = vld [vmem:[%s3 + $0x548] sm:$0xff]
  %v1581 = vld [vmem:[%s3 + $0x550] sm:$0xff]
  %v1582 = vld [vmem:[%s3 + $0x558] sm:$0xff]
  %v1583 = vld [vmem:[%s3 + $0x560] sm:$0xff]
  %v1584 = vld [vmem:[%s3 + $0x568] sm:$0xff]
  %v1585 = vld [vmem:[%s3 + $0x570] sm:$0xff]
  %v1586 = vld [vmem:[%s3 + $0x578] sm:$0xff]
  %v1587 = vld [vmem:[%s3 + $0x580] sm:$0xff]
  %v1588 = vld [vmem:[%s3 + $0x588] sm:$0xff]
  %v1589 = vld [vmem:[%s3 + $0x590] sm:$0xff]
  %v1590 = vld [vmem:[%s3 + $0x598] sm:$0xff]
  %v1591 = vld [vmem:[%s3 + $0x5a0] sm:$0xff]
  %v1592 = vld [vmem:[%s3 + $0x5a8] sm:$0xff]
  %v1593 = vld [vmem:[%s3 + $0x5b0] sm:$0xff]
  %v1594 = vld [vmem:[%s3 + $0x5b8] sm:$0xff]
  %v1595 = vld [vmem:[%s3 + $0x5c0] sm:$0xff]
  %v1596 = vld [vmem:[%s3 + $0x5c8] sm:$0xff]
  %v1597 = vld [vmem:[%s3 + $0x5d0] sm:$0xff]
  %v1598 = vld [vmem:[%s3 + $0x5d8] sm:$0xff]
  %v1599 = vld [vmem:[%s3 + $0x5e0] sm:$0xff]
  %v1600 = vld [vmem:[%s3 + $0x5e8] sm:$0xff]
  %v1601 = vld [vmem:[%s3 + $0x5f0] sm:$0xff]
  %v1602 = vld [vmem:[%s3 + $0x5f8] sm:$0xff]
  %v1603 = vld [vmem:[%s3 + $0x600] sm:$0xff]
  %v1604 = vld [vmem:[%s3 + $0x608] sm:$0xff]
  %v1605 = vld [vmem:[%s3 + $0x610] sm:$0xff]
  %v1606 = vld [vmem:[%s3 + $0x618] sm:$0xff]
  %v1607 = vld [vmem:[%s3 + $0x620] sm:$0xff]
  %v1608 = vld [vmem:[%s3 + $0x628] sm:$0xff]
  %v1609 = vld [vmem:[%s3 + $0x630] sm:$0xff]
  %v1610 = vld [vmem:[%s3 + $0x638] sm:$0xff]
  %v1611 = vld [vmem:[%s3 + $0x640] sm:$0xff]
  %v1612 = vld [vmem:[%s3 + $0x648] sm:$0xff]
  %v1613 = vld [vmem:[%s3 + $0x650] sm:$0xff]
  %v1614 = vld [vmem:[%s3 + $0x658] sm:$0xff]
  %v1615 = vld [vmem:[%s3 + $0x660] sm:$0xff]
  %v1616 = vld [vmem:[%s3 + $0x668] sm:$0xff]
  %v1617 = vld [vmem:[%s3 + $0x670] sm:$0xff]
  %v1618 = vld [vmem:[%s3 + $0x678] sm:$0xff]
  %v1619 = vld [vmem:[%s3 + $0x680] sm:$0xff]
  %v1620 = vld [vmem:[%s3 + $0x688] sm:$0xff]
  %v1621 = vld [vmem:[%s3 + $0x690] sm:$0xff]
  %v1622 = vld [vmem:[%s3 + $0x698] sm:$0xff]
  %v1623 = vld [vmem:[%s3 + $0x6a0] sm:$0xff]
  %v1624 = vld [vmem:[%s3 + $0x6a8] sm:$0xff]
  %v1625 = vld [vmem:[%s3 + $0x6b0] sm:$0xff]
  %v1626 = vld [vmem:[%s3 + $0x6b8] sm:$0xff]
  %v1627 = vld [vmem:[%s3 + $0x6c0] sm:$0xff]
  %v1628 = vld [vmem:[%s3 + $0x6c8] sm:$0xff]
  %v1629 = vld [vmem:[%s3 + $0x6d0] sm:$0xff]
  %v1630 = vld [vmem:[%s3 + $0x6d8] sm:$0xff]
  %v1631 = vld [vmem:[%s3 + $0x6e0] sm:$0xff]
  %v1632 = vld [vmem:[%s3 + $0x6e8] sm:$0xff]
  %v1633 = vld [vmem:[%s3 + $0x6f0] sm:$0xff]
  %v1634 = vld [vmem:[%s3 + $0x6f8] sm:$0xff]
  %v1635 = vld [vmem:[%s3 + $0x700] sm:$0xff]
  %v1636 = vld [vmem:[%s3 + $0x708] sm:$0xff]
  %v1637 = vld [vmem:[%s3 + $0x710] sm:$0xff]
  %v1638 = vld [vmem:[%s3 + $0x718] sm:$0xff]
  %v1639 = vld [vmem:[%s3 + $0x720] sm:$0xff]
  %v1640 = vld [vmem:[%s3 + $0x728] sm:$0xff]
  %v1641 = vld [vmem:[%s3 + $0x730] sm:$0xff]
  %v1642 = vld [vmem:[%s3 + $0x738] sm:$0xff]
  %v1643 = vld [vmem:[%s3 + $0x740] sm:$0xff]
  %v1644 = vld [vmem:[%s3 + $0x748] sm:$0xff]
  %v1645 = vld [vmem:[%s3 + $0x750] sm:$0xff]
  %v1646 = vld [vmem:[%s3 + $0x758] sm:$0xff]
  %v1647 = vld [vmem:[%s3 + $0x760] sm:$0xff]
  %v1648 = vld [vmem:[%s3 + $0x768] sm:$0xff]
  %v1649 = vld [vmem:[%s3 + $0x770] sm:$0xff]
  %v1650 = vld [vmem:[%s3 + $0x778] sm:$0xff]
  %v1651 = vld [vmem:[%s3 + $0x780] sm:$0xff]
  %v1652 = vld [vmem:[%s3 + $0x788] sm:$0xff]
  %v1653 = vld [vmem:[%s3 + $0x790] sm:$0xff]
  %v1654 = vld [vmem:[%s3 + $0x798] sm:$0xff]
  %v1655 = vld [vmem:[%s3 + $0x7a0] sm:$0xff]
  %v1656 = vld [vmem:[%s3 + $0x7a8] sm:$0xff]
  %v1657 = vld [vmem:[%s3 + $0x7b0] sm:$0xff]
  %v1658 = vld [vmem:[%s3 + $0x7b8] sm:$0xff]
  %v1659 = vld [vmem:[%s3 + $0x7c0] sm:$0xff]
  %v1660 = vld [vmem:[%s3 + $0x7c8] sm:$0xff]
  %v1661 = vld [vmem:[%s3 + $0x7d0] sm:$0xff]
  %v1662 = vld [vmem:[%s3 + $0x7d8] sm:$0xff]
  %v1663 = vld [vmem:[%s3 + $0x7e0] sm:$0xff]
  %v1664 = vld [vmem:[%s3 + $0x7e8] sm:$0xff]
  %v1665 = vld [vmem:[%s3 + $0x7f0] sm:$0xff]
  %v1666 = vld [vmem:[%s3 + $0x7f8] sm:$0xff]
  %v1667 = vld [vmem:[%s3 + $0x800] sm:$0xff]
  %v1668 = vld [vmem:[%s3 + $0x808] sm:$0xff]
  %v1669 = vld [vmem:[%s3 + $0x810] sm:$0xff]
  %v1670 = vld [vmem:[%s3 + $0x818] sm:$0xff]
  %v1671 = vld [vmem:[%s3 + $0x820] sm:$0xff]
  %v1672 = vld [vmem:[%s3 + $0x828] sm:$0xff]
  %v1673 = vld [vmem:[%s3 + $0x830] sm:$0xff]
  %v1674 = vld [vmem:[%s3 + $0x838] sm:$0xff]
  %v1675 = vld [vmem:[%s3 + $0x840] sm:$0xff]
  %v1676 = vld [vmem:[%s3 + $0x848] sm:$0xff]
  %v1677 = vld [vmem:[%s3 + $0x850] sm:$0xff]
  %v1678 = vld [vmem:[%s3 + $0x858] sm:$0xff]
  %v1679 = vld [vmem:[%s3 + $0x860] sm:$0xff]
  %v1680 = vld [vmem:[%s3 + $0x868] sm:$0xff]
  %v1681 = vld [vmem:[%s3 + $0x870] sm:$0xff]
  %v1682 = vld [vmem:[%s3 + $0x878] sm:$0xff]
  %v1683 = vld [vmem:[%s3 + $0x880] sm:$0xff]
  %v1684 = vld [vmem:[%s3 + $0x888] sm:$0xff]
  %v1685 = vld [vmem:[%s3 + $0x890] sm:$0xff]
  %v1686 = vld [vmem:[%s3 + $0x898] sm:$0xff]
  %v1687 = vld [vmem:[%s3 + $0x8a0] sm:$0xff]
  %v1688 = vld [vmem:[%s3 + $0x8a8] sm:$0xff]
  %v1689 = vld [vmem:[%s3 + $0x8b0] sm:$0xff]
  %v1690 = vld [vmem:[%s3 + $0x8b8] sm:$0xff]
  %v1691 = vld [vmem:[%s3 + $0x8c0] sm:$0xff]
  %v1692 = vld [vmem:[%s3 + $0x8c8] sm:$0xff]
  %v1693 = vld [vmem:[%s3 + $0x8d0] sm:$0xff]
  %v1694 = vld [vmem:[%s3 + $0x8d8] sm:$0xff]
  %v1695 = vld [vmem:[%s3 + $0x8e0] sm:$0xff]
  %v1696 = vld [vmem:[%s3 + $0x8e8] sm:$0xff]
  %v1697 = vld [vmem:[%s3 + $0x8f0] sm:$0xff]
  %v1698 = vld [vmem:[%s3 + $0x8f8] sm:$0xff]
  %v1699 = vld [vmem:[%s3 + $0x900] sm:$0xff]
  %v1700 = vld [vmem:[%s3 + $0x908] sm:$0xff]
  %v1701 = vld [vmem:[%s3 + $0x910] sm:$0xff]
  %v1702 = vld [vmem:[%s3 + $0x918] sm:$0xff]
  %v1703 = vld [vmem:[%s3 + $0x920] sm:$0xff]
  %v1704 = vld [vmem:[%s3 + $0x928] sm:$0xff]
  %v1705 = vld [vmem:[%s3 + $0x930] sm:$0xff]
  %v1706 = vld [vmem:[%s3 + $0x938] sm:$0xff]
  %v1707 = vld [vmem:[%s3 + $0x940] sm:$0xff]
  %v1708 = vld [vmem:[%s3 + $0x948] sm:$0xff]
  %v1709 = vld [vmem:[%s3 + $0x950] sm:$0xff]
  %v1710 = vld [vmem:[%s3 + $0x958] sm:$0xff]
  %v1711 = vld [vmem:[%s3 + $0x960] sm:$0xff]
  %v1712 = vld [vmem:[%s3 + $0x968] sm:$0xff]
  %v1713 = vld [vmem:[%s3 + $0x970] sm:$0xff]
  %v1714 = vld [vmem:[%s3 + $0x978] sm:$0xff]
  %v1715 = vld [vmem:[%s3 + $0x980] sm:$0xff]
  %v1716 = vld [vmem:[%s3 + $0x988] sm:$0xff]
  %v1717 = vld [vmem:[%s3 + $0x990] sm:$0xff]
  %v1718 = vld [vmem:[%s3 + $0x998] sm:$0xff]
  %v1719 = vld [vmem:[%s3 + $0x9a0] sm:$0xff]
  %v1720 = vld [vmem:[%s3 + $0x9a8] sm:$0xff]
  %v1721 = vld [vmem:[%s3 + $0x9b0] sm:$0xff]
  %v1722 = vld [vmem:[%s3 + $0x9b8] sm:$0xff]
  %v1723 = vld [vmem:[%s3 + $0x9c0] sm:$0xff]
  %v1724 = vld [vmem:[%s3 + $0x9c8] sm:$0xff]
  %v1725 = vld [vmem:[%s3 + $0x9d0] sm:$0xff]
  %v1726 = vld [vmem:[%s3 + $0x9d8] sm:$0xff]
  %v1727 = vld [vmem:[%s3 + $0x9e0] sm:$0xff]
  %v1728 = vld [vmem:[%s3 + $0x9e8] sm:$0xff]
  %v1729 = vld [vmem:[%s3 + $0x9f0] sm:$0xff]
  %v1730 = vld [vmem:[%s3 + $0x9f8] sm:$0xff]
  %v1731 = vld [vmem:[%s3 + $0xa00] sm:$0xff]
  %v1732 = vld [vmem:[%s3 + $0xa08] sm:$0xff]
  %v1733 = vld [vmem:[%s3 + $0xa10] sm:$0xff]
  %v1734 = vld [vmem:[%s3 + $0xa18] sm:$0xff]
  %v1735 = vld [vmem:[%s3 + $0xa20] sm:$0xff]
  %v1736 = vld [vmem:[%s3 + $0xa28] sm:$0xff]
  %v1737 = vld [vmem:[%s3 + $0xa30] sm:$0xff]
  %v1738 = vld [vmem:[%s3 + $0xa38] sm:$0xff]
  %v1739 = vld [vmem:[%s3 + $0xa40] sm:$0xff]
  %v1740 = vld [vmem:[%s3 + $0xa48] sm:$0xff]
  %v1741 = vld [vmem:[%s3 + $0xa50] sm:$0xff]
  %v1742 = vld [vmem:[%s3 + $0xa58] sm:$0xff]
  %v1743 = vld [vmem:[%s3 + $0xa60] sm:$0xff]
  %v1744 = vld [vmem:[%s3 + $0xa68] sm:$0xff]
  %v1745 = vld [vmem:[%s3 + $0xa70] sm:$0xff]
  %v1746 = vld [vmem:[%s3 + $0xa78] sm:$0xff]
  %v1747 = vld [vmem:[%s3 + $0xa80] sm:$0xff]
  %v1748 = vld [vmem:[%s3 + $0xa88] sm:$0xff]
  %v1749 = vld [vmem:[%s3 + $0xa90] sm:$0xff]
  %v1750 = vld [vmem:[%s3 + $0xa98] sm:$0xff]
  %v1751 = vld [vmem:[%s3 + $0xaa0] sm:$0xff]
  %v1752 = vld [vmem:[%s3 + $0xaa8] sm:$0xff]
  %v1753 = vld [vmem:[%s3 + $0xab0] sm:$0xff]
  %v1754 = vld [vmem:[%s3 + $0xab8] sm:$0xff]
  %v1755 = vld [vmem:[%s3 + $0xac0] sm:$0xff]
  %v1756 = vld [vmem:[%s3 + $0xac8] sm:$0xff]
  %v1757 = vld [vmem:[%s3 + $0xad0] sm:$0xff]
  %v1758 = vld [vmem:[%s3 + $0xad8] sm:$0xff]
  %v1759 = vld [vmem:[%s3 + $0xae0] sm:$0xff]
  %v1760 = vld [vmem:[%s3 + $0xae8] sm:$0xff]
  %v1761 = vld [vmem:[%s3 + $0xaf0] sm:$0xff]
  %v1762 = vld [vmem:[%s3 + $0xaf8] sm:$0xff]
  %v1763 = vld [vmem:[%s3 + $0xb00] sm:$0xff]
  %v1764 = vld [vmem:[%s3 + $0xb08] sm:$0xff]
  %v1765 = vld [vmem:[%s3 + $0xb10] sm:$0xff]
  %v1766 = vld [vmem:[%s3 + $0xb18] sm:$0xff]
  %v1767 = vld [vmem:[%s3 + $0xb20] sm:$0xff]
  %v1768 = vld [vmem:[%s3 + $0xb28] sm:$0xff]
  %v1769 = vld [vmem:[%s3 + $0xb30] sm:$0xff]
  %v1770 = vld [vmem:[%s3 + $0xb38] sm:$0xff]
  %v2131 = vunpack.c.l.b16 %v1411
  %v2132 = vunpack.c.h.b16 %v1411
  %v2133 = vunpack.c.l.b16 %v1412
  %v2134 = vunpack.c.h.b16 %v1412
  %v2135 = vunpack.c.l.b16 %v1413
  %v2136 = vunpack.c.h.b16 %v1413
  %v2137 = vunpack.c.l.b16 %v1414
  %v2138 = vunpack.c.h.b16 %v1414
  %v2139 = vunpack.c.l.b16 %v1415
  %v2140 = vunpack.c.h.b16 %v1415
  %v2141 = vunpack.c.l.b16 %v1416
  %v2142 = vunpack.c.h.b16 %v1416
  %v2143 = vunpack.c.l.b16 %v1417
  %v2144 = vunpack.c.h.b16 %v1417
  %v2145 = vunpack.c.l.b16 %v1418
  %v2146 = vunpack.c.h.b16 %v1418
  %v2147 = vunpack.c.l.b16 %v1419
  %v2148 = vunpack.c.h.b16 %v1419
  %v2149 = vunpack.c.l.b16 %v1420
  %v2150 = vunpack.c.h.b16 %v1420
  %v2151 = vunpack.c.l.b16 %v1421
  %v2152 = vunpack.c.h.b16 %v1421
  %v2153 = vunpack.c.l.b16 %v1422
  %v2154 = vunpack.c.h.b16 %v1422
  %v2155 = vunpack.c.l.b16 %v1423
  %v2156 = vunpack.c.h.b16 %v1423
  %v2157 = vunpack.c.l.b16 %v1424
  %v2158 = vunpack.c.h.b16 %v1424
  %v2159 = vunpack.c.l.b16 %v1425
  %v2160 = vunpack.c.h.b16 %v1425
  %v2161 = vunpack.c.l.b16 %v1426
  %v2162 = vunpack.c.h.b16 %v1426
  %v2163 = vunpack.c.l.b16 %v1427
  %v2164 = vunpack.c.h.b16 %v1427
  %v2165 = vunpack.c.l.b16 %v1428
  %v2166 = vunpack.c.h.b16 %v1428
  %v2167 = vunpack.c.l.b16 %v1429
  %v2168 = vunpack.c.h.b16 %v1429
  %v2169 = vunpack.c.l.b16 %v1430
  %v2170 = vunpack.c.h.b16 %v1430
  %v2171 = vunpack.c.l.b16 %v1431
  %v2172 = vunpack.c.h.b16 %v1431
  %v2173 = vunpack.c.l.b16 %v1432
  %v2174 = vunpack.c.h.b16 %v1432
  %v2175 = vunpack.c.l.b16 %v1433
  %v2176 = vunpack.c.h.b16 %v1433
  %v2177 = vunpack.c.l.b16 %v1434
  %v2178 = vunpack.c.h.b16 %v1434
  %v2179 = vunpack.c.l.b16 %v1435
  %v2180 = vunpack.c.h.b16 %v1435
  %v2181 = vunpack.c.l.b16 %v1436
  %v2182 = vunpack.c.h.b16 %v1436
  %v2183 = vunpack.c.l.b16 %v1437
  %v2184 = vunpack.c.h.b16 %v1437
  %v2185 = vunpack.c.l.b16 %v1438
  %v2186 = vunpack.c.h.b16 %v1438
  %v2187 = vunpack.c.l.b16 %v1439
  %v2188 = vunpack.c.h.b16 %v1439
  %v2189 = vunpack.c.l.b16 %v1440
  %v2190 = vunpack.c.h.b16 %v1440
  %v2191 = vunpack.c.l.b16 %v1441
  %v2192 = vunpack.c.h.b16 %v1441
  %v2193 = vunpack.c.l.b16 %v1442
  %v2194 = vunpack.c.h.b16 %v1442
  %v2195 = vunpack.c.l.b16 %v1443
  %v2196 = vunpack.c.h.b16 %v1443
  %v2197 = vunpack.c.l.b16 %v1444
  %v2198 = vunpack.c.h.b16 %v1444
  %v2199 = vunpack.c.l.b16 %v1445
  %v2200 = vunpack.c.h.b16 %v1445
  %v2201 = vunpack.c.l.b16 %v1446
  %v2202 = vunpack.c.h.b16 %v1446
  %v2203 = vunpack.c.l.b16 %v1447
  %v2204 = vunpack.c.h.b16 %v1447
  %v2205 = vunpack.c.l.b16 %v1448
  %v2206 = vunpack.c.h.b16 %v1448
  %v2207 = vunpack.c.l.b16 %v1449
  %v2208 = vunpack.c.h.b16 %v1449
  %v2209 = vunpack.c.l.b16 %v1450
  %v2210 = vunpack.c.h.b16 %v1450
  %v2211 = vunpack.c.l.b16 %v1451
  %v2212 = vunpack.c.h.b16 %v1451
  %v2213 = vunpack.c.l.b16 %v1452
  %v2214 = vunpack.c.h.b16 %v1452
  %v2215 = vunpack.c.l.b16 %v1453
  %v2216 = vunpack.c.h.b16 %v1453
  %v2217 = vunpack.c.l.b16 %v1454
  %v2218 = vunpack.c.h.b16 %v1454
  %v2219 = vunpack.c.l.b16 %v1455
  %v2220 = vunpack.c.h.b16 %v1455
  %v2221 = vunpack.c.l.b16 %v1456
  %v2222 = vunpack.c.h.b16 %v1456
  %v2223 = vunpack.c.l.b16 %v1457
  %v2224 = vunpack.c.h.b16 %v1457
  %v2225 = vunpack.c.l.b16 %v1458
  %v2226 = vunpack.c.h.b16 %v1458
  %v2227 = vunpack.c.l.b16 %v1459
  %v2228 = vunpack.c.h.b16 %v1459
  %v2229 = vunpack.c.l.b16 %v1460
  %v2230 = vunpack.c.h.b16 %v1460
  %v2231 = vunpack.c.l.b16 %v1461
  %v2232 = vunpack.c.h.b16 %v1461
  %v2233 = vunpack.c.l.b16 %v1462
  %v2234 = vunpack.c.h.b16 %v1462
  %v2235 = vunpack.c.l.b16 %v1463
  %v2236 = vunpack.c.h.b16 %v1463
  %v2237 = vunpack.c.l.b16 %v1464
  %v2238 = vunpack.c.h.b16 %v1464
  %v2239 = vunpack.c.l.b16 %v1465
  %v2240 = vunpack.c.h.b16 %v1465
  %v2241 = vunpack.c.l.b16 %v1466
  %v2242 = vunpack.c.h.b16 %v1466
  %v2243 = vunpack.c.l.b16 %v1467
  %v2244 = vunpack.c.h.b16 %v1467
  %v2245 = vunpack.c.l.b16 %v1468
  %v2246 = vunpack.c.h.b16 %v1468
  %v2247 = vunpack.c.l.b16 %v1469
  %v2248 = vunpack.c.h.b16 %v1469
  %v2249 = vunpack.c.l.b16 %v1470
  %v2250 = vunpack.c.h.b16 %v1470
  %v2251 = vunpack.c.l.b16 %v1471
  %v2252 = vunpack.c.h.b16 %v1471
  %v2253 = vunpack.c.l.b16 %v1472
  %v2254 = vunpack.c.h.b16 %v1472
  %v2255 = vunpack.c.l.b16 %v1473
  %v2256 = vunpack.c.h.b16 %v1473
  %v2257 = vunpack.c.l.b16 %v1474
  %v2258 = vunpack.c.h.b16 %v1474
  %v2259 = vunpack.c.l.b16 %v1475
  %v2260 = vunpack.c.h.b16 %v1475
  %v2261 = vunpack.c.l.b16 %v1476
  %v2262 = vunpack.c.h.b16 %v1476
  %v2263 = vunpack.c.l.b16 %v1477
  %v2264 = vunpack.c.h.b16 %v1477
  %v2265 = vunpack.c.l.b16 %v1478
  %v2266 = vunpack.c.h.b16 %v1478
  %v2267 = vunpack.c.l.b16 %v1479
  %v2268 = vunpack.c.h.b16 %v1479
  %v2269 = vunpack.c.l.b16 %v1480
  %v2270 = vunpack.c.h.b16 %v1480
  %v2271 = vunpack.c.l.b16 %v1481
  %v2272 = vunpack.c.h.b16 %v1481
  %v2273 = vunpack.c.l.b16 %v1482
  %v2274 = vunpack.c.h.b16 %v1482
  %v2275 = vunpack.c.l.b16 %v1483
  %v2276 = vunpack.c.h.b16 %v1483
  %v2277 = vunpack.c.l.b16 %v1484
  %v2278 = vunpack.c.h.b16 %v1484
  %v2279 = vunpack.c.l.b16 %v1485
  %v2280 = vunpack.c.h.b16 %v1485
  %v2281 = vunpack.c.l.b16 %v1486
  %v2282 = vunpack.c.h.b16 %v1486
  %v2283 = vunpack.c.l.b16 %v1487
  %v2284 = vunpack.c.h.b16 %v1487
  %v2285 = vunpack.c.l.b16 %v1488
  %v2286 = vunpack.c.h.b16 %v1488
  %v2287 = vunpack.c.l.b16 %v1489
  %v2288 = vunpack.c.h.b16 %v1489
  %v2289 = vunpack.c.l.b16 %v1490
  %v2290 = vunpack.c.h.b16 %v1490
  %v2291 = vunpack.c.l.b16 %v1491
  %v2292 = vunpack.c.h.b16 %v1491
  %v2293 = vunpack.c.l.b16 %v1492
  %v2294 = vunpack.c.h.b16 %v1492
  %v2295 = vunpack.c.l.b16 %v1493
  %v2296 = vunpack.c.h.b16 %v1493
  %v2297 = vunpack.c.l.b16 %v1494
  %v2298 = vunpack.c.h.b16 %v1494
  %v2299 = vunpack.c.l.b16 %v1495
  %v2300 = vunpack.c.h.b16 %v1495
  %v2301 = vunpack.c.l.b16 %v1496
  %v2302 = vunpack.c.h.b16 %v1496
  %v2303 = vunpack.c.l.b16 %v1497
  %v2304 = vunpack.c.h.b16 %v1497
  %v2305 = vunpack.c.l.b16 %v1498
  %v2306 = vunpack.c.h.b16 %v1498
  %v2307 = vunpack.c.l.b16 %v1499
  %v2308 = vunpack.c.h.b16 %v1499
  %v2309 = vunpack.c.l.b16 %v1500
  %v2310 = vunpack.c.h.b16 %v1500
  %v2311 = vunpack.c.l.b16 %v1501
  %v2312 = vunpack.c.h.b16 %v1501
  %v2313 = vunpack.c.l.b16 %v1502
  %v2314 = vunpack.c.h.b16 %v1502
  %v2315 = vunpack.c.l.b16 %v1503
  %v2316 = vunpack.c.h.b16 %v1503
  %v2317 = vunpack.c.l.b16 %v1504
  %v2318 = vunpack.c.h.b16 %v1504
  %v2319 = vunpack.c.l.b16 %v1505
  %v2320 = vunpack.c.h.b16 %v1505
  %v2321 = vunpack.c.l.b16 %v1506
  %v2322 = vunpack.c.h.b16 %v1506
  %v2323 = vunpack.c.l.b16 %v1507
  %v2324 = vunpack.c.h.b16 %v1507
  %v2325 = vunpack.c.l.b16 %v1508
  %v2326 = vunpack.c.h.b16 %v1508
  %v2327 = vunpack.c.l.b16 %v1509
  %v2328 = vunpack.c.h.b16 %v1509
  %v2329 = vunpack.c.l.b16 %v1510
  %v2330 = vunpack.c.h.b16 %v1510
  %v2331 = vunpack.c.l.b16 %v1511
  %v2332 = vunpack.c.h.b16 %v1511
  %v2333 = vunpack.c.l.b16 %v1512
  %v2334 = vunpack.c.h.b16 %v1512
  %v2335 = vunpack.c.l.b16 %v1513
  %v2336 = vunpack.c.h.b16 %v1513
  %v2337 = vunpack.c.l.b16 %v1514
  %v2338 = vunpack.c.h.b16 %v1514
  %v2339 = vunpack.c.l.b16 %v1515
  %v2340 = vunpack.c.h.b16 %v1515
  %v2341 = vunpack.c.l.b16 %v1516
  %v2342 = vunpack.c.h.b16 %v1516
  %v2343 = vunpack.c.l.b16 %v1517
  %v2344 = vunpack.c.h.b16 %v1517
  %v2345 = vunpack.c.l.b16 %v1518
  %v2346 = vunpack.c.h.b16 %v1518
  %v2347 = vunpack.c.l.b16 %v1519
  %v2348 = vunpack.c.h.b16 %v1519
  %v2349 = vunpack.c.l.b16 %v1520
  %v2350 = vunpack.c.h.b16 %v1520
  %v2351 = vunpack.c.l.b16 %v1521
  %v2352 = vunpack.c.h.b16 %v1521
  %v2353 = vunpack.c.l.b16 %v1522
  %v2354 = vunpack.c.h.b16 %v1522
  %v2355 = vunpack.c.l.b16 %v1523
  %v2356 = vunpack.c.h.b16 %v1523
  %v2357 = vunpack.c.l.b16 %v1524
  %v2358 = vunpack.c.h.b16 %v1524
  %v2359 = vunpack.c.l.b16 %v1525
  %v2360 = vunpack.c.h.b16 %v1525
  %v2361 = vunpack.c.l.b16 %v1526
  %v2362 = vunpack.c.h.b16 %v1526
  %v2363 = vunpack.c.l.b16 %v1527
  %v2364 = vunpack.c.h.b16 %v1527
  %v2365 = vunpack.c.l.b16 %v1528
  %v2366 = vunpack.c.h.b16 %v1528
  %v2367 = vunpack.c.l.b16 %v1529
  %v2368 = vunpack.c.h.b16 %v1529
  %v2369 = vunpack.c.l.b16 %v1530
  %v2370 = vunpack.c.h.b16 %v1530
  %v2371 = vunpack.c.l.b16 %v1531
  %v2372 = vunpack.c.h.b16 %v1531
  %v2373 = vunpack.c.l.b16 %v1532
  %v2374 = vunpack.c.h.b16 %v1532
  %v2375 = vunpack.c.l.b16 %v1533
  %v2376 = vunpack.c.h.b16 %v1533
  %v2377 = vunpack.c.l.b16 %v1534
  %v2378 = vunpack.c.h.b16 %v1534
  %v2379 = vunpack.c.l.b16 %v1535
  %v2380 = vunpack.c.h.b16 %v1535
  %v2381 = vunpack.c.l.b16 %v1536
  %v2382 = vunpack.c.h.b16 %v1536
  %v2383 = vunpack.c.l.b16 %v1537
  %v2384 = vunpack.c.h.b16 %v1537
  %v2385 = vunpack.c.l.b16 %v1538
  %v2386 = vunpack.c.h.b16 %v1538
  %v2387 = vunpack.c.l.b16 %v1539
  %v2388 = vunpack.c.h.b16 %v1539
  %v2389 = vunpack.c.l.b16 %v1540
  %v2390 = vunpack.c.h.b16 %v1540
  %v2391 = vunpack.c.l.b16 %v1541
  %v2392 = vunpack.c.h.b16 %v1541
  %v2393 = vunpack.c.l.b16 %v1542
  %v2394 = vunpack.c.h.b16 %v1542
  %v2395 = vunpack.c.l.b16 %v1543
  %v2396 = vunpack.c.h.b16 %v1543
  %v2397 = vunpack.c.l.b16 %v1544
  %v2398 = vunpack.c.h.b16 %v1544
  %v2399 = vunpack.c.l.b16 %v1545
  %v2400 = vunpack.c.h.b16 %v1545
  %v2401 = vunpack.c.l.b16 %v1546
  %v2402 = vunpack.c.h.b16 %v1546
  %v2403 = vunpack.c.l.b16 %v1547
  %v2404 = vunpack.c.h.b16 %v1547
  %v2405 = vunpack.c.l.b16 %v1548
  %v2406 = vunpack.c.h.b16 %v1548
  %v2407 = vunpack.c.l.b16 %v1549
  %v2408 = vunpack.c.h.b16 %v1549
  %v2409 = vunpack.c.l.b16 %v1550
  %v2410 = vunpack.c.h.b16 %v1550
  %v2411 = vunpack.c.l.b16 %v1551
  %v2412 = vunpack.c.h.b16 %v1551
  %v2413 = vunpack.c.l.b16 %v1552
  %v2414 = vunpack.c.h.b16 %v1552
  %v2415 = vunpack.c.l.b16 %v1553
  %v2416 = vunpack.c.h.b16 %v1553
  %v2417 = vunpack.c.l.b16 %v1554
  %v2418 = vunpack.c.h.b16 %v1554
  %v2419 = vunpack.c.l.b16 %v1555
  %v2420 = vunpack.c.h.b16 %v1555
  %v2421 = vunpack.c.l.b16 %v1556
  %v2422 = vunpack.c.h.b16 %v1556
  %v2423 = vunpack.c.l.b16 %v1557
  %v2424 = vunpack.c.h.b16 %v1557
  %v2425 = vunpack.c.l.b16 %v1558
  %v2426 = vunpack.c.h.b16 %v1558
  %v2427 = vunpack.c.l.b16 %v1559
  %v2428 = vunpack.c.h.b16 %v1559
  %v2429 = vunpack.c.l.b16 %v1560
  %v2430 = vunpack.c.h.b16 %v1560
  %v2431 = vunpack.c.l.b16 %v1561
  %v2432 = vunpack.c.h.b16 %v1561
  %v2433 = vunpack.c.l.b16 %v1562
  %v2434 = vunpack.c.h.b16 %v1562
  %v2435 = vunpack.c.l.b16 %v1563
  %v2436 = vunpack.c.h.b16 %v1563
  %v2437 = vunpack.c.l.b16 %v1564
  %v2438 = vunpack.c.h.b16 %v1564
  %v2439 = vunpack.c.l.b16 %v1565
  %v2440 = vunpack.c.h.b16 %v1565
  %v2441 = vunpack.c.l.b16 %v1566
  %v2442 = vunpack.c.h.b16 %v1566
  %v2443 = vunpack.c.l.b16 %v1567
  %v2444 = vunpack.c.h.b16 %v1567
  %v2445 = vunpack.c.l.b16 %v1568
  %v2446 = vunpack.c.h.b16 %v1568
  %v2447 = vunpack.c.l.b16 %v1569
  %v2448 = vunpack.c.h.b16 %v1569
  %v2449 = vunpack.c.l.b16 %v1570
  %v2450 = vunpack.c.h.b16 %v1570
  %v2451 = vunpack.c.l.b16 %v1571
  %v2452 = vunpack.c.h.b16 %v1571
  %v2453 = vunpack.c.l.b16 %v1572
  %v2454 = vunpack.c.h.b16 %v1572
  %v2455 = vunpack.c.l.b16 %v1573
  %v2456 = vunpack.c.h.b16 %v1573
  %v2457 = vunpack.c.l.b16 %v1574
  %v2458 = vunpack.c.h.b16 %v1574
  %v2459 = vunpack.c.l.b16 %v1575
  %v2460 = vunpack.c.h.b16 %v1575
  %v2461 = vunpack.c.l.b16 %v1576
  %v2462 = vunpack.c.h.b16 %v1576
  %v2463 = vunpack.c.l.b16 %v1577
  %v2464 = vunpack.c.h.b16 %v1577
  %v2465 = vunpack.c.l.b16 %v1578
  %v2466 = vunpack.c.h.b16 %v1578
  %v2467 = vunpack.c.l.b16 %v1579
  %v2468 = vunpack.c.h.b16 %v1579
  %v2469 = vunpack.c.l.b16 %v1580
  %v2470 = vunpack.c.h.b16 %v1580
  %v2471 = vunpack.c.l.b16 %v1581
  %v2472 = vunpack.c.h.b16 %v1581
  %v2473 = vunpack.c.l.b16 %v1582
  %v2474 = vunpack.c.h.b16 %v1582
  %v2475 = vunpack.c.l.b16 %v1583
  %v2476 = vunpack.c.h.b16 %v1583
  %v2477 = vunpack.c.l.b16 %v1584
  %v2478 = vunpack.c.h.b16 %v1584
  %v2479 = vunpack.c.l.b16 %v1585
  %v2480 = vunpack.c.h.b16 %v1585
  %v2481 = vunpack.c.l.b16 %v1586
  %v2482 = vunpack.c.h.b16 %v1586
  %v2483 = vunpack.c.l.b16 %v1587
  %v2484 = vunpack.c.h.b16 %v1587
  %v2485 = vunpack.c.l.b16 %v1588
  %v2486 = vunpack.c.h.b16 %v1588
  %v2487 = vunpack.c.l.b16 %v1589
  %v2488 = vunpack.c.h.b16 %v1589
  %v2489 = vunpack.c.l.b16 %v1590
  %v2490 = vunpack.c.h.b16 %v1590
  %v2491 = vunpack.c.l.b16 %v1591
  %v2492 = vunpack.c.h.b16 %v1591
  %v2493 = vunpack.c.l.b16 %v1592
  %v2494 = vunpack.c.h.b16 %v1592
  %v2495 = vunpack.c.l.b16 %v1593
  %v2496 = vunpack.c.h.b16 %v1593
  %v2497 = vunpack.c.l.b16 %v1594
  %v2498 = vunpack.c.h.b16 %v1594
  %v2499 = vunpack.c.l.b16 %v1595
  %v2500 = vunpack.c.h.b16 %v1595
  %v2501 = vunpack.c.l.b16 %v1596
  %v2502 = vunpack.c.h.b16 %v1596
  %v2503 = vunpack.c.l.b16 %v1597
  %v2504 = vunpack.c.h.b16 %v1597
  %v2505 = vunpack.c.l.b16 %v1598
  %v2506 = vunpack.c.h.b16 %v1598
  %v2507 = vunpack.c.l.b16 %v1599
  %v2508 = vunpack.c.h.b16 %v1599
  %v2509 = vunpack.c.l.b16 %v1600
  %v2510 = vunpack.c.h.b16 %v1600
  %v2511 = vunpack.c.l.b16 %v1601
  %v2512 = vunpack.c.h.b16 %v1601
  %v2513 = vunpack.c.l.b16 %v1602
  %v2514 = vunpack.c.h.b16 %v1602
  %v2515 = vunpack.c.l.b16 %v1603
  %v2516 = vunpack.c.h.b16 %v1603
  %v2517 = vunpack.c.l.b16 %v1604
  %v2518 = vunpack.c.h.b16 %v1604
  %v2519 = vunpack.c.l.b16 %v1605
  %v2520 = vunpack.c.h.b16 %v1605
  %v2521 = vunpack.c.l.b16 %v1606
  %v2522 = vunpack.c.h.b16 %v1606
  %v2523 = vunpack.c.l.b16 %v1607
  %v2524 = vunpack.c.h.b16 %v1607
  %v2525 = vunpack.c.l.b16 %v1608
  %v2526 = vunpack.c.h.b16 %v1608
  %v2527 = vunpack.c.l.b16 %v1609
  %v2528 = vunpack.c.h.b16 %v1609
  %v2529 = vunpack.c.l.b16 %v1610
  %v2530 = vunpack.c.h.b16 %v1610
  %v2531 = vunpack.c.l.b16 %v1611
  %v2532 = vunpack.c.h.b16 %v1611
  %v2533 = vunpack.c.l.b16 %v1612
  %v2534 = vunpack.c.h.b16 %v1612
  %v2535 = vunpack.c.l.b16 %v1613
  %v2536 = vunpack.c.h.b16 %v1613
  %v2537 = vunpack.c.l.b16 %v1614
  %v2538 = vunpack.c.h.b16 %v1614
  %v2539 = vunpack.c.l.b16 %v1615
  %v2540 = vunpack.c.h.b16 %v1615
  %v2541 = vunpack.c.l.b16 %v1616
  %v2542 = vunpack.c.h.b16 %v1616
  %v2543 = vunpack.c.l.b16 %v1617
  %v2544 = vunpack.c.h.b16 %v1617
  %v2545 = vunpack.c.l.b16 %v1618
  %v2546 = vunpack.c.h.b16 %v1618
  %v2547 = vunpack.c.l.b16 %v1619
  %v2548 = vunpack.c.h.b16 %v1619
  %v2549 = vunpack.c.l.b16 %v1620
  %v2550 = vunpack.c.h.b16 %v1620
  %v2551 = vunpack.c.l.b16 %v1621
  %v2552 = vunpack.c.h.b16 %v1621
  %v2553 = vunpack.c.l.b16 %v1622
  %v2554 = vunpack.c.h.b16 %v1622
  %v2555 = vunpack.c.l.b16 %v1623
  %v2556 = vunpack.c.h.b16 %v1623
  %v2557 = vunpack.c.l.b16 %v1624
  %v2558 = vunpack.c.h.b16 %v1624
  %v2559 = vunpack.c.l.b16 %v1625
  %v2560 = vunpack.c.h.b16 %v1625
  %v2561 = vunpack.c.l.b16 %v1626
  %v2562 = vunpack.c.h.b16 %v1626
  %v2563 = vunpack.c.l.b16 %v1627
  %v2564 = vunpack.c.h.b16 %v1627
  %v2565 = vunpack.c.l.b16 %v1628
  %v2566 = vunpack.c.h.b16 %v1628
  %v2567 = vunpack.c.l.b16 %v1629
  %v2568 = vunpack.c.h.b16 %v1629
  %v2569 = vunpack.c.l.b16 %v1630
  %v2570 = vunpack.c.h.b16 %v1630
  %v2571 = vunpack.c.l.b16 %v1631
  %v2572 = vunpack.c.h.b16 %v1631
  %v2573 = vunpack.c.l.b16 %v1632
  %v2574 = vunpack.c.h.b16 %v1632
  %v2575 = vunpack.c.l.b16 %v1633
  %v2576 = vunpack.c.h.b16 %v1633
  %v2577 = vunpack.c.l.b16 %v1634
  %v2578 = vunpack.c.h.b16 %v1634
  %v2579 = vunpack.c.l.b16 %v1635
  %v2580 = vunpack.c.h.b16 %v1635
  %v2581 = vunpack.c.l.b16 %v1636
  %v2582 = vunpack.c.h.b16 %v1636
  %v2583 = vunpack.c.l.b16 %v1637
  %v2584 = vunpack.c.h.b16 %v1637
  %v2585 = vunpack.c.l.b16 %v1638
  %v2586 = vunpack.c.h.b16 %v1638
  %v2587 = vunpack.c.l.b16 %v1639
  %v2588 = vunpack.c.h.b16 %v1639
  %v2589 = vunpack.c.l.b16 %v1640
  %v2590 = vunpack.c.h.b16 %v1640
  %v2591 = vunpack.c.l.b16 %v1641
  %v2592 = vunpack.c.h.b16 %v1641
  %v2593 = vunpack.c.l.b16 %v1642
  %v2594 = vunpack.c.h.b16 %v1642
  %v2595 = vunpack.c.l.b16 %v1643
  %v2596 = vunpack.c.h.b16 %v1643
  %v2597 = vunpack.c.l.b16 %v1644
  %v2598 = vunpack.c.h.b16 %v1644
  %v2599 = vunpack.c.l.b16 %v1645
  %v2600 = vunpack.c.h.b16 %v1645
  %v2601 = vunpack.c.l.b16 %v1646
  %v2602 = vunpack.c.h.b16 %v1646
  %v2603 = vunpack.c.l.b16 %v1647
  %v2604 = vunpack.c.h.b16 %v1647
  %v2605 = vunpack.c.l.b16 %v1648
  %v2606 = vunpack.c.h.b16 %v1648
  %v2607 = vunpack.c.l.b16 %v1649
  %v2608 = vunpack.c.h.b16 %v1649
  %v2609 = vunpack.c.l.b16 %v1650
  %v2610 = vunpack.c.h.b16 %v1650
  %v2611 = vunpack.c.l.b16 %v1651
  %v2612 = vunpack.c.h.b16 %v1651
  %v2613 = vunpack.c.l.b16 %v1652
  %v2614 = vunpack.c.h.b16 %v1652
  %v2615 = vunpack.c.l.b16 %v1653
  %v2616 = vunpack.c.h.b16 %v1653
  %v2617 = vunpack.c.l.b16 %v1654
  %v2618 = vunpack.c.h.b16 %v1654
  %v2619 = vunpack.c.l.b16 %v1655
  %v2620 = vunpack.c.h.b16 %v1655
  %v2621 = vunpack.c.l.b16 %v1656
  %v2622 = vunpack.c.h.b16 %v1656
  %v2623 = vunpack.c.l.b16 %v1657
  %v2624 = vunpack.c.h.b16 %v1657
  %v2625 = vunpack.c.l.b16 %v1658
  %v2626 = vunpack.c.h.b16 %v1658
  %v2627 = vunpack.c.l.b16 %v1659
  %v2628 = vunpack.c.h.b16 %v1659
  %v2629 = vunpack.c.l.b16 %v1660
  %v2630 = vunpack.c.h.b16 %v1660
  %v2631 = vunpack.c.l.b16 %v1661
  %v2632 = vunpack.c.h.b16 %v1661
  %v2633 = vunpack.c.l.b16 %v1662
  %v2634 = vunpack.c.h.b16 %v1662
  %v2635 = vunpack.c.l.b16 %v1663
  %v2636 = vunpack.c.h.b16 %v1663
  %v2637 = vunpack.c.l.b16 %v1664
  %v2638 = vunpack.c.h.b16 %v1664
  %v2639 = vunpack.c.l.b16 %v1665
  %v2640 = vunpack.c.h.b16 %v1665
  %v2641 = vunpack.c.l.b16 %v1666
  %v2642 = vunpack.c.h.b16 %v1666
  %v2643 = vunpack.c.l.b16 %v1667
  %v2644 = vunpack.c.h.b16 %v1667
  %v2645 = vunpack.c.l.b16 %v1668
  %v2646 = vunpack.c.h.b16 %v1668
  %v2647 = vunpack.c.l.b16 %v1669
  %v2648 = vunpack.c.h.b16 %v1669
  %v2649 = vunpack.c.l.b16 %v1670
  %v2650 = vunpack.c.h.b16 %v1670
  %v2651 = vunpack.c.l.b16 %v1671
  %v2652 = vunpack.c.h.b16 %v1671
  %v2653 = vunpack.c.l.b16 %v1672
  %v2654 = vunpack.c.h.b16 %v1672
  %v2655 = vunpack.c.l.b16 %v1673
  %v2656 = vunpack.c.h.b16 %v1673
  %v2657 = vunpack.c.l.b16 %v1674
  %v2658 = vunpack.c.h.b16 %v1674
  %v2659 = vunpack.c.l.b16 %v1675
  %v2660 = vunpack.c.h.b16 %v1675
  %v2661 = vunpack.c.l.b16 %v1676
  %v2662 = vunpack.c.h.b16 %v1676
  %v2663 = vunpack.c.l.b16 %v1677
  %v2664 = vunpack.c.h.b16 %v1677
  %v2665 = vunpack.c.l.b16 %v1678
  %v2666 = vunpack.c.h.b16 %v1678
  %v2667 = vunpack.c.l.b16 %v1679
  %v2668 = vunpack.c.h.b16 %v1679
  %v2669 = vunpack.c.l.b16 %v1680
  %v2670 = vunpack.c.h.b16 %v1680
  %v2671 = vunpack.c.l.b16 %v1681
  %v2672 = vunpack.c.h.b16 %v1681
  %v2673 = vunpack.c.l.b16 %v1682
  %v2674 = vunpack.c.h.b16 %v1682
  %v2675 = vunpack.c.l.b16 %v1683
  %v2676 = vunpack.c.h.b16 %v1683
  %v2677 = vunpack.c.l.b16 %v1684
  %v2678 = vunpack.c.h.b16 %v1684
  %v2679 = vunpack.c.l.b16 %v1685
  %v2680 = vunpack.c.h.b16 %v1685
  %v2681 = vunpack.c.l.b16 %v1686
  %v2682 = vunpack.c.h.b16 %v1686
  %v2683 = vunpack.c.l.b16 %v1687
  %v2684 = vunpack.c.h.b16 %v1687
  %v2685 = vunpack.c.l.b16 %v1688
  %v2686 = vunpack.c.h.b16 %v1688
  %v2687 = vunpack.c.l.b16 %v1689
  %v2688 = vunpack.c.h.b16 %v1689
  %v2689 = vunpack.c.l.b16 %v1690
  %v2690 = vunpack.c.h.b16 %v1690
  %v2691 = vunpack.c.l.b16 %v1691
  %v2692 = vunpack.c.h.b16 %v1691
  %v2693 = vunpack.c.l.b16 %v1692
  %v2694 = vunpack.c.h.b16 %v1692
  %v2695 = vunpack.c.l.b16 %v1693
  %v2696 = vunpack.c.h.b16 %v1693
  %v2697 = vunpack.c.l.b16 %v1694
  %v2698 = vunpack.c.h.b16 %v1694
  %v2699 = vunpack.c.l.b16 %v1695
  %v2700 = vunpack.c.h.b16 %v1695
  %v2701 = vunpack.c.l.b16 %v1696
  %v2702 = vunpack.c.h.b16 %v1696
  %v2703 = vunpack.c.l.b16 %v1697
  %v2704 = vunpack.c.h.b16 %v1697
  %v2705 = vunpack.c.l.b16 %v1698
  %v2706 = vunpack.c.h.b16 %v1698
  %v2707 = vunpack.c.l.b16 %v1699
  %v2708 = vunpack.c.h.b16 %v1699
  %v2709 = vunpack.c.l.b16 %v1700
  %v2710 = vunpack.c.h.b16 %v1700
  %v2711 = vunpack.c.l.b16 %v1701
  %v2712 = vunpack.c.h.b16 %v1701
  %v2713 = vunpack.c.l.b16 %v1702
  %v2714 = vunpack.c.h.b16 %v1702
  %v2715 = vunpack.c.l.b16 %v1703
  %v2716 = vunpack.c.h.b16 %v1703
  %v2717 = vunpack.c.l.b16 %v1704
  %v2718 = vunpack.c.h.b16 %v1704
  %v2719 = vunpack.c.l.b16 %v1705
  %v2720 = vunpack.c.h.b16 %v1705
  %v2721 = vunpack.c.l.b16 %v1706
  %v2722 = vunpack.c.h.b16 %v1706
  %v2723 = vunpack.c.l.b16 %v1707
  %v2724 = vunpack.c.h.b16 %v1707
  %v2725 = vunpack.c.l.b16 %v1708
  %v2726 = vunpack.c.h.b16 %v1708
  %v2727 = vunpack.c.l.b16 %v1709
  %v2728 = vunpack.c.h.b16 %v1709
  %v2729 = vunpack.c.l.b16 %v1710
  %v2730 = vunpack.c.h.b16 %v1710
  %v2731 = vunpack.c.l.b16 %v1711
  %v2732 = vunpack.c.h.b16 %v1711
  %v2733 = vunpack.c.l.b16 %v1712
  %v2734 = vunpack.c.h.b16 %v1712
  %v2735 = vunpack.c.l.b16 %v1713
  %v2736 = vunpack.c.h.b16 %v1713
  %v2737 = vunpack.c.l.b16 %v1714
  %v2738 = vunpack.c.h.b16 %v1714
  %v2739 = vunpack.c.l.b16 %v1715
  %v2740 = vunpack.c.h.b16 %v1715
  %v2741 = vunpack.c.l.b16 %v1716
  %v2742 = vunpack.c.h.b16 %v1716
  %v2743 = vunpack.c.l.b16 %v1717
  %v2744 = vunpack.c.h.b16 %v1717
  %v2745 = vunpack.c.l.b16 %v1718
  %v2746 = vunpack.c.h.b16 %v1718
  %v2747 = vunpack.c.l.b16 %v1719
  %v2748 = vunpack.c.h.b16 %v1719
  %v2749 = vunpack.c.l.b16 %v1720
  %v2750 = vunpack.c.h.b16 %v1720
  %v2751 = vunpack.c.l.b16 %v1721
  %v2752 = vunpack.c.h.b16 %v1721
  %v2753 = vunpack.c.l.b16 %v1722
  %v2754 = vunpack.c.h.b16 %v1722
  %v2755 = vunpack.c.l.b16 %v1723
  %v2756 = vunpack.c.h.b16 %v1723
  %v2757 = vunpack.c.l.b16 %v1724
  %v2758 = vunpack.c.h.b16 %v1724
  %v2759 = vunpack.c.l.b16 %v1725
  %v2760 = vunpack.c.h.b16 %v1725
  %v2761 = vunpack.c.l.b16 %v1726
  %v2762 = vunpack.c.h.b16 %v1726
  %v2763 = vunpack.c.l.b16 %v1727
  %v2764 = vunpack.c.h.b16 %v1727
  %v2765 = vunpack.c.l.b16 %v1728
  %v2766 = vunpack.c.h.b16 %v1728
  %v2767 = vunpack.c.l.b16 %v1729
  %v2768 = vunpack.c.h.b16 %v1729
  %v2769 = vunpack.c.l.b16 %v1730
  %v2770 = vunpack.c.h.b16 %v1730
  %v2771 = vunpack.c.l.b16 %v1731
  %v2772 = vunpack.c.h.b16 %v1731
  %v2773 = vunpack.c.l.b16 %v1732
  %v2774 = vunpack.c.h.b16 %v1732
  %v2775 = vunpack.c.l.b16 %v1733
  %v2776 = vunpack.c.h.b16 %v1733
  %v2777 = vunpack.c.l.b16 %v1734
  %v2778 = vunpack.c.h.b16 %v1734
  %v2779 = vunpack.c.l.b16 %v1735
  %v2780 = vunpack.c.h.b16 %v1735
  %v2781 = vunpack.c.l.b16 %v1736
  %v2782 = vunpack.c.h.b16 %v1736
  %v2783 = vunpack.c.l.b16 %v1737
  %v2784 = vunpack.c.h.b16 %v1737
  %v2785 = vunpack.c.l.b16 %v1738
  %v2786 = vunpack.c.h.b16 %v1738
  %v2787 = vunpack.c.l.b16 %v1739
  %v2788 = vunpack.c.h.b16 %v1739
  %v2789 = vunpack.c.l.b16 %v1740
  %v2790 = vunpack.c.h.b16 %v1740
  %v2791 = vunpack.c.l.b16 %v1741
  %v2792 = vunpack.c.h.b16 %v1741
  %v2793 = vunpack.c.l.b16 %v1742
  %v2794 = vunpack.c.h.b16 %v1742
  %v2795 = vunpack.c.l.b16 %v1743
  %v2796 = vunpack.c.h.b16 %v1743
  %v2797 = vunpack.c.l.b16 %v1744
  %v2798 = vunpack.c.h.b16 %v1744
  %v2799 = vunpack.c.l.b16 %v1745
  %v2800 = vunpack.c.h.b16 %v1745
  %v2801 = vunpack.c.l.b16 %v1746
  %v2802 = vunpack.c.h.b16 %v1746
  %v2803 = vunpack.c.l.b16 %v1747
  %v2804 = vunpack.c.h.b16 %v1747
  %v2805 = vunpack.c.l.b16 %v1748
  %v2806 = vunpack.c.h.b16 %v1748
  %v2807 = vunpack.c.l.b16 %v1749
  %v2808 = vunpack.c.h.b16 %v1749
  %v2809 = vunpack.c.l.b16 %v1750
  %v2810 = vunpack.c.h.b16 %v1750
  %v2811 = vunpack.c.l.b16 %v1751
  %v2812 = vunpack.c.h.b16 %v1751
  %v2813 = vunpack.c.l.b16 %v1752
  %v2814 = vunpack.c.h.b16 %v1752
  %v2815 = vunpack.c.l.b16 %v1753
  %v2816 = vunpack.c.h.b16 %v1753
  %v2817 = vunpack.c.l.b16 %v1754
  %v2818 = vunpack.c.h.b16 %v1754
  %v2819 = vunpack.c.l.b16 %v1755
  %v2820 = vunpack.c.h.b16 %v1755
  %v2821 = vunpack.c.l.b16 %v1756
  %v2822 = vunpack.c.h.b16 %v1756
  %v2823 = vunpack.c.l.b16 %v1757
  %v2824 = vunpack.c.h.b16 %v1757
  %v2825 = vunpack.c.l.b16 %v1758
  %v2826 = vunpack.c.h.b16 %v1758
  %v2827 = vunpack.c.l.b16 %v1759
  %v2828 = vunpack.c.h.b16 %v1759
  %v2829 = vunpack.c.l.b16 %v1760
  %v2830 = vunpack.c.h.b16 %v1760
  %v2831 = vunpack.c.l.b16 %v1761
  %v2832 = vunpack.c.h.b16 %v1761
  %v2833 = vunpack.c.l.b16 %v1762
  %v2834 = vunpack.c.h.b16 %v1762
  %v2835 = vunpack.c.l.b16 %v1763
  %v2836 = vunpack.c.h.b16 %v1763
  %v2837 = vunpack.c.l.b16 %v1764
  %v2838 = vunpack.c.h.b16 %v1764
  %v2839 = vunpack.c.l.b16 %v1765
  %v2840 = vunpack.c.h.b16 %v1765
  %v2841 = vunpack.c.l.b16 %v1766
  %v2842 = vunpack.c.h.b16 %v1766
  %v2843 = vunpack.c.l.b16 %v1767
  %v2844 = vunpack.c.h.b16 %v1767
  %v2845 = vunpack.c.l.b16 %v1768
  %v2846 = vunpack.c.h.b16 %v1768
  %v2847 = vunpack.c.l.b16 %v1769
  %v2848 = vunpack.c.h.b16 %v1769
  %v2849 = vunpack.c.l.b16 %v1770
  %v2850 = vunpack.c.h.b16 %v1770
  %v2851 = vpack.c.b16 %v2135, %v2131
  %v2852 = vpack.c.b16 %v2136, %v2132
  %v2853 = vpack.c.b16 %v2137, %v2133
  %v2854 = vpack.c.b16 %v2138, %v2134
  %v2855 = vpack.c.b16 %v2143, %v2139
  %v2856 = vpack.c.b16 %v2144, %v2140
  %v2857 = vpack.c.b16 %v2145, %v2141
  %v2858 = vpack.c.b16 %v2146, %v2142
  %v2859 = vpack.c.b16 %v2151, %v2147
  %v2860 = vpack.c.b16 %v2152, %v2148
  %v2861 = vpack.c.b16 %v2153, %v2149
  %v2862 = vpack.c.b16 %v2154, %v2150
  %v2863 = vpack.c.b16 %v2159, %v2155
  %v2864 = vpack.c.b16 %v2160, %v2156
  %v2865 = vpack.c.b16 %v2161, %v2157
  %v2866 = vpack.c.b16 %v2162, %v2158
  %v2867 = vpack.c.b16 %v2167, %v2163
  %v2868 = vpack.c.b16 %v2168, %v2164
  %v2869 = vpack.c.b16 %v2169, %v2165
  %v2870 = vpack.c.b16 %v2170, %v2166
  %v2871 = vpack.c.b16 %v2175, %v2171
  %v2872 = vpack.c.b16 %v2176, %v2172
  %v2873 = vpack.c.b16 %v2177, %v2173
  %v2874 = vpack.c.b16 %v2178, %v2174
  %v2875 = vpack.c.b16 %v2183, %v2179
  %v2876 = vpack.c.b16 %v2184, %v2180
  %v2877 = vpack.c.b16 %v2185, %v2181
  %v2878 = vpack.c.b16 %v2186, %v2182
  %v2879 = vpack.c.b16 %v2191, %v2187
  %v2880 = vpack.c.b16 %v2192, %v2188
  %v2881 = vpack.c.b16 %v2193, %v2189
  %v2882 = vpack.c.b16 %v2194, %v2190
  %v2883 = vpack.c.b16 %v2199, %v2195
  %v2884 = vpack.c.b16 %v2200, %v2196
  %v2885 = vpack.c.b16 %v2201, %v2197
  %v2886 = vpack.c.b16 %v2202, %v2198
  %v2887 = vpack.c.b16 %v2207, %v2203
  %v2888 = vpack.c.b16 %v2208, %v2204
  %v2889 = vpack.c.b16 %v2209, %v2205
  %v2890 = vpack.c.b16 %v2210, %v2206
  %v2891 = vpack.c.b16 %v2215, %v2211
  %v2892 = vpack.c.b16 %v2216, %v2212
  %v2893 = vpack.c.b16 %v2217, %v2213
  %v2894 = vpack.c.b16 %v2218, %v2214
  %v2895 = vpack.c.b16 %v2223, %v2219
  %v2896 = vpack.c.b16 %v2224, %v2220
  %v2897 = vpack.c.b16 %v2225, %v2221
  %v2898 = vpack.c.b16 %v2226, %v2222
  %v2899 = vpack.c.b16 %v2231, %v2227
  %v2900 = vpack.c.b16 %v2232, %v2228
  %v2901 = vpack.c.b16 %v2233, %v2229
  %v2902 = vpack.c.b16 %v2234, %v2230
  %v2903 = vpack.c.b16 %v2239, %v2235
  %v2904 = vpack.c.b16 %v2240, %v2236
  %v2905 = vpack.c.b16 %v2241, %v2237
  %v2906 = vpack.c.b16 %v2242, %v2238
  %v2907 = vpack.c.b16 %v2247, %v2243
  %v2908 = vpack.c.b16 %v2248, %v2244
  %v2909 = vpack.c.b16 %v2249, %v2245
  %v2910 = vpack.c.b16 %v2250, %v2246
  %v2911 = vpack.c.b16 %v2255, %v2251
  %v2912 = vpack.c.b16 %v2256, %v2252
  %v2913 = vpack.c.b16 %v2257, %v2253
  %v2914 = vpack.c.b16 %v2258, %v2254
  %v2915 = vpack.c.b16 %v2263, %v2259
  %v2916 = vpack.c.b16 %v2264, %v2260
  %v2917 = vpack.c.b16 %v2265, %v2261
  %v2918 = vpack.c.b16 %v2266, %v2262
  %v2919 = vpack.c.b16 %v2271, %v2267
  %v2920 = vpack.c.b16 %v2272, %v2268
  %v2921 = vpack.c.b16 %v2273, %v2269
  %v2922 = vpack.c.b16 %v2274, %v2270
  %v2923 = vpack.c.b16 %v2279, %v2275
  %v2924 = vpack.c.b16 %v2280, %v2276
  %v2925 = vpack.c.b16 %v2281, %v2277
  %v2926 = vpack.c.b16 %v2282, %v2278
  %v2927 = vpack.c.b16 %v2287, %v2283
  %v2928 = vpack.c.b16 %v2288, %v2284
  %v2929 = vpack.c.b16 %v2289, %v2285
  %v2930 = vpack.c.b16 %v2290, %v2286
  %v2931 = vpack.c.b16 %v2295, %v2291
  %v2932 = vpack.c.b16 %v2296, %v2292
  %v2933 = vpack.c.b16 %v2297, %v2293
  %v2934 = vpack.c.b16 %v2298, %v2294
  %v2935 = vpack.c.b16 %v2303, %v2299
  %v2936 = vpack.c.b16 %v2304, %v2300
  %v2937 = vpack.c.b16 %v2305, %v2301
  %v2938 = vpack.c.b16 %v2306, %v2302
  %v2939 = vpack.c.b16 %v2311, %v2307
  %v2940 = vpack.c.b16 %v2312, %v2308
  %v2941 = vpack.c.b16 %v2313, %v2309
  %v2942 = vpack.c.b16 %v2314, %v2310
  %v2943 = vpack.c.b16 %v2319, %v2315
  %v2944 = vpack.c.b16 %v2320, %v2316
  %v2945 = vpack.c.b16 %v2321, %v2317
  %v2946 = vpack.c.b16 %v2322, %v2318
  %v2947 = vpack.c.b16 %v2327, %v2323
  %v2948 = vpack.c.b16 %v2328, %v2324
  %v2949 = vpack.c.b16 %v2329, %v2325
  %v2950 = vpack.c.b16 %v2330, %v2326
  %v2951 = vpack.c.b16 %v2335, %v2331
  %v2952 = vpack.c.b16 %v2336, %v2332
  %v2953 = vpack.c.b16 %v2337, %v2333
  %v2954 = vpack.c.b16 %v2338, %v2334
  %v2955 = vpack.c.b16 %v2343, %v2339
  %v2956 = vpack.c.b16 %v2344, %v2340
  %v2957 = vpack.c.b16 %v2345, %v2341
  %v2958 = vpack.c.b16 %v2346, %v2342
  %v2959 = vpack.c.b16 %v2351, %v2347
  %v2960 = vpack.c.b16 %v2352, %v2348
  %v2961 = vpack.c.b16 %v2353, %v2349
  %v2962 = vpack.c.b16 %v2354, %v2350
  %v2963 = vpack.c.b16 %v2359, %v2355
  %v2964 = vpack.c.b16 %v2360, %v2356
  %v2965 = vpack.c.b16 %v2361, %v2357
  %v2966 = vpack.c.b16 %v2362, %v2358
  %v2967 = vpack.c.b16 %v2367, %v2363
  %v2968 = vpack.c.b16 %v2368, %v2364
  %v2969 = vpack.c.b16 %v2369, %v2365
  %v2970 = vpack.c.b16 %v2370, %v2366
  %v2971 = vpack.c.b16 %v2375, %v2371
  %v2972 = vpack.c.b16 %v2376, %v2372
  %v2973 = vpack.c.b16 %v2377, %v2373
  %v2974 = vpack.c.b16 %v2378, %v2374
  %v2975 = vpack.c.b16 %v2383, %v2379
  %v2976 = vpack.c.b16 %v2384, %v2380
  %v2977 = vpack.c.b16 %v2385, %v2381
  %v2978 = vpack.c.b16 %v2386, %v2382
  %v2979 = vpack.c.b16 %v2391, %v2387
  %v2980 = vpack.c.b16 %v2392, %v2388
  %v2981 = vpack.c.b16 %v2393, %v2389
  %v2982 = vpack.c.b16 %v2394, %v2390
  %v2983 = vpack.c.b16 %v2399, %v2395
  %v2984 = vpack.c.b16 %v2400, %v2396
  %v2985 = vpack.c.b16 %v2401, %v2397
  %v2986 = vpack.c.b16 %v2402, %v2398
  %v2987 = vpack.c.b16 %v2407, %v2403
  %v2988 = vpack.c.b16 %v2408, %v2404
  %v2989 = vpack.c.b16 %v2409, %v2405
  %v2990 = vpack.c.b16 %v2410, %v2406
  %v2991 = vpack.c.b16 %v2415, %v2411
  %v2992 = vpack.c.b16 %v2416, %v2412
  %v2993 = vpack.c.b16 %v2417, %v2413
  %v2994 = vpack.c.b16 %v2418, %v2414
  %v2995 = vpack.c.b16 %v2423, %v2419
  %v2996 = vpack.c.b16 %v2424, %v2420
  %v2997 = vpack.c.b16 %v2425, %v2421
  %v2998 = vpack.c.b16 %v2426, %v2422
  %v2999 = vpack.c.b16 %v2431, %v2427
  %v3000 = vpack.c.b16 %v2432, %v2428
  %v3001 = vpack.c.b16 %v2433, %v2429
  %v3002 = vpack.c.b16 %v2434, %v2430
  %v3003 = vpack.c.b16 %v2439, %v2435
  %v3004 = vpack.c.b16 %v2440, %v2436
  %v3005 = vpack.c.b16 %v2441, %v2437
  %v3006 = vpack.c.b16 %v2442, %v2438
  %v3007 = vpack.c.b16 %v2447, %v2443
  %v3008 = vpack.c.b16 %v2448, %v2444
  %v3009 = vpack.c.b16 %v2449, %v2445
  %v3010 = vpack.c.b16 %v2450, %v2446
  %v3011 = vpack.c.b16 %v2455, %v2451
  %v3012 = vpack.c.b16 %v2456, %v2452
  %v3013 = vpack.c.b16 %v2457, %v2453
  %v3014 = vpack.c.b16 %v2458, %v2454
  %v3015 = vpack.c.b16 %v2463, %v2459
  %v3016 = vpack.c.b16 %v2464, %v2460
  %v3017 = vpack.c.b16 %v2465, %v2461
  %v3018 = vpack.c.b16 %v2466, %v2462
  %v3019 = vpack.c.b16 %v2471, %v2467
  %v3020 = vpack.c.b16 %v2472, %v2468
  %v3021 = vpack.c.b16 %v2473, %v2469
  %v3022 = vpack.c.b16 %v2474, %v2470
  %v3023 = vpack.c.b16 %v2479, %v2475
  %v3024 = vpack.c.b16 %v2480, %v2476
  %v3025 = vpack.c.b16 %v2481, %v2477
  %v3026 = vpack.c.b16 %v2482, %v2478
  %v3027 = vpack.c.b16 %v2487, %v2483
  %v3028 = vpack.c.b16 %v2488, %v2484
  %v3029 = vpack.c.b16 %v2489, %v2485
  %v3030 = vpack.c.b16 %v2490, %v2486
  %v3031 = vpack.c.b16 %v2495, %v2491
  %v3032 = vpack.c.b16 %v2496, %v2492
  %v3033 = vpack.c.b16 %v2497, %v2493
  %v3034 = vpack.c.b16 %v2498, %v2494
  %v3035 = vpack.c.b16 %v2503, %v2499
  %v3036 = vpack.c.b16 %v2504, %v2500
  %v3037 = vpack.c.b16 %v2505, %v2501
  %v3038 = vpack.c.b16 %v2506, %v2502
  %v3039 = vpack.c.b16 %v2511, %v2507
  %v3040 = vpack.c.b16 %v2512, %v2508
  %v3041 = vpack.c.b16 %v2513, %v2509
  %v3042 = vpack.c.b16 %v2514, %v2510
  %v3043 = vpack.c.b16 %v2519, %v2515
  %v3044 = vpack.c.b16 %v2520, %v2516
  %v3045 = vpack.c.b16 %v2521, %v2517
  %v3046 = vpack.c.b16 %v2522, %v2518
  %v3047 = vpack.c.b16 %v2527, %v2523
  %v3048 = vpack.c.b16 %v2528, %v2524
  %v3049 = vpack.c.b16 %v2529, %v2525
  %v3050 = vpack.c.b16 %v2530, %v2526
  %v3051 = vpack.c.b16 %v2535, %v2531
  %v3052 = vpack.c.b16 %v2536, %v2532
  %v3053 = vpack.c.b16 %v2537, %v2533
  %v3054 = vpack.c.b16 %v2538, %v2534
  %v3055 = vpack.c.b16 %v2543, %v2539
  %v3056 = vpack.c.b16 %v2544, %v2540
  %v3057 = vpack.c.b16 %v2545, %v2541
  %v3058 = vpack.c.b16 %v2546, %v2542
  %v3059 = vpack.c.b16 %v2551, %v2547
  %v3060 = vpack.c.b16 %v2552, %v2548
  %v3061 = vpack.c.b16 %v2553, %v2549
  %v3062 = vpack.c.b16 %v2554, %v2550
  %v3063 = vpack.c.b16 %v2559, %v2555
  %v3064 = vpack.c.b16 %v2560, %v2556
  %v3065 = vpack.c.b16 %v2561, %v2557
  %v3066 = vpack.c.b16 %v2562, %v2558
  %v3067 = vpack.c.b16 %v2567, %v2563
  %v3068 = vpack.c.b16 %v2568, %v2564
  %v3069 = vpack.c.b16 %v2569, %v2565
  %v3070 = vpack.c.b16 %v2570, %v2566
  %v3071 = vpack.c.b16 %v2575, %v2571
  %v3072 = vpack.c.b16 %v2576, %v2572
  %v3073 = vpack.c.b16 %v2577, %v2573
  %v3074 = vpack.c.b16 %v2578, %v2574
  %v3075 = vpack.c.b16 %v2583, %v2579
  %v3076 = vpack.c.b16 %v2584, %v2580
  %v3077 = vpack.c.b16 %v2585, %v2581
  %v3078 = vpack.c.b16 %v2586, %v2582
  %v3079 = vpack.c.b16 %v2591, %v2587
  %v3080 = vpack.c.b16 %v2592, %v2588
  %v3081 = vpack.c.b16 %v2593, %v2589
  %v3082 = vpack.c.b16 %v2594, %v2590
  %v3083 = vpack.c.b16 %v2599, %v2595
  %v3084 = vpack.c.b16 %v2600, %v2596
  %v3085 = vpack.c.b16 %v2601, %v2597
  %v3086 = vpack.c.b16 %v2602, %v2598
  %v3087 = vpack.c.b16 %v2607, %v2603
  %v3088 = vpack.c.b16 %v2608, %v2604
  %v3089 = vpack.c.b16 %v2609, %v2605
  %v3090 = vpack.c.b16 %v2610, %v2606
  %v3091 = vpack.c.b16 %v2615, %v2611
  %v3092 = vpack.c.b16 %v2616, %v2612
  %v3093 = vpack.c.b16 %v2617, %v2613
  %v3094 = vpack.c.b16 %v2618, %v2614
  %v3095 = vpack.c.b16 %v2623, %v2619
  %v3096 = vpack.c.b16 %v2624, %v2620
  %v3097 = vpack.c.b16 %v2625, %v2621
  %v3098 = vpack.c.b16 %v2626, %v2622
  %v3099 = vpack.c.b16 %v2631, %v2627
  %v3100 = vpack.c.b16 %v2632, %v2628
  %v3101 = vpack.c.b16 %v2633, %v2629
  %v3102 = vpack.c.b16 %v2634, %v2630
  %v3103 = vpack.c.b16 %v2639, %v2635
  %v3104 = vpack.c.b16 %v2640, %v2636
  %v3105 = vpack.c.b16 %v2641, %v2637
  %v3106 = vpack.c.b16 %v2642, %v2638
  %v3107 = vpack.c.b16 %v2647, %v2643
  %v3108 = vpack.c.b16 %v2648, %v2644
  %v3109 = vpack.c.b16 %v2649, %v2645
  %v3110 = vpack.c.b16 %v2650, %v2646
  %v3111 = vpack.c.b16 %v2655, %v2651
  %v3112 = vpack.c.b16 %v2656, %v2652
  %v3113 = vpack.c.b16 %v2657, %v2653
  %v3114 = vpack.c.b16 %v2658, %v2654
  %v3115 = vpack.c.b16 %v2663, %v2659
  %v3116 = vpack.c.b16 %v2664, %v2660
  %v3117 = vpack.c.b16 %v2665, %v2661
  %v3118 = vpack.c.b16 %v2666, %v2662
  %v3119 = vpack.c.b16 %v2671, %v2667
  %v3120 = vpack.c.b16 %v2672, %v2668
  %v3121 = vpack.c.b16 %v2673, %v2669
  %v3122 = vpack.c.b16 %v2674, %v2670
  %v3123 = vpack.c.b16 %v2679, %v2675
  %v3124 = vpack.c.b16 %v2680, %v2676
  %v3125 = vpack.c.b16 %v2681, %v2677
  %v3126 = vpack.c.b16 %v2682, %v2678
  %v3127 = vpack.c.b16 %v2687, %v2683
  %v3128 = vpack.c.b16 %v2688, %v2684
  %v3129 = vpack.c.b16 %v2689, %v2685
  %v3130 = vpack.c.b16 %v2690, %v2686
  %v3131 = vpack.c.b16 %v2695, %v2691
  %v3132 = vpack.c.b16 %v2696, %v2692
  %v3133 = vpack.c.b16 %v2697, %v2693
  %v3134 = vpack.c.b16 %v2698, %v2694
  %v3135 = vpack.c.b16 %v2703, %v2699
  %v3136 = vpack.c.b16 %v2704, %v2700
  %v3137 = vpack.c.b16 %v2705, %v2701
  %v3138 = vpack.c.b16 %v2706, %v2702
  %v3139 = vpack.c.b16 %v2711, %v2707
  %v3140 = vpack.c.b16 %v2712, %v2708
  %v3141 = vpack.c.b16 %v2713, %v2709
  %v3142 = vpack.c.b16 %v2714, %v2710
  %v3143 = vpack.c.b16 %v2719, %v2715
  %v3144 = vpack.c.b16 %v2720, %v2716
  %v3145 = vpack.c.b16 %v2721, %v2717
  %v3146 = vpack.c.b16 %v2722, %v2718
  %v3147 = vpack.c.b16 %v2727, %v2723
  %v3148 = vpack.c.b16 %v2728, %v2724
  %v3149 = vpack.c.b16 %v2729, %v2725
  %v3150 = vpack.c.b16 %v2730, %v2726
  %v3151 = vpack.c.b16 %v2735, %v2731
  %v3152 = vpack.c.b16 %v2736, %v2732
  %v3153 = vpack.c.b16 %v2737, %v2733
  %v3154 = vpack.c.b16 %v2738, %v2734
  %v3155 = vpack.c.b16 %v2743, %v2739
  %v3156 = vpack.c.b16 %v2744, %v2740
  %v3157 = vpack.c.b16 %v2745, %v2741
  %v3158 = vpack.c.b16 %v2746, %v2742
  %v3159 = vpack.c.b16 %v2751, %v2747
  %v3160 = vpack.c.b16 %v2752, %v2748
  %v3161 = vpack.c.b16 %v2753, %v2749
  %v3162 = vpack.c.b16 %v2754, %v2750
  %v3163 = vpack.c.b16 %v2759, %v2755
  %v3164 = vpack.c.b16 %v2760, %v2756
  %v3165 = vpack.c.b16 %v2761, %v2757
  %v3166 = vpack.c.b16 %v2762, %v2758
  %v3167 = vpack.c.b16 %v2767, %v2763
  %v3168 = vpack.c.b16 %v2768, %v2764
  %v3169 = vpack.c.b16 %v2769, %v2765
  %v3170 = vpack.c.b16 %v2770, %v2766
  %v3171 = vpack.c.b16 %v2775, %v2771
  %v3172 = vpack.c.b16 %v2776, %v2772
  %v3173 = vpack.c.b16 %v2777, %v2773
  %v3174 = vpack.c.b16 %v2778, %v2774
  %v3175 = vpack.c.b16 %v2783, %v2779
  %v3176 = vpack.c.b16 %v2784, %v2780
  %v3177 = vpack.c.b16 %v2785, %v2781
  %v3178 = vpack.c.b16 %v2786, %v2782
  %v3179 = vpack.c.b16 %v2791, %v2787
  %v3180 = vpack.c.b16 %v2792, %v2788
  %v3181 = vpack.c.b16 %v2793, %v2789
  %v3182 = vpack.c.b16 %v2794, %v2790
  %v3183 = vpack.c.b16 %v2799, %v2795
  %v3184 = vpack.c.b16 %v2800, %v2796
  %v3185 = vpack.c.b16 %v2801, %v2797
  %v3186 = vpack.c.b16 %v2802, %v2798
  %v3187 = vpack.c.b16 %v2807, %v2803
  %v3188 = vpack.c.b16 %v2808, %v2804
  %v3189 = vpack.c.b16 %v2809, %v2805
  %v3190 = vpack.c.b16 %v2810, %v2806
  %v3191 = vpack.c.b16 %v2815, %v2811
  %v3192 = vpack.c.b16 %v2816, %v2812
  %v3193 = vpack.c.b16 %v2817, %v2813
  %v3194 = vpack.c.b16 %v2818, %v2814
  %v3195 = vpack.c.b16 %v2823, %v2819
  %v3196 = vpack.c.b16 %v2824, %v2820
  %v3197 = vpack.c.b16 %v2825, %v2821
  %v3198 = vpack.c.b16 %v2826, %v2822
  %v3199 = vpack.c.b16 %v2831, %v2827
  %v3200 = vpack.c.b16 %v2832, %v2828
  %v3201 = vpack.c.b16 %v2833, %v2829
  %v3202 = vpack.c.b16 %v2834, %v2830
  %v3203 = vpack.c.b16 %v2839, %v2835
  %v3204 = vpack.c.b16 %v2840, %v2836
  %v3205 = vpack.c.b16 %v2841, %v2837
  %v3206 = vpack.c.b16 %v2842, %v2838
  %v3207 = vpack.c.b16 %v2847, %v2843
  %v3208 = vpack.c.b16 %v2848, %v2844
  %v3209 = vpack.c.b16 %v2849, %v2845
  %v3210 = vpack.c.b16 %v2850, %v2846
  %v3572 = vsel %vm23, %v1398, 0
  %v3575 = vsel %vm23, %v1410, 0
  %3577 = vmatpush.bf16.msra.mxu0 %v2879
  %3578 = vmatpush.bf16.msra.mxu0 %v2875
  %3579 = vmatpush.bf16.msra.mxu0 %v2871
  %3580 = vmatpush.bf16.msra.mxu0 %v2867
  %3581 = vmatpush.bf16.msra.mxu0 %v2863
  %3582 = vmatpush.bf16.msra.mxu0 %v2859
  %3583 = vmatpush.bf16.msra.mxu0 %v2855
  %3584 = vmatpush.bf16.msra.mxu0 %v2851
  %3585 = vmatmul.bf16.gmra.mxu0 %v1387
  %v3586 = vpop.f32.mrf.mxu0
  %v3587 = vadd.f32 0.0, %v3586
  %v3588 = vpop.f32.mrf.mxu0
  %v3589 = vadd.f32 0.0, %v3588
  %3590 = vmatmul.bf16.gmra.mxu0 %v1399
  %v3591 = vpop.f32.mrf.mxu0
  %v3592 = vadd.f32 0.0, %v3591
  %v3593 = vpop.f32.mrf.mxu0
  %v3594 = vadd.f32 0.0, %v3593
  %3595 = vdwg.mxu0
  %3596 = vmatpush.bf16.msra.mxu0 %v2911
  %3597 = vmatpush.bf16.msra.mxu0 %v2907
  %3598 = vmatpush.bf16.msra.mxu0 %v2903
  %3599 = vmatpush.bf16.msra.mxu0 %v2899
  %3600 = vmatpush.bf16.msra.mxu0 %v2895
  %3601 = vmatpush.bf16.msra.mxu0 %v2891
  %3602 = vmatpush.bf16.msra.mxu0 %v2887
  %3603 = vmatpush.bf16.msra.mxu0 %v2883
  %3604 = vmatmul.bf16.gmra.mxu0 %v1388
  %v3605 = vpop.f32.mrf.mxu0
  %v3606 = vadd.f32 %v3587, %v3605
  %v3607 = vpop.f32.mrf.mxu0
  %v3608 = vadd.f32 %v3589, %v3607
  %3609 = vmatmul.bf16.gmra.mxu0 %v1400
  %v3610 = vpop.f32.mrf.mxu0
  %v3611 = vadd.f32 %v3592, %v3610
  %v3612 = vpop.f32.mrf.mxu0
  %v3613 = vadd.f32 %v3594, %v3612
  %3614 = vdwg.mxu0
  %3615 = vmatpush.bf16.msra.mxu0 %v2943
  %3616 = vmatpush.bf16.msra.mxu0 %v2939
  %3617 = vmatpush.bf16.msra.mxu0 %v2935
  %3618 = vmatpush.bf16.msra.mxu0 %v2931
  %3619 = vmatpush.bf16.msra.mxu0 %v2927
  %3620 = vmatpush.bf16.msra.mxu0 %v2923
  %3621 = vmatpush.bf16.msra.mxu0 %v2919
  %3622 = vmatpush.bf16.msra.mxu0 %v2915
  %3623 = vmatmul.bf16.gmra.mxu0 %v1389
  %v3624 = vpop.f32.mrf.mxu0
  %v3625 = vadd.f32 %v3606, %v3624
  %v3626 = vpop.f32.mrf.mxu0
  %v3627 = vadd.f32 %v3608, %v3626
  %3628 = vmatmul.bf16.gmra.mxu0 %v1401
  %v3629 = vpop.f32.mrf.mxu0
  %v3630 = vadd.f32 %v3611, %v3629
  %v3631 = vpop.f32.mrf.mxu0
  %v3632 = vadd.f32 %v3613, %v3631
  %3633 = vdwg.mxu0
  %3634 = vmatpush.bf16.msra.mxu0 %v2975
  %3635 = vmatpush.bf16.msra.mxu0 %v2971
  %3636 = vmatpush.bf16.msra.mxu0 %v2967
  %3637 = vmatpush.bf16.msra.mxu0 %v2963
  %3638 = vmatpush.bf16.msra.mxu0 %v2959
  %3639 = vmatpush.bf16.msra.mxu0 %v2955
  %3640 = vmatpush.bf16.msra.mxu0 %v2951
  %3641 = vmatpush.bf16.msra.mxu0 %v2947
  %3642 = vmatmul.bf16.gmra.mxu0 %v1390
  %v3643 = vpop.f32.mrf.mxu0
  %v3644 = vadd.f32 %v3625, %v3643
  %v3645 = vpop.f32.mrf.mxu0
  %v3646 = vadd.f32 %v3627, %v3645
  %3647 = vmatmul.bf16.gmra.mxu0 %v1402
  %v3648 = vpop.f32.mrf.mxu0
  %v3649 = vadd.f32 %v3630, %v3648
  %v3650 = vpop.f32.mrf.mxu0
  %v3651 = vadd.f32 %v3632, %v3650
  %3652 = vdwg.mxu0
  %3653 = vmatpush.bf16.msra.mxu0 %v3007
  %3654 = vmatpush.bf16.msra.mxu0 %v3003
  %3655 = vmatpush.bf16.msra.mxu0 %v2999
  %3656 = vmatpush.bf16.msra.mxu0 %v2995
  %3657 = vmatpush.bf16.msra.mxu0 %v2991
  %3658 = vmatpush.bf16.msra.mxu0 %v2987
  %3659 = vmatpush.bf16.msra.mxu0 %v2983
  %3660 = vmatpush.bf16.msra.mxu0 %v2979
  %3661 = vmatmul.bf16.gmra.mxu0 %v1391
  %v3662 = vpop.f32.mrf.mxu0
  %v3663 = vadd.f32 %v3644, %v3662
  %v3664 = vpop.f32.mrf.mxu0
  %v3665 = vadd.f32 %v3646, %v3664
  %3666 = vmatmul.bf16.gmra.mxu0 %v1403
  %v3667 = vpop.f32.mrf.mxu0
  %v3668 = vadd.f32 %v3649, %v3667
  %v3669 = vpop.f32.mrf.mxu0
  %v3670 = vadd.f32 %v3651, %v3669
  %3671 = vdwg.mxu0
  %3672 = vmatpush.bf16.msra.mxu0 %v3039
  %3673 = vmatpush.bf16.msra.mxu0 %v3035
  %3674 = vmatpush.bf16.msra.mxu0 %v3031
  %3675 = vmatpush.bf16.msra.mxu0 %v3027
  %3676 = vmatpush.bf16.msra.mxu0 %v3023
  %3677 = vmatpush.bf16.msra.mxu0 %v3019
  %3678 = vmatpush.bf16.msra.mxu0 %v3015
  %3679 = vmatpush.bf16.msra.mxu0 %v3011
  %3680 = vmatmul.bf16.gmra.mxu0 %v1392
  %v3681 = vpop.f32.mrf.mxu0
  %v3682 = vadd.f32 %v3663, %v3681
  %v3683 = vpop.f32.mrf.mxu0
  %v3684 = vadd.f32 %v3665, %v3683
  %3685 = vmatmul.bf16.gmra.mxu0 %v1404
  %v3686 = vpop.f32.mrf.mxu0
  %v3687 = vadd.f32 %v3668, %v3686
  %v3688 = vpop.f32.mrf.mxu0
  %v3689 = vadd.f32 %v3670, %v3688
  %3690 = vdwg.mxu0
  %3691 = vmatpush.bf16.msra.mxu0 %v3071
  %3692 = vmatpush.bf16.msra.mxu0 %v3067
  %3693 = vmatpush.bf16.msra.mxu0 %v3063
  %3694 = vmatpush.bf16.msra.mxu0 %v3059
  %3695 = vmatpush.bf16.msra.mxu0 %v3055
  %3696 = vmatpush.bf16.msra.mxu0 %v3051
  %3697 = vmatpush.bf16.msra.mxu0 %v3047
  %3698 = vmatpush.bf16.msra.mxu0 %v3043
  %3699 = vmatmul.bf16.gmra.mxu0 %v1393
  %v3700 = vpop.f32.mrf.mxu0
  %v3701 = vadd.f32 %v3682, %v3700
  %v3702 = vpop.f32.mrf.mxu0
  %v3703 = vadd.f32 %v3684, %v3702
  %3704 = vmatmul.bf16.gmra.mxu0 %v1405
  %v3705 = vpop.f32.mrf.mxu0
  %v3706 = vadd.f32 %v3687, %v3705
  %v3707 = vpop.f32.mrf.mxu0
  %v3708 = vadd.f32 %v3689, %v3707
  %3709 = vdwg.mxu0
  %3710 = vmatpush.bf16.msra.mxu0 %v3103
  %3711 = vmatpush.bf16.msra.mxu0 %v3099
  %3712 = vmatpush.bf16.msra.mxu0 %v3095
  %3713 = vmatpush.bf16.msra.mxu0 %v3091
  %3714 = vmatpush.bf16.msra.mxu0 %v3087
  %3715 = vmatpush.bf16.msra.mxu0 %v3083
  %3716 = vmatpush.bf16.msra.mxu0 %v3079
  %3717 = vmatpush.bf16.msra.mxu0 %v3075
  %3718 = vmatmul.bf16.gmra.mxu0 %v1394
  %v3719 = vpop.f32.mrf.mxu0
  %v3720 = vadd.f32 %v3701, %v3719
  %v3721 = vpop.f32.mrf.mxu0
  %v3722 = vadd.f32 %v3703, %v3721
  %3723 = vmatmul.bf16.gmra.mxu0 %v1406
  %v3724 = vpop.f32.mrf.mxu0
  %v3725 = vadd.f32 %v3706, %v3724
  %v3726 = vpop.f32.mrf.mxu0
  %v3727 = vadd.f32 %v3708, %v3726
  %3728 = vdwg.mxu0
  %3729 = vmatpush.bf16.msra.mxu0 %v3135
  %3730 = vmatpush.bf16.msra.mxu0 %v3131
  %3731 = vmatpush.bf16.msra.mxu0 %v3127
  %3732 = vmatpush.bf16.msra.mxu0 %v3123
  %3733 = vmatpush.bf16.msra.mxu0 %v3119
  %3734 = vmatpush.bf16.msra.mxu0 %v3115
  %3735 = vmatpush.bf16.msra.mxu0 %v3111
  %3736 = vmatpush.bf16.msra.mxu0 %v3107
  %3737 = vmatmul.bf16.gmra.mxu0 %v1395
  %v3738 = vpop.f32.mrf.mxu0
  %v3739 = vadd.f32 %v3720, %v3738
  %v3740 = vpop.f32.mrf.mxu0
  %v3741 = vadd.f32 %v3722, %v3740
  %3742 = vmatmul.bf16.gmra.mxu0 %v1407
  %v3743 = vpop.f32.mrf.mxu0
  %v3744 = vadd.f32 %v3725, %v3743
  %v3745 = vpop.f32.mrf.mxu0
  %v3746 = vadd.f32 %v3727, %v3745
  %3747 = vdwg.mxu0
  %3748 = vmatpush.bf16.msra.mxu0 %v3167
  %3749 = vmatpush.bf16.msra.mxu0 %v3163
  %3750 = vmatpush.bf16.msra.mxu0 %v3159
  %3751 = vmatpush.bf16.msra.mxu0 %v3155
  %3752 = vmatpush.bf16.msra.mxu0 %v3151
  %3753 = vmatpush.bf16.msra.mxu0 %v3147
  %3754 = vmatpush.bf16.msra.mxu0 %v3143
  %3755 = vmatpush.bf16.msra.mxu0 %v3139
  %3756 = vmatmul.bf16.gmra.mxu0 %v1396
  %v3757 = vpop.f32.mrf.mxu0
  %v3758 = vadd.f32 %v3739, %v3757
  %v3759 = vpop.f32.mrf.mxu0
  %v3760 = vadd.f32 %v3741, %v3759
  %3761 = vmatmul.bf16.gmra.mxu0 %v1408
  %v3762 = vpop.f32.mrf.mxu0
  %v3763 = vadd.f32 %v3744, %v3762
  %v3764 = vpop.f32.mrf.mxu0
  %v3765 = vadd.f32 %v3746, %v3764
  %3766 = vdwg.mxu0
  %3767 = vmatpush.bf16.msra.mxu0 %v3199
  %3768 = vmatpush.bf16.msra.mxu0 %v3195
  %3769 = vmatpush.bf16.msra.mxu0 %v3191
  %3770 = vmatpush.bf16.msra.mxu0 %v3187
  %3771 = vmatpush.bf16.msra.mxu0 %v3183
  %3772 = vmatpush.bf16.msra.mxu0 %v3179
  %3773 = vmatpush.bf16.msra.mxu0 %v3175
  %3774 = vmatpush.bf16.msra.mxu0 %v3171
  %3775 = vmatmul.bf16.gmra.mxu0 %v1397
  %v3776 = vpop.f32.mrf.mxu0
  %v3777 = vadd.f32 %v3758, %v3776
  %v3778 = vpop.f32.mrf.mxu0
  %v3779 = vadd.f32 %v3760, %v3778
  %3780 = vmatmul.bf16.gmra.mxu0 %v1409
  %v3781 = vpop.f32.mrf.mxu0
  %v3782 = vadd.f32 %v3763, %v3781
  %v3783 = vpop.f32.mrf.mxu0
  %v3784 = vadd.f32 %v3765, %v3783
  %3785 = vdwg.mxu0
  %3786 = vmatpush.bf16.msra.mxu0 0
  %3787 = vmatpush.bf16.msra.mxu0 0
  %3788 = vmatpush.bf16.msra.mxu0 0
  %3789 = vmatpush.bf16.msra.mxu0 0
  %3790 = vmatpush.bf16.msra.mxu0 0
  %3791 = vmatpush.bf16.msra.mxu0 0
  %3792 = vmatpush.bf16.msra.mxu0 %v3207
  %3793 = vmatpush.bf16.msra.mxu0 %v3203
  %3794 = vmatmul.bf16.gmra.mxu0 %v3572
  %v3795 = vpop.f32.mrf.mxu0
  %v3796 = vadd.f32 %v3777, %v3795
  %v3797 = vpop.f32.mrf.mxu0
  %v3798 = vadd.f32 %v3779, %v3797
  %3799 = vmatmul.bf16.gmra.mxu0 %v3575
  %v3800 = vpop.f32.mrf.mxu0
  %v3801 = vadd.f32 %v3782, %v3800
  %v3802 = vpop.f32.mrf.mxu0
  %v3803 = vadd.f32 %v3784, %v3802
  %3804 = vdwg.mxu0
  %3805 = vmatpush.bf16.msra.mxu0 %v2880
  %3806 = vmatpush.bf16.msra.mxu0 %v2876
  %3807 = vmatpush.bf16.msra.mxu0 %v2872
  %3808 = vmatpush.bf16.msra.mxu0 %v2868
  %3809 = vmatpush.bf16.msra.mxu0 %v2864
  %3810 = vmatpush.bf16.msra.mxu0 %v2860
  %3811 = vmatpush.bf16.msra.mxu0 %v2856
  %3812 = vmatpush.bf16.msra.mxu0 %v2852
  %3813 = vmatmul.bf16.gmra.mxu0 %v1387
  %v3814 = vpop.f32.mrf.mxu0
  %v3815 = vadd.f32 0.0, %v3814
  %v3816 = vpop.f32.mrf.mxu0
  %v3817 = vadd.f32 0.0, %v3816
  %3818 = vmatmul.bf16.gmra.mxu0 %v1399
  %v3819 = vpop.f32.mrf.mxu0
  %v3820 = vadd.f32 0.0, %v3819
  %v3821 = vpop.f32.mrf.mxu0
  %v3822 = vadd.f32 0.0, %v3821
  %3823 = vdwg.mxu0
  %3824 = vmatpush.bf16.msra.mxu0 %v2912
  %3825 = vmatpush.bf16.msra.mxu0 %v2908
  %3826 = vmatpush.bf16.msra.mxu0 %v2904
  %3827 = vmatpush.bf16.msra.mxu0 %v2900
  %3828 = vmatpush.bf16.msra.mxu0 %v2896
  %3829 = vmatpush.bf16.msra.mxu0 %v2892
  %3830 = vmatpush.bf16.msra.mxu0 %v2888
  %3831 = vmatpush.bf16.msra.mxu0 %v2884
  %3832 = vmatmul.bf16.gmra.mxu0 %v1388
  %v3833 = vpop.f32.mrf.mxu0
  %v3834 = vadd.f32 %v3815, %v3833
  %v3835 = vpop.f32.mrf.mxu0
  %v3836 = vadd.f32 %v3817, %v3835
  %3837 = vmatmul.bf16.gmra.mxu0 %v1400
  %v3838 = vpop.f32.mrf.mxu0
  %v3839 = vadd.f32 %v3820, %v3838
  %v3840 = vpop.f32.mrf.mxu0
  %v3841 = vadd.f32 %v3822, %v3840
  %3842 = vdwg.mxu0
  %3843 = vmatpush.bf16.msra.mxu0 %v2944
  %3844 = vmatpush.bf16.msra.mxu0 %v2940
  %3845 = vmatpush.bf16.msra.mxu0 %v2936
  %3846 = vmatpush.bf16.msra.mxu0 %v2932
  %3847 = vmatpush.bf16.msra.mxu0 %v2928
  %3848 = vmatpush.bf16.msra.mxu0 %v2924
  %3849 = vmatpush.bf16.msra.mxu0 %v2920
  %3850 = vmatpush.bf16.msra.mxu0 %v2916
  %3851 = vmatmul.bf16.gmra.mxu0 %v1389
  %v3852 = vpop.f32.mrf.mxu0
  %v3853 = vadd.f32 %v3834, %v3852
  %v3854 = vpop.f32.mrf.mxu0
  %v3855 = vadd.f32 %v3836, %v3854
  %3856 = vmatmul.bf16.gmra.mxu0 %v1401
  %v3857 = vpop.f32.mrf.mxu0
  %v3858 = vadd.f32 %v3839, %v3857
  %v3859 = vpop.f32.mrf.mxu0
  %v3860 = vadd.f32 %v3841, %v3859
  %3861 = vdwg.mxu0
  %3862 = vmatpush.bf16.msra.mxu0 %v2976
  %3863 = vmatpush.bf16.msra.mxu0 %v2972
  %3864 = vmatpush.bf16.msra.mxu0 %v2968
  %3865 = vmatpush.bf16.msra.mxu0 %v2964
  %3866 = vmatpush.bf16.msra.mxu0 %v2960
  %3867 = vmatpush.bf16.msra.mxu0 %v2956
  %3868 = vmatpush.bf16.msra.mxu0 %v2952
  %3869 = vmatpush.bf16.msra.mxu0 %v2948
  %3870 = vmatmul.bf16.gmra.mxu0 %v1390
  %v3871 = vpop.f32.mrf.mxu0
  %v3872 = vadd.f32 %v3853, %v3871
  %v3873 = vpop.f32.mrf.mxu0
  %v3874 = vadd.f32 %v3855, %v3873
  %3875 = vmatmul.bf16.gmra.mxu0 %v1402
  %v3876 = vpop.f32.mrf.mxu0
  %v3877 = vadd.f32 %v3858, %v3876
  %v3878 = vpop.f32.mrf.mxu0
  %v3879 = vadd.f32 %v3860, %v3878
  %3880 = vdwg.mxu0
  %3881 = vmatpush.bf16.msra.mxu0 %v3008
  %3882 = vmatpush.bf16.msra.mxu0 %v3004
  %3883 = vmatpush.bf16.msra.mxu0 %v3000
  %3884 = vmatpush.bf16.msra.mxu0 %v2996
  %3885 = vmatpush.bf16.msra.mxu0 %v2992
  %3886 = vmatpush.bf16.msra.mxu0 %v2988
  %3887 = vmatpush.bf16.msra.mxu0 %v2984
  %3888 = vmatpush.bf16.msra.mxu0 %v2980
  %3889 = vmatmul.bf16.gmra.mxu0 %v1391
  %v3890 = vpop.f32.mrf.mxu0
  %v3891 = vadd.f32 %v3872, %v3890
  %v3892 = vpop.f32.mrf.mxu0
  %v3893 = vadd.f32 %v3874, %v3892
  %3894 = vmatmul.bf16.gmra.mxu0 %v1403
  %v3895 = vpop.f32.mrf.mxu0
  %v3896 = vadd.f32 %v3877, %v3895
  %v3897 = vpop.f32.mrf.mxu0
  %v3898 = vadd.f32 %v3879, %v3897
  %3899 = vdwg.mxu0
  %3900 = vmatpush.bf16.msra.mxu0 %v3040
  %3901 = vmatpush.bf16.msra.mxu0 %v3036
  %3902 = vmatpush.bf16.msra.mxu0 %v3032
  %3903 = vmatpush.bf16.msra.mxu0 %v3028
  %3904 = vmatpush.bf16.msra.mxu0 %v3024
  %3905 = vmatpush.bf16.msra.mxu0 %v3020
  %3906 = vmatpush.bf16.msra.mxu0 %v3016
  %3907 = vmatpush.bf16.msra.mxu0 %v3012
  %3908 = vmatmul.bf16.gmra.mxu0 %v1392
  %v3909 = vpop.f32.mrf.mxu0
  %v3910 = vadd.f32 %v3891, %v3909
  %v3911 = vpop.f32.mrf.mxu0
  %v3912 = vadd.f32 %v3893, %v3911
  %3913 = vmatmul.bf16.gmra.mxu0 %v1404
  %v3914 = vpop.f32.mrf.mxu0
  %v3915 = vadd.f32 %v3896, %v3914
  %v3916 = vpop.f32.mrf.mxu0
  %v3917 = vadd.f32 %v3898, %v3916
  %3918 = vdwg.mxu0
  %3919 = vmatpush.bf16.msra.mxu0 %v3072
  %3920 = vmatpush.bf16.msra.mxu0 %v3068
  %3921 = vmatpush.bf16.msra.mxu0 %v3064
  %3922 = vmatpush.bf16.msra.mxu0 %v3060
  %3923 = vmatpush.bf16.msra.mxu0 %v3056
  %3924 = vmatpush.bf16.msra.mxu0 %v3052
  %3925 = vmatpush.bf16.msra.mxu0 %v3048
  %3926 = vmatpush.bf16.msra.mxu0 %v3044
  %3927 = vmatmul.bf16.gmra.mxu0 %v1393
  %v3928 = vpop.f32.mrf.mxu0
  %v3929 = vadd.f32 %v3910, %v3928
  %v3930 = vpop.f32.mrf.mxu0
  %v3931 = vadd.f32 %v3912, %v3930
  %3932 = vmatmul.bf16.gmra.mxu0 %v1405
  %v3933 = vpop.f32.mrf.mxu0
  %v3934 = vadd.f32 %v3915, %v3933
  %v3935 = vpop.f32.mrf.mxu0
  %v3936 = vadd.f32 %v3917, %v3935
  %3937 = vdwg.mxu0
  %3938 = vmatpush.bf16.msra.mxu0 %v3104
  %3939 = vmatpush.bf16.msra.mxu0 %v3100
  %3940 = vmatpush.bf16.msra.mxu0 %v3096
  %3941 = vmatpush.bf16.msra.mxu0 %v3092
  %3942 = vmatpush.bf16.msra.mxu0 %v3088
  %3943 = vmatpush.bf16.msra.mxu0 %v3084
  %3944 = vmatpush.bf16.msra.mxu0 %v3080
  %3945 = vmatpush.bf16.msra.mxu0 %v3076
  %3946 = vmatmul.bf16.gmra.mxu0 %v1394
  %v3947 = vpop.f32.mrf.mxu0
  %v3948 = vadd.f32 %v3929, %v3947
  %v3949 = vpop.f32.mrf.mxu0
  %v3950 = vadd.f32 %v3931, %v3949
  %3951 = vmatmul.bf16.gmra.mxu0 %v1406
  %v3952 = vpop.f32.mrf.mxu0
  %v3953 = vadd.f32 %v3934, %v3952
  %v3954 = vpop.f32.mrf.mxu0
  %v3955 = vadd.f32 %v3936, %v3954
  %3956 = vdwg.mxu0
  %3957 = vmatpush.bf16.msra.mxu0 %v3136
  %3958 = vmatpush.bf16.msra.mxu0 %v3132
  %3959 = vmatpush.bf16.msra.mxu0 %v3128
  %3960 = vmatpush.bf16.msra.mxu0 %v3124
  %3961 = vmatpush.bf16.msra.mxu0 %v3120
  %3962 = vmatpush.bf16.msra.mxu0 %v3116
  %3963 = vmatpush.bf16.msra.mxu0 %v3112
  %3964 = vmatpush.bf16.msra.mxu0 %v3108
  %3965 = vmatmul.bf16.gmra.mxu0 %v1395
  %v3966 = vpop.f32.mrf.mxu0
  %v3967 = vadd.f32 %v3948, %v3966
  %v3968 = vpop.f32.mrf.mxu0
  %v3969 = vadd.f32 %v3950, %v3968
  %3970 = vmatmul.bf16.gmra.mxu0 %v1407
  %v3971 = vpop.f32.mrf.mxu0
  %v3972 = vadd.f32 %v3953, %v3971
  %v3973 = vpop.f32.mrf.mxu0
  %v3974 = vadd.f32 %v3955, %v3973
  %3975 = vdwg.mxu0
  %3976 = vmatpush.bf16.msra.mxu0 %v3168
  %3977 = vmatpush.bf16.msra.mxu0 %v3164
  %3978 = vmatpush.bf16.msra.mxu0 %v3160
  %3979 = vmatpush.bf16.msra.mxu0 %v3156
  %3980 = vmatpush.bf16.msra.mxu0 %v3152
  %3981 = vmatpush.bf16.msra.mxu0 %v3148
  %3982 = vmatpush.bf16.msra.mxu0 %v3144
  %3983 = vmatpush.bf16.msra.mxu0 %v3140
  %3984 = vmatmul.bf16.gmra.mxu0 %v1396
  %v3985 = vpop.f32.mrf.mxu0
  %v3986 = vadd.f32 %v3967, %v3985
  %v3987 = vpop.f32.mrf.mxu0
  %v3988 = vadd.f32 %v3969, %v3987
  %3989 = vmatmul.bf16.gmra.mxu0 %v1408
  %v3990 = vpop.f32.mrf.mxu0
  %v3991 = vadd.f32 %v3972, %v3990
  %v3992 = vpop.f32.mrf.mxu0
  %v3993 = vadd.f32 %v3974, %v3992
  %3994 = vdwg.mxu0
  %3995 = vmatpush.bf16.msra.mxu0 %v3200
  %3996 = vmatpush.bf16.msra.mxu0 %v3196
  %3997 = vmatpush.bf16.msra.mxu0 %v3192
  %3998 = vmatpush.bf16.msra.mxu0 %v3188
  %3999 = vmatpush.bf16.msra.mxu0 %v3184
  %4000 = vmatpush.bf16.msra.mxu0 %v3180
  %4001 = vmatpush.bf16.msra.mxu0 %v3176
  %4002 = vmatpush.bf16.msra.mxu0 %v3172
  %4003 = vmatmul.bf16.gmra.mxu0 %v1397
  %v4004 = vpop.f32.mrf.mxu0
  %v4005 = vadd.f32 %v3986, %v4004
  %v4006 = vpop.f32.mrf.mxu0
  %v4007 = vadd.f32 %v3988, %v4006
  %4008 = vmatmul.bf16.gmra.mxu0 %v1409
  %v4009 = vpop.f32.mrf.mxu0
  %v4010 = vadd.f32 %v3991, %v4009
  %v4011 = vpop.f32.mrf.mxu0
  %v4012 = vadd.f32 %v3993, %v4011
  %4013 = vdwg.mxu0
  %4014 = vmatpush.bf16.msra.mxu0 0
  %4015 = vmatpush.bf16.msra.mxu0 0
  %4016 = vmatpush.bf16.msra.mxu0 0
  %4017 = vmatpush.bf16.msra.mxu0 0
  %4018 = vmatpush.bf16.msra.mxu0 0
  %4019 = vmatpush.bf16.msra.mxu0 0
  %4020 = vmatpush.bf16.msra.mxu0 %v3208
  %4021 = vmatpush.bf16.msra.mxu0 %v3204
  %4022 = vmatmul.bf16.gmra.mxu0 %v3572
  %v4023 = vpop.f32.mrf.mxu0
  %v4024 = vadd.f32 %v4005, %v4023
  %v4025 = vpop.f32.mrf.mxu0
  %v4026 = vadd.f32 %v4007, %v4025
  %4027 = vmatmul.bf16.gmra.mxu0 %v3575
  %v4028 = vpop.f32.mrf.mxu0
  %v4029 = vadd.f32 %v4010, %v4028
  %v4030 = vpop.f32.mrf.mxu0
  %v4031 = vadd.f32 %v4012, %v4030
  %4032 = vdwg.mxu0
  %4033 = vmatpush.bf16.msra.mxu0 %v2881
  %4034 = vmatpush.bf16.msra.mxu0 %v2877
  %4035 = vmatpush.bf16.msra.mxu0 %v2873
  %4036 = vmatpush.bf16.msra.mxu0 %v2869
  %4037 = vmatpush.bf16.msra.mxu0 %v2865
  %4038 = vmatpush.bf16.msra.mxu0 %v2861
  %4039 = vmatpush.bf16.msra.mxu0 %v2857
  %4040 = vmatpush.bf16.msra.mxu0 %v2853
  %4041 = vmatmul.bf16.gmra.mxu0 %v1387
  %v4042 = vpop.f32.mrf.mxu0
  %v4043 = vadd.f32 0.0, %v4042
  %v4044 = vpop.f32.mrf.mxu0
  %v4045 = vadd.f32 0.0, %v4044
  %4046 = vmatmul.bf16.gmra.mxu0 %v1399
  %v4047 = vpop.f32.mrf.mxu0
  %v4048 = vadd.f32 0.0, %v4047
  %v4049 = vpop.f32.mrf.mxu0
  %v4050 = vadd.f32 0.0, %v4049
  %4051 = vdwg.mxu0
  %4052 = vmatpush.bf16.msra.mxu0 %v2913
  %4053 = vmatpush.bf16.msra.mxu0 %v2909
  %4054 = vmatpush.bf16.msra.mxu0 %v2905
  %4055 = vmatpush.bf16.msra.mxu0 %v2901
  %4056 = vmatpush.bf16.msra.mxu0 %v2897
  %4057 = vmatpush.bf16.msra.mxu0 %v2893
  %4058 = vmatpush.bf16.msra.mxu0 %v2889
  %4059 = vmatpush.bf16.msra.mxu0 %v2885
  %4060 = vmatmul.bf16.gmra.mxu0 %v1388
  %v4061 = vpop.f32.mrf.mxu0
  %v4062 = vadd.f32 %v4043, %v4061
  %v4063 = vpop.f32.mrf.mxu0
  %v4064 = vadd.f32 %v4045, %v4063
  %4065 = vmatmul.bf16.gmra.mxu0 %v1400
  %v4066 = vpop.f32.mrf.mxu0
  %v4067 = vadd.f32 %v4048, %v4066
  %v4068 = vpop.f32.mrf.mxu0
  %v4069 = vadd.f32 %v4050, %v4068
  %4070 = vdwg.mxu0
  %4071 = vmatpush.bf16.msra.mxu0 %v2945
  %4072 = vmatpush.bf16.msra.mxu0 %v2941
  %4073 = vmatpush.bf16.msra.mxu0 %v2937
  %4074 = vmatpush.bf16.msra.mxu0 %v2933
  %4075 = vmatpush.bf16.msra.mxu0 %v2929
  %4076 = vmatpush.bf16.msra.mxu0 %v2925
  %4077 = vmatpush.bf16.msra.mxu0 %v2921
  %4078 = vmatpush.bf16.msra.mxu0 %v2917
  %4079 = vmatmul.bf16.gmra.mxu0 %v1389
  %v4080 = vpop.f32.mrf.mxu0
  %v4081 = vadd.f32 %v4062, %v4080
  %v4082 = vpop.f32.mrf.mxu0
  %v4083 = vadd.f32 %v4064, %v4082
  %4084 = vmatmul.bf16.gmra.mxu0 %v1401
  %v4085 = vpop.f32.mrf.mxu0
  %v4086 = vadd.f32 %v4067, %v4085
  %v4087 = vpop.f32.mrf.mxu0
  %v4088 = vadd.f32 %v4069, %v4087
  %4089 = vdwg.mxu0
  %4090 = vmatpush.bf16.msra.mxu0 %v2977
  %4091 = vmatpush.bf16.msra.mxu0 %v2973
  %4092 = vmatpush.bf16.msra.mxu0 %v2969
  %4093 = vmatpush.bf16.msra.mxu0 %v2965
  %4094 = vmatpush.bf16.msra.mxu0 %v2961
  %4095 = vmatpush.bf16.msra.mxu0 %v2957
  %4096 = vmatpush.bf16.msra.mxu0 %v2953
  %4097 = vmatpush.bf16.msra.mxu0 %v2949
  %4098 = vmatmul.bf16.gmra.mxu0 %v1390
  %v4099 = vpop.f32.mrf.mxu0
  %v4100 = vadd.f32 %v4081, %v4099
  %v4101 = vpop.f32.mrf.mxu0
  %v4102 = vadd.f32 %v4083, %v4101
  %4103 = vmatmul.bf16.gmra.mxu0 %v1402
  %v4104 = vpop.f32.mrf.mxu0
  %v4105 = vadd.f32 %v4086, %v4104
  %v4106 = vpop.f32.mrf.mxu0
  %v4107 = vadd.f32 %v4088, %v4106
  %4108 = vdwg.mxu0
  %4109 = vmatpush.bf16.msra.mxu0 %v3009
  %4110 = vmatpush.bf16.msra.mxu0 %v3005
  %4111 = vmatpush.bf16.msra.mxu0 %v3001
  %4112 = vmatpush.bf16.msra.mxu0 %v2997
  %4113 = vmatpush.bf16.msra.mxu0 %v2993
  %4114 = vmatpush.bf16.msra.mxu0 %v2989
  %4115 = vmatpush.bf16.msra.mxu0 %v2985
  %4116 = vmatpush.bf16.msra.mxu0 %v2981
  %4117 = vmatmul.bf16.gmra.mxu0 %v1391
  %v4118 = vpop.f32.mrf.mxu0
  %v4119 = vadd.f32 %v4100, %v4118
  %v4120 = vpop.f32.mrf.mxu0
  %v4121 = vadd.f32 %v4102, %v4120
  %4122 = vmatmul.bf16.gmra.mxu0 %v1403
  %v4123 = vpop.f32.mrf.mxu0
  %v4124 = vadd.f32 %v4105, %v4123
  %v4125 = vpop.f32.mrf.mxu0
  %v4126 = vadd.f32 %v4107, %v4125
  %4127 = vdwg.mxu0
  %4128 = vmatpush.bf16.msra.mxu0 %v3041
  %4129 = vmatpush.bf16.msra.mxu0 %v3037
  %4130 = vmatpush.bf16.msra.mxu0 %v3033
  %4131 = vmatpush.bf16.msra.mxu0 %v3029
  %4132 = vmatpush.bf16.msra.mxu0 %v3025
  %4133 = vmatpush.bf16.msra.mxu0 %v3021
  %4134 = vmatpush.bf16.msra.mxu0 %v3017
  %4135 = vmatpush.bf16.msra.mxu0 %v3013
  %4136 = vmatmul.bf16.gmra.mxu0 %v1392
  %v4137 = vpop.f32.mrf.mxu0
  %v4138 = vadd.f32 %v4119, %v4137
  %v4139 = vpop.f32.mrf.mxu0
  %v4140 = vadd.f32 %v4121, %v4139
  %4141 = vmatmul.bf16.gmra.mxu0 %v1404
  %v4142 = vpop.f32.mrf.mxu0
  %v4143 = vadd.f32 %v4124, %v4142
  %v4144 = vpop.f32.mrf.mxu0
  %v4145 = vadd.f32 %v4126, %v4144
  %4146 = vdwg.mxu0
  %4147 = vmatpush.bf16.msra.mxu0 %v3073
  %4148 = vmatpush.bf16.msra.mxu0 %v3069
  %4149 = vmatpush.bf16.msra.mxu0 %v3065
  %4150 = vmatpush.bf16.msra.mxu0 %v3061
  %4151 = vmatpush.bf16.msra.mxu0 %v3057
  %4152 = vmatpush.bf16.msra.mxu0 %v3053
  %4153 = vmatpush.bf16.msra.mxu0 %v3049
  %4154 = vmatpush.bf16.msra.mxu0 %v3045
  %4155 = vmatmul.bf16.gmra.mxu0 %v1393
  %v4156 = vpop.f32.mrf.mxu0
  %v4157 = vadd.f32 %v4138, %v4156
  %v4158 = vpop.f32.mrf.mxu0
  %v4159 = vadd.f32 %v4140, %v4158
  %4160 = vmatmul.bf16.gmra.mxu0 %v1405
  %v4161 = vpop.f32.mrf.mxu0
  %v4162 = vadd.f32 %v4143, %v4161
  %v4163 = vpop.f32.mrf.mxu0
  %v4164 = vadd.f32 %v4145, %v4163
  %4165 = vdwg.mxu0
  %4166 = vmatpush.bf16.msra.mxu0 %v3105
  %4167 = vmatpush.bf16.msra.mxu0 %v3101
  %4168 = vmatpush.bf16.msra.mxu0 %v3097
  %4169 = vmatpush.bf16.msra.mxu0 %v3093
  %4170 = vmatpush.bf16.msra.mxu0 %v3089
  %4171 = vmatpush.bf16.msra.mxu0 %v3085
  %4172 = vmatpush.bf16.msra.mxu0 %v3081
  %4173 = vmatpush.bf16.msra.mxu0 %v3077
  %4174 = vmatmul.bf16.gmra.mxu0 %v1394
  %v4175 = vpop.f32.mrf.mxu0
  %v4176 = vadd.f32 %v4157, %v4175
  %v4177 = vpop.f32.mrf.mxu0
  %v4178 = vadd.f32 %v4159, %v4177
  %4179 = vmatmul.bf16.gmra.mxu0 %v1406
  %v4180 = vpop.f32.mrf.mxu0
  %v4181 = vadd.f32 %v4162, %v4180
  %v4182 = vpop.f32.mrf.mxu0
  %v4183 = vadd.f32 %v4164, %v4182
  %4184 = vdwg.mxu0
  %4185 = vmatpush.bf16.msra.mxu0 %v3137
  %4186 = vmatpush.bf16.msra.mxu0 %v3133
  %4187 = vmatpush.bf16.msra.mxu0 %v3129
  %4188 = vmatpush.bf16.msra.mxu0 %v3125
  %4189 = vmatpush.bf16.msra.mxu0 %v3121
  %4190 = vmatpush.bf16.msra.mxu0 %v3117
  %4191 = vmatpush.bf16.msra.mxu0 %v3113
  %4192 = vmatpush.bf16.msra.mxu0 %v3109
  %4193 = vmatmul.bf16.gmra.mxu0 %v1395
  %v4194 = vpop.f32.mrf.mxu0
  %v4195 = vadd.f32 %v4176, %v4194
  %v4196 = vpop.f32.mrf.mxu0
  %v4197 = vadd.f32 %v4178, %v4196
  %4198 = vmatmul.bf16.gmra.mxu0 %v1407
  %v4199 = vpop.f32.mrf.mxu0
  %v4200 = vadd.f32 %v4181, %v4199
  %v4201 = vpop.f32.mrf.mxu0
  %v4202 = vadd.f32 %v4183, %v4201
  %4203 = vdwg.mxu0
  %4204 = vmatpush.bf16.msra.mxu0 %v3169
  %4205 = vmatpush.bf16.msra.mxu0 %v3165
  %4206 = vmatpush.bf16.msra.mxu0 %v3161
  %4207 = vmatpush.bf16.msra.mxu0 %v3157
  %4208 = vmatpush.bf16.msra.mxu0 %v3153
  %4209 = vmatpush.bf16.msra.mxu0 %v3149
  %4210 = vmatpush.bf16.msra.mxu0 %v3145
  %4211 = vmatpush.bf16.msra.mxu0 %v3141
  %4212 = vmatmul.bf16.gmra.mxu0 %v1396
  %v4213 = vpop.f32.mrf.mxu0
  %v4214 = vadd.f32 %v4195, %v4213
  %v4215 = vpop.f32.mrf.mxu0
  %v4216 = vadd.f32 %v4197, %v4215
  %4217 = vmatmul.bf16.gmra.mxu0 %v1408
  %v4218 = vpop.f32.mrf.mxu0
  %v4219 = vadd.f32 %v4200, %v4218
  %v4220 = vpop.f32.mrf.mxu0
  %v4221 = vadd.f32 %v4202, %v4220
  %4222 = vdwg.mxu0
  %4223 = vmatpush.bf16.msra.mxu0 %v3201
  %4224 = vmatpush.bf16.msra.mxu0 %v3197
  %4225 = vmatpush.bf16.msra.mxu0 %v3193
  %4226 = vmatpush.bf16.msra.mxu0 %v3189
  %4227 = vmatpush.bf16.msra.mxu0 %v3185
  %4228 = vmatpush.bf16.msra.mxu0 %v3181
  %4229 = vmatpush.bf16.msra.mxu0 %v3177
  %4230 = vmatpush.bf16.msra.mxu0 %v3173
  %4231 = vmatmul.bf16.gmra.mxu0 %v1397
  %v4232 = vpop.f32.mrf.mxu0
  %v4233 = vadd.f32 %v4214, %v4232
  %v4234 = vpop.f32.mrf.mxu0
  %v4235 = vadd.f32 %v4216, %v4234
  %4236 = vmatmul.bf16.gmra.mxu0 %v1409
  %v4237 = vpop.f32.mrf.mxu0
  %v4238 = vadd.f32 %v4219, %v4237
  %v4239 = vpop.f32.mrf.mxu0
  %v4240 = vadd.f32 %v4221, %v4239
  %4241 = vdwg.mxu0
  %4242 = vmatpush.bf16.msra.mxu0 0
  %4243 = vmatpush.bf16.msra.mxu0 0
  %4244 = vmatpush.bf16.msra.mxu0 0
  %4245 = vmatpush.bf16.msra.mxu0 0
  %4246 = vmatpush.bf16.msra.mxu0 0
  %4247 = vmatpush.bf16.msra.mxu0 0
  %4248 = vmatpush.bf16.msra.mxu0 %v3209
  %4249 = vmatpush.bf16.msra.mxu0 %v3205
  %4250 = vmatmul.bf16.gmra.mxu0 %v3572
  %v4251 = vpop.f32.mrf.mxu0
  %v4252 = vadd.f32 %v4233, %v4251
  %v4253 = vpop.f32.mrf.mxu0
  %v4254 = vadd.f32 %v4235, %v4253
  %4255 = vmatmul.bf16.gmra.mxu0 %v3575
  %v4256 = vpop.f32.mrf.mxu0
  %v4257 = vadd.f32 %v4238, %v4256
  %v4258 = vpop.f32.mrf.mxu0
  %v4259 = vadd.f32 %v4240, %v4258
  %4260 = vdwg.mxu0
  %4261 = vmatpush.bf16.msra.mxu0 %v2882
  %4262 = vmatpush.bf16.msra.mxu0 %v2878
  %4263 = vmatpush.bf16.msra.mxu0 %v2874
  %4264 = vmatpush.bf16.msra.mxu0 %v2870
  %4265 = vmatpush.bf16.msra.mxu0 %v2866
  %4266 = vmatpush.bf16.msra.mxu0 %v2862
  %4267 = vmatpush.bf16.msra.mxu0 %v2858
  %4268 = vmatpush.bf16.msra.mxu0 %v2854
  %4269 = vmatmul.bf16.gmra.mxu0 %v1387
  %v4270 = vpop.f32.mrf.mxu0
  %v4271 = vadd.f32 0.0, %v4270
  %v4272 = vpop.f32.mrf.mxu0
  %v4273 = vadd.f32 0.0, %v4272
  %4274 = vmatmul.bf16.gmra.mxu0 %v1399
  %v4275 = vpop.f32.mrf.mxu0
  %v4276 = vadd.f32 0.0, %v4275
  %v4277 = vpop.f32.mrf.mxu0
  %v4278 = vadd.f32 0.0, %v4277
  %4279 = vdwg.mxu0
  %4280 = vmatpush.bf16.msra.mxu0 %v2914
  %4281 = vmatpush.bf16.msra.mxu0 %v2910
  %4282 = vmatpush.bf16.msra.mxu0 %v2906
  %4283 = vmatpush.bf16.msra.mxu0 %v2902
  %4284 = vmatpush.bf16.msra.mxu0 %v2898
  %4285 = vmatpush.bf16.msra.mxu0 %v2894
  %4286 = vmatpush.bf16.msra.mxu0 %v2890
  %4287 = vmatpush.bf16.msra.mxu0 %v2886
  %4288 = vmatmul.bf16.gmra.mxu0 %v1388
  %v4289 = vpop.f32.mrf.mxu0
  %v4290 = vadd.f32 %v4271, %v4289
  %v4291 = vpop.f32.mrf.mxu0
  %v4292 = vadd.f32 %v4273, %v4291
  %4293 = vmatmul.bf16.gmra.mxu0 %v1400
  %v4294 = vpop.f32.mrf.mxu0
  %v4295 = vadd.f32 %v4276, %v4294
  %v4296 = vpop.f32.mrf.mxu0
  %v4297 = vadd.f32 %v4278, %v4296
  %4298 = vdwg.mxu0
  %4299 = vmatpush.bf16.msra.mxu0 %v2946
  %4300 = vmatpush.bf16.msra.mxu0 %v2942
  %4301 = vmatpush.bf16.msra.mxu0 %v2938
  %4302 = vmatpush.bf16.msra.mxu0 %v2934
  %4303 = vmatpush.bf16.msra.mxu0 %v2930
  %4304 = vmatpush.bf16.msra.mxu0 %v2926
  %4305 = vmatpush.bf16.msra.mxu0 %v2922
  %4306 = vmatpush.bf16.msra.mxu0 %v2918
  %4307 = vmatmul.bf16.gmra.mxu0 %v1389
  %v4308 = vpop.f32.mrf.mxu0
  %v4309 = vadd.f32 %v4290, %v4308
  %v4310 = vpop.f32.mrf.mxu0
  %v4311 = vadd.f32 %v4292, %v4310
  %4312 = vmatmul.bf16.gmra.mxu0 %v1401
  %v4313 = vpop.f32.mrf.mxu0
  %v4314 = vadd.f32 %v4295, %v4313
  %v4315 = vpop.f32.mrf.mxu0
  %v4316 = vadd.f32 %v4297, %v4315
  %4317 = vdwg.mxu0
  %4318 = vmatpush.bf16.msra.mxu0 %v2978
  %4319 = vmatpush.bf16.msra.mxu0 %v2974
  %4320 = vmatpush.bf16.msra.mxu0 %v2970
  %4321 = vmatpush.bf16.msra.mxu0 %v2966
  %4322 = vmatpush.bf16.msra.mxu0 %v2962
  %4323 = vmatpush.bf16.msra.mxu0 %v2958
  %4324 = vmatpush.bf16.msra.mxu0 %v2954
  %4325 = vmatpush.bf16.msra.mxu0 %v2950
  %4326 = vmatmul.bf16.gmra.mxu0 %v1390
  %v4327 = vpop.f32.mrf.mxu0
  %v4328 = vadd.f32 %v4309, %v4327
  %v4329 = vpop.f32.mrf.mxu0
  %v4330 = vadd.f32 %v4311, %v4329
  %4331 = vmatmul.bf16.gmra.mxu0 %v1402
  %v4332 = vpop.f32.mrf.mxu0
  %v4333 = vadd.f32 %v4314, %v4332
  %v4334 = vpop.f32.mrf.mxu0
  %v4335 = vadd.f32 %v4316, %v4334
  %4336 = vdwg.mxu0
  %4337 = vmatpush.bf16.msra.mxu0 %v3010
  %4338 = vmatpush.bf16.msra.mxu0 %v3006
  %4339 = vmatpush.bf16.msra.mxu0 %v3002
  %4340 = vmatpush.bf16.msra.mxu0 %v2998
  %4341 = vmatpush.bf16.msra.mxu0 %v2994
  %4342 = vmatpush.bf16.msra.mxu0 %v2990
  %4343 = vmatpush.bf16.msra.mxu0 %v2986
  %4344 = vmatpush.bf16.msra.mxu0 %v2982
  %4345 = vmatmul.bf16.gmra.mxu0 %v1391
  %v4346 = vpop.f32.mrf.mxu0
  %v4347 = vadd.f32 %v4328, %v4346
  %v4348 = vpop.f32.mrf.mxu0
  %v4349 = vadd.f32 %v4330, %v4348
  %4350 = vmatmul.bf16.gmra.mxu0 %v1403
  %v4351 = vpop.f32.mrf.mxu0
  %v4352 = vadd.f32 %v4333, %v4351
  %v4353 = vpop.f32.mrf.mxu0
  %v4354 = vadd.f32 %v4335, %v4353
  %4355 = vdwg.mxu0
  %4356 = vmatpush.bf16.msra.mxu0 %v3042
  %4357 = vmatpush.bf16.msra.mxu0 %v3038
  %4358 = vmatpush.bf16.msra.mxu0 %v3034
  %4359 = vmatpush.bf16.msra.mxu0 %v3030
  %4360 = vmatpush.bf16.msra.mxu0 %v3026
  %4361 = vmatpush.bf16.msra.mxu0 %v3022
  %4362 = vmatpush.bf16.msra.mxu0 %v3018
  %4363 = vmatpush.bf16.msra.mxu0 %v3014
  %4364 = vmatmul.bf16.gmra.mxu0 %v1392
  %v4365 = vpop.f32.mrf.mxu0
  %v4366 = vadd.f32 %v4347, %v4365
  %v4367 = vpop.f32.mrf.mxu0
  %v4368 = vadd.f32 %v4349, %v4367
  %4369 = vmatmul.bf16.gmra.mxu0 %v1404
  %v4370 = vpop.f32.mrf.mxu0
  %v4371 = vadd.f32 %v4352, %v4370
  %v4372 = vpop.f32.mrf.mxu0
  %v4373 = vadd.f32 %v4354, %v4372
  %4374 = vdwg.mxu0
  %4375 = vmatpush.bf16.msra.mxu0 %v3074
  %4376 = vmatpush.bf16.msra.mxu0 %v3070
  %4377 = vmatpush.bf16.msra.mxu0 %v3066
  %4378 = vmatpush.bf16.msra.mxu0 %v3062
  %4379 = vmatpush.bf16.msra.mxu0 %v3058
  %4380 = vmatpush.bf16.msra.mxu0 %v3054
  %4381 = vmatpush.bf16.msra.mxu0 %v3050
  %4382 = vmatpush.bf16.msra.mxu0 %v3046
  %4383 = vmatmul.bf16.gmra.mxu0 %v1393
  %v4384 = vpop.f32.mrf.mxu0
  %v4385 = vadd.f32 %v4366, %v4384
  %v4386 = vpop.f32.mrf.mxu0
  %v4387 = vadd.f32 %v4368, %v4386
  %4388 = vmatmul.bf16.gmra.mxu0 %v1405
  %v4389 = vpop.f32.mrf.mxu0
  %v4390 = vadd.f32 %v4371, %v4389
  %v4391 = vpop.f32.mrf.mxu0
  %v4392 = vadd.f32 %v4373, %v4391
  %4393 = vdwg.mxu0
  %4394 = vmatpush.bf16.msra.mxu0 %v3106
  %4395 = vmatpush.bf16.msra.mxu0 %v3102
  %4396 = vmatpush.bf16.msra.mxu0 %v3098
  %4397 = vmatpush.bf16.msra.mxu0 %v3094
  %4398 = vmatpush.bf16.msra.mxu0 %v3090
  %4399 = vmatpush.bf16.msra.mxu0 %v3086
  %4400 = vmatpush.bf16.msra.mxu0 %v3082
  %4401 = vmatpush.bf16.msra.mxu0 %v3078
  %4402 = vmatmul.bf16.gmra.mxu0 %v1394
  %v4403 = vpop.f32.mrf.mxu0
  %v4404 = vadd.f32 %v4385, %v4403
  %v4405 = vpop.f32.mrf.mxu0
  %v4406 = vadd.f32 %v4387, %v4405
  %4407 = vmatmul.bf16.gmra.mxu0 %v1406
  %v4408 = vpop.f32.mrf.mxu0
  %v4409 = vadd.f32 %v4390, %v4408
  %v4410 = vpop.f32.mrf.mxu0
  %v4411 = vadd.f32 %v4392, %v4410
  %4412 = vdwg.mxu0
  %4413 = vmatpush.bf16.msra.mxu0 %v3138
  %4414 = vmatpush.bf16.msra.mxu0 %v3134
  %4415 = vmatpush.bf16.msra.mxu0 %v3130
  %4416 = vmatpush.bf16.msra.mxu0 %v3126
  %4417 = vmatpush.bf16.msra.mxu0 %v3122
  %4418 = vmatpush.bf16.msra.mxu0 %v3118
  %4419 = vmatpush.bf16.msra.mxu0 %v3114
  %4420 = vmatpush.bf16.msra.mxu0 %v3110
  %4421 = vmatmul.bf16.gmra.mxu0 %v1395
  %v4422 = vpop.f32.mrf.mxu0
  %v4423 = vadd.f32 %v4404, %v4422
  %v4424 = vpop.f32.mrf.mxu0
  %v4425 = vadd.f32 %v4406, %v4424
  %4426 = vmatmul.bf16.gmra.mxu0 %v1407
  %v4427 = vpop.f32.mrf.mxu0
  %v4428 = vadd.f32 %v4409, %v4427
  %v4429 = vpop.f32.mrf.mxu0
  %v4430 = vadd.f32 %v4411, %v4429
  %4431 = vdwg.mxu0
  %4432 = vmatpush.bf16.msra.mxu0 %v3170
  %4433 = vmatpush.bf16.msra.mxu0 %v3166
  %4434 = vmatpush.bf16.msra.mxu0 %v3162
  %4435 = vmatpush.bf16.msra.mxu0 %v3158
  %4436 = vmatpush.bf16.msra.mxu0 %v3154
  %4437 = vmatpush.bf16.msra.mxu0 %v3150
  %4438 = vmatpush.bf16.msra.mxu0 %v3146
  %4439 = vmatpush.bf16.msra.mxu0 %v3142
  %4440 = vmatmul.bf16.gmra.mxu0 %v1396
  %v4441 = vpop.f32.mrf.mxu0
  %v4442 = vadd.f32 %v4423, %v4441
  %v4443 = vpop.f32.mrf.mxu0
  %v4444 = vadd.f32 %v4425, %v4443
  %4445 = vmatmul.bf16.gmra.mxu0 %v1408
  %v4446 = vpop.f32.mrf.mxu0
  %v4447 = vadd.f32 %v4428, %v4446
  %v4448 = vpop.f32.mrf.mxu0
  %v4449 = vadd.f32 %v4430, %v4448
  %4450 = vdwg.mxu0
  %4451 = vmatpush.bf16.msra.mxu0 %v3202
  %4452 = vmatpush.bf16.msra.mxu0 %v3198
  %4453 = vmatpush.bf16.msra.mxu0 %v3194
  %4454 = vmatpush.bf16.msra.mxu0 %v3190
  %4455 = vmatpush.bf16.msra.mxu0 %v3186
  %4456 = vmatpush.bf16.msra.mxu0 %v3182
  %4457 = vmatpush.bf16.msra.mxu0 %v3178
  %4458 = vmatpush.bf16.msra.mxu0 %v3174
  %4459 = vmatmul.bf16.gmra.mxu0 %v1397
  %v4460 = vpop.f32.mrf.mxu0
  %v4461 = vadd.f32 %v4442, %v4460
  %v4462 = vpop.f32.mrf.mxu0
  %v4463 = vadd.f32 %v4444, %v4462
  %4464 = vmatmul.bf16.gmra.mxu0 %v1409
  %v4465 = vpop.f32.mrf.mxu0
  %v4466 = vadd.f32 %v4447, %v4465
  %v4467 = vpop.f32.mrf.mxu0
  %v4468 = vadd.f32 %v4449, %v4467
  %4469 = vdwg.mxu0
  %4470 = vmatpush.bf16.msra.mxu0 0
  %4471 = vmatpush.bf16.msra.mxu0 0
  %4472 = vmatpush.bf16.msra.mxu0 0
  %4473 = vmatpush.bf16.msra.mxu0 0
  %4474 = vmatpush.bf16.msra.mxu0 0
  %4475 = vmatpush.bf16.msra.mxu0 0
  %4476 = vmatpush.bf16.msra.mxu0 %v3210
  %4477 = vmatpush.bf16.msra.mxu0 %v3206
  %4478 = vmatmul.bf16.gmra.mxu0 %v3572
  %v4479 = vpop.f32.mrf.mxu0
  %v4480 = vadd.f32 %v4461, %v4479
  %v4481 = vpop.f32.mrf.mxu0
  %v4482 = vadd.f32 %v4463, %v4481
  %4483 = vmatmul.bf16.gmra.mxu0 %v3575
  %v4484 = vpop.f32.mrf.mxu0
  %v4485 = vadd.f32 %v4466, %v4484
  %v4486 = vpop.f32.mrf.mxu0
  %v4487 = vadd.f32 %v4468, %v4486
  %4488 = vdwg.mxu0
  %v4489 = vld [vmem:[%s4] sm:$0x3]
  %4493 = vrot.lane.b32.xlu0 %v4024, 32
  %v4494 = vpop.permute.xlu0 %4493
  %4495 = vrot.lane.b32.xlu0 %v4252, 32
  %v4496 = vpop.permute.xlu0 %4495
  %4497 = vrot.lane.b32.xlu0 %v4480, 32
  %v4498 = vpop.permute.xlu0 %4497
  %v4499 = vsel %vm23, %v4494, %v4496
  %v4500 = vsel %vm23, %v4496, %v4498
  %v4503 = vmax.f32 %v3796, %v4499
  %v4504 = vmax.f32 %v4024, %v4500
  %4508 = vrot.lane.b32.xlu0 %v4026, 32
  %v4509 = vpop.permute.xlu0 %4508
  %4510 = vrot.lane.b32.xlu0 %v4254, 32
  %v4511 = vpop.permute.xlu0 %4510
  %4512 = vrot.lane.b32.xlu0 %v4482, 32
  %v4513 = vpop.permute.xlu0 %4512
  %v4514 = vsel %vm23, %v4509, %v4511
  %v4515 = vsel %vm23, %v4511, %v4513
  %v4518 = vmax.f32 %v3798, %v4514
  %v4519 = vmax.f32 %v4026, %v4515
  %v4524 = vrot.slane %v4503, 7
  %v4525 = vrot.slane %v4518, 7
  %v4526 = vsel %vm235, %v4524, %v4525
  %v4527 = vrot.slane %v4504, 7
  %v4528 = vrot.slane %v4519, 7
  %v4529 = vsel %vm235, %v4527, %v4528
  %v4532 = vmax.f32 %v4503, %v4526
  %v4533 = vmax.f32 %v4504, %v4529
  %v4535 = vperm.slane %v4489, 0
  %v4536 = vperm.slane %v4489, 1
  %v4539 = vadd.f32 %v4532, %v4535
  %v4540 = vadd.f32 %v4533, %v4536
  %v4541 = vmax.f32 %v4539, 0.0
  %v4542 = vmax.f32 %v4540, 0.0
  %4543 = vst [vmem:[%s5] sm:$0x7f] %v4541
  %vm4544 = vcmask 784384
  %4545 = vst.msk [vmem:[%s5 + $0x8] sm:$0x7f] %vm4544, %v4542
  %4549 = vrot.lane.b32.xlu0 %v4029, 32
  %v4550 = vpop.permute.xlu0 %4549
  %4551 = vrot.lane.b32.xlu0 %v4257, 32
  %v4552 = vpop.permute.xlu0 %4551
  %4553 = vrot.lane.b32.xlu0 %v4485, 32
  %v4554 = vpop.permute.xlu0 %4553
  %v4555 = vsel %vm23, %v4550, %v4552
  %v4556 = vsel %vm23, %v4552, %v4554
  %v4559 = vmax.f32 %v3801, %v4555
  %v4560 = vmax.f32 %v4029, %v4556
  %4564 = vrot.lane.b32.xlu0 %v4031, 32
  %v4565 = vpop.permute.xlu0 %4564
  %4566 = vrot.lane.b32.xlu0 %v4259, 32
  %v4567 = vpop.permute.xlu0 %4566
  %4568 = vrot.lane.b32.xlu0 %v4487, 32
  %v4569 = vpop.permute.xlu0 %4568
  %v4570 = vsel %vm23, %v4565, %v4567
  %v4571 = vsel %vm23, %v4567, %v4569
  %v4574 = vmax.f32 %v3803, %v4570
  %v4575 = vmax.f32 %v4031, %v4571
  %v4580 = vrot.slane %v4559, 7
  %v4581 = vrot.slane %v4560, 7
  %v4582 = vrot.slane %v4574, 7
  %v4583 = vsel %vm235, %v4580, %v4582
  %v4584 = vrot.slane %v4575, 7
  %v4585 = vsel %vm235, %v4581, %v4584
  %v4590 = vmax.f32 %v4518, %v4580
  %v4591 = vmax.f32 %v4519, %v4581
  %v4592 = vmax.f32 %v4559, %v4583
  %v4593 = vmax.f32 %v4560, %v4585
  %v4594 = vadd.f32 %v4590, %v4535
  %v4595 = vadd.f32 %v4591, %v4536
  %v4596 = vadd.f32 %v4592, %v4535
  %v4597 = vadd.f32 %v4593, %v4536
  %v4598 = vmax.f32 %v4594, 0.0
  %v4599 = vmax.f32 %v4595, 0.0
  %v4600 = vmax.f32 %v4596, 0.0
  %v4601 = vmax.f32 %v4597, 0.0
  %v4606 = vrot.slane %v4598, 6
  %v4607 = vrot.slane %v4600, 6
  %v4608 = vsel %vm232, %v4606, %v4607
  %v4609 = vrot.slane %v4599, 6
  %v4610 = vrot.slane %v4601, 6
  %v4611 = vsel %vm232, %v4609, %v4610
  %s4614 = scalar_lea.vmem %s5, 16
  %4615 = vst [vmem:[%s4614] sm:$0x7f] %v4608
  %4616 = vst.msk [vmem:[%s4614 + $0x8] sm:$0x7f] %vm4544, %v4611
  // Predicated region
  $region22: #{cnn_forward.2} parent=0 // pred_check
    _
  $region23: #{cnn_forward.2} parent=0 // pred_check_branch
    %4618 = sbr.rel (0) target = $region25
  $region24: #{cnn_forward.2} parent=0 // pred_region
    _
  $region25: #{cnn_forward.2} parent=0 // pred_fallthru
    _
  // Predicated region
  $region26: #{cnn_forward.2} parent=0 // pred_check
    _
  $region27: #{cnn_forward.2} parent=0 // pred_check_branch
    %4620 = sbr.rel (0) target = $region29
  $region28: #{cnn_forward.2} parent=0 // pred_region
    _
  $region29: #{cnn_forward.2} parent=0 // pred_fallthru
    _

</llo_original>
